<compile_context>
chip_gen: v7x
topology: tpu7x:2x2x1
jax: 0.10.0
libtpu: 0.0.40
codegen_flags: <defaults>
</compile_context>

<pallas_src>
import jax
import jax.numpy as jnp
from jax.experimental import pallas as pl
from jax.experimental.pallas import tpu as pltpu


NEG_SLOPE = 0.2


def _leaky_relu(x):
    return jnp.where(x >= 0, x, NEG_SLOPE * x)


def denoise2_kernel(x_ref, w1_ref, b1_ref, w2_ref, b2_ref, w3_ref, b3_ref,
                    o_ref):
    # x_ref : (TH+4, W, 18) f32  halo'd input tile, kw-interleaved (kw, cin)
    # w1_ref: (54, C)       f32  (kh, kw, cin)-flattened conv1 weights
    # b1_ref: (1, C)        f32
    # w2_ref: (9*C, C)      f32  (kh, kw, cin)-flattened conv2 weights
    # b2_ref: (1, C)        f32
    # w3_ref: (C, 6)        f32
    # b3_ref: (6, 1)        f32
    # o_ref : (6, TH*W)     f32  lane-dense NCHW-flat output tile
    R0, W, c18 = x_ref.shape
    TH = R0 - 4            # output rows of this tile
    R1 = TH + 2            # conv1-output rows (1-row halo each side)
    C = w2_ref.shape[-1]

    t = pl.program_id(1)
    n_tiles = pl.num_programs(1)

    # ---- conv1: one K = 3*18 = 54 matmul ------------------------------------
    # kw shifts were pre-interleaved in the wrapper; the three kh taps are free
    # outer-dim row slices.  Reshape (R1, W, 18)->(R1*W, 18) is free (W % 8 == 0).
    parts = [x_ref[kh:kh + R1].reshape(R1 * W, c18) for kh in range(3)]
    xcat = jnp.concatenate(parts, axis=-1)                      # (R1*W, 54)
    h1 = jnp.dot(xcat, w1_ref[...], preferred_element_type=jnp.float32)
    h1 = _leaky_relu(h1 + b1_ref[...]).reshape(R1, W, C)        # (R1, W, C)

    # Zero the halo rows that fall outside the image (only possible on the
    # first / last row tile).  Touch only the two boundary rows.
    top_ok = (t > 0).astype(h1.dtype)
    bot_ok = (t < n_tiles - 1).astype(h1.dtype)
    h1 = jnp.concatenate(
        [h1[0:1] * top_ok, h1[1:R1 - 1], h1[R1 - 1:R1] * bot_ok], axis=0)

    # ---- conv2: single K = 9*C folded matmul --------------------------------
    # Width-shifted variants (zero-padded) are built once; the nine taps are
    # free row slices of them, concatenated into one (TH*W, 9C) operand.
    zcol = jnp.zeros((R1, 1, C), h1.dtype)
    hl = jnp.concatenate([zcol, h1[:, :W - 1, :]], axis=1)      # reads j-1
    hr = jnp.concatenate([h1[:, 1:, :], zcol], axis=1)          # reads j+1
    variants = (hl, h1, hr)                                     # kw = 0,1,2

    chunks = []
    for kh in range(3):
        for kw in range(3):
            chunks.append(variants[kw][kh:kh + TH].reshape(TH * W, C))
    hcat = jnp.concatenate(chunks, axis=-1)                     # (TH*W, 9C)
    h2 = jnp.dot(hcat, w2_ref[...], preferred_element_type=jnp.float32)
    h2 = _leaky_relu(h2 + b2_ref[...])                          # (TH*W, C)

    # ---- conv3 (1x1), transpose so the output store is lane-dense -----------
    out = jnp.dot(h2, w3_ref[...], preferred_element_type=jnp.float32)
    o_ref[...] = out.T + b3_ref[...]                            # (6, TH*W)


def _pick_tile_rows(H, W, target_positions=4096):
    """Largest TH <= ~target_positions/W with TH | H and (TH*W) % 128 == 0."""
    cap = max(1, min(H, max(1, target_positions // W)))
    for th in range(cap, 0, -1):
        if H % th == 0 and (th * W) % 128 == 0:
            return th
    return H


def denoise2_forward(x_nchw, params, tile_rows=None):
    """x_nchw: (N, 6, H, W) float32.  Returns (N, 6, H, W) float32."""
    w1, b1, w2, b2, w3, b3 = params
    N, c_in, H, W = x_nchw.shape
    C = w1.shape[-1]
    c_out = w3.shape[-1]
    assert c_in == 6 and c_out == 6
    assert W % 8 == 0, "kernel requires W to be a multiple of 8"

    TH = _pick_tile_rows(H, W) if tile_rows is None else tile_rows
    assert H % TH == 0, (H, TH)
    n_tiles = H // TH
    assert (TH * W) % 128 == 0 or n_tiles == 1
    R0 = TH + 4

    # NCHW -> NHWC, pre-interleave the three kw column shifts (6 -> 18 chans),
    # pad H by the 2-row conv halo, and pre-gather overlapping row tiles so the
    # kernel's input block is O(row tile) and BlockSpec-pipelined.
    x = jnp.transpose(x_nchw, (0, 2, 3, 1)).astype(jnp.float32)  # (N,H,W,6)
    zc = jnp.zeros((N, H, 1, c_in), x.dtype)
    x_left = jnp.concatenate([zc, x[:, :, :W - 1, :]], axis=2)   # reads j-1
    x_right = jnp.concatenate([x[:, :, 1:, :], zc], axis=2)      # reads j+1
    x18 = jnp.concatenate([x_left, x, x_right], axis=-1)         # (N,H,W,18)
    xp = jnp.pad(x18, ((0, 0), (2, 2), (0, 0), (0, 0)))          # (N,H+4,W,18)
    x_tiles = jnp.stack(
        [xp[:, t * TH: t * TH + R0] for t in range(n_tiles)], axis=1)
    # x_tiles: (N, n_tiles, TH+4, W, 18)

    # Weights pre-flattened to matmul layout in the wrapper (feedback item).
    w1f = w1.reshape(9 * c_in, C).astype(jnp.float32)       # (kh,kw,cin) major
    w2f = w2.reshape(9 * C, C).astype(jnp.float32)          # folded K = 9C
    w3f = w3.astype(jnp.float32)
    b1r = b1.reshape(1, C).astype(jnp.float32)
    b2r = b2.reshape(1, C).astype(jnp.float32)
    b3r = b3.reshape(c_out, 1).astype(jnp.float32)

    out_flat = pl.pallas_call(
        denoise2_kernel,
        out_shape=jax.ShapeDtypeStruct((N, c_out, H * W), jnp.float32),
        grid_spec=pltpu.PrefetchScalarGridSpec(
            num_scalar_prefetch=0,
            grid=(N, n_tiles),
            in_specs=[
                pl.BlockSpec((None, None, R0, W, 3 * c_in),
                             lambda n, t: (n, t, 0, 0, 0)),
                pl.BlockSpec((9 * c_in, C), lambda n, t: (0, 0)),
                pl.BlockSpec((1, C), lambda n, t: (0, 0)),
                pl.BlockSpec((9 * C, C), lambda n, t: (0, 0)),
                pl.BlockSpec((1, C), lambda n, t: (0, 0)),
                pl.BlockSpec((C, c_out), lambda n, t: (0, 0)),
                pl.BlockSpec((c_out, 1), lambda n, t: (0, 0)),
            ],
            out_specs=pl.BlockSpec((None, c_out, TH * W),
                                   lambda n, t: (n, 0, t)),
        ),
        compiler_params=pltpu.CompilerParams(
            dimension_semantics=("parallel", "parallel"),
            vmem_limit_bytes=64 * 1024 * 1024),
    )(x_tiles, w1f, b1r, w2f, b2r, w3f, b3r)

    # Free reshape (layout-compatible): (N, 6, H*W) -> (N, 6, H, W).
    return out_flat.reshape(N, c_out, H, W)


def make_params(key, embed_channels=32, c_in=6, c_out=6):
    """Deterministic synthetic init mirroring init_weights: N(0, 0.02), bias=0."""
    k1, k2, k3 = jax.random.split(key, 3)
    w1 = 0.02 * jax.random.normal(k1, (3, 3, c_in, embed_channels), jnp.float32)
    b1 = jnp.zeros((1, embed_channels), jnp.float32)
    w2 = 0.02 * jax.random.normal(k2, (3, 3, embed_channels, embed_channels),
                                  jnp.float32)
    b2 = jnp.zeros((1, embed_channels), jnp.float32)
    w3 = 0.02 * jax.random.normal(k3, (embed_channels, c_out), jnp.float32)
    b3 = jnp.zeros((1, c_out), jnp.float32)
    return (w1, b1, w2, b2, w3, b3)


def reference_forward(x_nchw, params):
    """Pure-JAX f32 reference (lax.conv) for correctness checking."""
    w1, b1, w2, b2, w3, b3 = params
    C = w1.shape[-1]
    x = jnp.transpose(x_nchw, (0, 2, 3, 1))

    def conv(y, w, b, pad):
        z = jax.lax.conv_general_dilated(
            y, w, window_strides=(1, 1),
            padding=[(pad, pad), (pad, pad)],
            dimension_numbers=("NHWC", "HWIO", "NHWC"))
        return z + b.reshape(1, 1, 1, -1)

    h = _leaky_relu(conv(x, w1, b1, 1))
    h = _leaky_relu(conv(h, w2, b2, 1))
    o = conv(h, w3.reshape(1, 1, C, -1), b3, 0)
    return jnp.transpose(o, (0, 3, 1, 2))


if __name__ == "__main__":
    key = jax.random.PRNGKey(0)
    k_x, k_p = jax.random.split(key)

    N, C_IN, H, W = 2, 6, 16, 16
    EMBED = 32  # small embed_channels (module default is 96)

    x = jax.random.normal(k_x, (N, C_IN, H, W), jnp.float32)
    params = make_params(k_p, embed_channels=EMBED)

    ref = jax.block_until_ready(reference_forward(x, params))

    # Exercise both the single-tile path and the multi-row-tile (halo) path.
    for tile_rows in (None, 8):
        out = jax.block_until_ready(
            denoise2_forward(x, params, tile_rows=tile_rows))
        assert out.shape == (N, 6, H, W), out.shape
        max_err = float(jnp.max(jnp.abs(out - ref)))
        assert jnp.allclose(out, ref, atol=2e-3, rtol=2e-2), max_err

    print("KERNEL_OK")
</pallas_src>

<mosaic_0001>
module attributes {stable_mosaic.version = 11 : i64} {
  func.func @denoise2_kernel(%arg0: i32, %arg1: i32, %arg2: memref<1x1x20x16x18xf32, #tpu.memory_space<vmem>>, %arg3: memref<54x32xf32, #tpu.memory_space<vmem>>, %arg4: memref<1x32xf32, #tpu.memory_space<vmem>>, %arg5: memref<288x32xf32, #tpu.memory_space<vmem>>, %arg6: memref<1x32xf32, #tpu.memory_space<vmem>>, %arg7: memref<32x6xf32, #tpu.memory_space<vmem>>, %arg8: memref<6x1xf32, #tpu.memory_space<vmem>>, %arg9: memref<1x6x256xf32, #tpu.memory_space<vmem>>) attributes {dimension_semantics = [#tpu.dimension_semantics<parallel>, #tpu.dimension_semantics<parallel>], iteration_bounds = array<i64: 2, 1>, scalar_prefetch = 0 : i64, scratch_operands = 0 : i64, tpu.core_type = #tpu.core_type<tc>, window_params = [{transform_indices = @transform_0, window_bounds = array<i64: 1, 1, 20, 16, 18>}, {pipeline_mode = #tpu.pipeline_mode<synchronous>, transform_indices = @transform_1, window_bounds = array<i64: 54, 32>}, {pipeline_mode = #tpu.pipeline_mode<synchronous>, transform_indices = @transform_2, window_bounds = array<i64: 1, 32>}, {pipeline_mode = #tpu.pipeline_mode<synchronous>, transform_indices = @transform_3, window_bounds = array<i64: 288, 32>}, {pipeline_mode = #tpu.pipeline_mode<synchronous>, transform_indices = @transform_4, window_bounds = array<i64: 1, 32>}, {pipeline_mode = #tpu.pipeline_mode<synchronous>, transform_indices = @transform_5, window_bounds = array<i64: 32, 6>}, {pipeline_mode = #tpu.pipeline_mode<synchronous>, transform_indices = @transform_6, window_bounds = array<i64: 6, 1>}, {transform_indices = @transform_7, window_bounds = array<i64: 1, 6, 256>}]} {
    %c0 = arith.constant 0 : index
    %c0_0 = arith.constant 0 : index
    %c0_1 = arith.constant 0 : index
    %c0_2 = arith.constant 0 : index
    %c0_3 = arith.constant 0 : index
    %0 = vector.load %arg2[%c0, %c0_0, %c0_1, %c0_2, %c0_3] : memref<1x1x20x16x18xf32, #tpu.memory_space<vmem>>, vector<1x1x18x16x18xf32>
    %1 = vector.shape_cast %0 : vector<1x1x18x16x18xf32> to vector<18x16x18xf32>
    %2 = vector.shape_cast %1 : vector<18x16x18xf32> to vector<288x18xf32>
    %c0_4 = arith.constant 0 : index
    %c0_5 = arith.constant 0 : index
    %c1 = arith.constant 1 : index
    %c0_6 = arith.constant 0 : index
    %c0_7 = arith.constant 0 : index
    %3 = vector.load %arg2[%c0_4, %c0_5, %c1, %c0_6, %c0_7] : memref<1x1x20x16x18xf32, #tpu.memory_space<vmem>>, vector<1x1x18x16x18xf32>
    %4 = vector.shape_cast %3 : vector<1x1x18x16x18xf32> to vector<18x16x18xf32>
    %5 = vector.shape_cast %4 : vector<18x16x18xf32> to vector<288x18xf32>
    %c0_8 = arith.constant 0 : index
    %c0_9 = arith.constant 0 : index
    %c2 = arith.constant 2 : index
    %c0_10 = arith.constant 0 : index
    %c0_11 = arith.constant 0 : index
    %6 = vector.load %arg2[%c0_8, %c0_9, %c2, %c0_10, %c0_11] : memref<1x1x20x16x18xf32, #tpu.memory_space<vmem>>, vector<1x1x18x16x18xf32>
    %7 = vector.shape_cast %6 : vector<1x1x18x16x18xf32> to vector<18x16x18xf32>
    %8 = vector.shape_cast %7 : vector<18x16x18xf32> to vector<288x18xf32>
    %9 = tpu.concatenate %2, %5, %8 in 1 : vector<288x18xf32>, vector<288x18xf32>, vector<288x18xf32> -> vector<288x54xf32>
    %c0_12 = arith.constant 0 : index
    %c0_13 = arith.constant 0 : index
    %10 = vector.load %arg3[%c0_12, %c0_13] : memref<54x32xf32, #tpu.memory_space<vmem>>, vector<54x32xf32>
    %cst = arith.constant dense<0.000000e+00> : vector<288x32xf32>
    %11 = tpu.matmul %9, %10, %cst {dimension_numbers = #tpu.dot_dimension_numbers<[1], [0], [0], [1], [0, 0, 1, 1], [], []>} : vector<288x54xf32>, vector<54x32xf32>, vector<288x32xf32> -> vector<288x32xf32>
    %c0_14 = arith.constant 0 : index
    %c0_15 = arith.constant 0 : index
    %12 = vector.load %arg4[%c0_14, %c0_15] : memref<1x32xf32, #tpu.memory_space<vmem>>, vector<1x32xf32>
    %13 = vector.broadcast %12 : vector<1x32xf32> to vector<288x32xf32>
    %14 = arith.addf %11, %13 : vector<288x32xf32>
    %cst_16 = arith.constant 0.000000e+00 : f32
    %15 = vector.broadcast %cst_16 : f32 to vector<288x32xf32>
    %16 = arith.cmpf oge, %14, %15 : vector<288x32xf32>
    %cst_17 = arith.constant 2.000000e-01 : f32
    %17 = vector.broadcast %cst_17 : f32 to vector<288x32xf32>
    %18 = arith.mulf %17, %14 : vector<288x32xf32>
    %19 = arith.select %16, %14, %18 : vector<288x32xi1>, vector<288x32xf32>
    %20 = vector.shape_cast %19 : vector<288x32xf32> to vector<18x16x32xf32>
    %c0_i32 = arith.constant 0 : i32
    %21 = arith.cmpi sgt, %arg1, %c0_i32 : i32
    %22 = arith.extui %21 : i1 to i32
    %23 = arith.sitofp %22 : i32 to f32
    %c0_i32_18 = arith.constant 0 : i32
    %24 = arith.cmpi slt, %arg1, %c0_i32_18 : i32
    %25 = arith.extui %24 : i1 to i32
    %26 = arith.sitofp %25 : i32 to f32
    %27 = vector.extract_strided_slice %20 {offsets = [0, 0, 0], sizes = [1, 16, 32], strides = [1, 1, 1]} : vector<18x16x32xf32> to vector<1x16x32xf32>
    %28 = vector.broadcast %23 : f32 to vector<1x16x32xf32>
    %29 = arith.mulf %27, %28 : vector<1x16x32xf32>
    %30 = vector.extract_strided_slice %20 {offsets = [1, 0, 0], sizes = [16, 16, 32], strides = [1, 1, 1]} : vector<18x16x32xf32> to vector<16x16x32xf32>
    %31 = vector.extract_strided_slice %20 {offsets = [17, 0, 0], sizes = [1, 16, 32], strides = [1, 1, 1]} : vector<18x16x32xf32> to vector<1x16x32xf32>
    %32 = vector.broadcast %26 : f32 to vector<1x16x32xf32>
    %33 = arith.mulf %31, %32 : vector<1x16x32xf32>
    %34 = tpu.concatenate %29, %30, %33 in 0 : vector<1x16x32xf32>, vector<16x16x32xf32>, vector<1x16x32xf32> -> vector<18x16x32xf32>
    %cst_19 = arith.constant 0.000000e+00 : f32
    %35 = vector.broadcast %cst_19 : f32 to vector<18x1x32xf32>
    %36 = vector.extract_strided_slice %34 {offsets = [0, 0, 0], sizes = [18, 15, 32], strides = [1, 1, 1]} : vector<18x16x32xf32> to vector<18x15x32xf32>
    %37 = tpu.concatenate %35, %36 in 1 : vector<18x1x32xf32>, vector<18x15x32xf32> -> vector<18x16x32xf32>
    %38 = vector.extract_strided_slice %34 {offsets = [0, 1, 0], sizes = [18, 15, 32], strides = [1, 1, 1]} : vector<18x16x32xf32> to vector<18x15x32xf32>
    %39 = tpu.concatenate %38, %35 in 1 : vector<18x15x32xf32>, vector<18x1x32xf32> -> vector<18x16x32xf32>
    %40 = vector.extract_strided_slice %37 {offsets = [0, 0, 0], sizes = [16, 16, 32], strides = [1, 1, 1]} : vector<18x16x32xf32> to vector<16x16x32xf32>
    %41 = vector.shape_cast %40 : vector<16x16x32xf32> to vector<256x32xf32>
    %42 = vector.extract_strided_slice %34 {offsets = [0, 0, 0], sizes = [16, 16, 32], strides = [1, 1, 1]} : vector<18x16x32xf32> to vector<16x16x32xf32>
    %43 = vector.shape_cast %42 : vector<16x16x32xf32> to vector<256x32xf32>
    %44 = vector.extract_strided_slice %39 {offsets = [0, 0, 0], sizes = [16, 16, 32], strides = [1, 1, 1]} : vector<18x16x32xf32> to vector<16x16x32xf32>
    %45 = vector.shape_cast %44 : vector<16x16x32xf32> to vector<256x32xf32>
    %46 = vector.extract_strided_slice %37 {offsets = [1, 0, 0], sizes = [16, 16, 32], strides = [1, 1, 1]} : vector<18x16x32xf32> to vector<16x16x32xf32>
    %47 = vector.shape_cast %46 : vector<16x16x32xf32> to vector<256x32xf32>
    %48 = vector.extract_strided_slice %34 {offsets = [1, 0, 0], sizes = [16, 16, 32], strides = [1, 1, 1]} : vector<18x16x32xf32> to vector<16x16x32xf32>
    %49 = vector.shape_cast %48 : vector<16x16x32xf32> to vector<256x32xf32>
    %50 = vector.extract_strided_slice %39 {offsets = [1, 0, 0], sizes = [16, 16, 32], strides = [1, 1, 1]} : vector<18x16x32xf32> to vector<16x16x32xf32>
    %51 = vector.shape_cast %50 : vector<16x16x32xf32> to vector<256x32xf32>
    %52 = vector.extract_strided_slice %37 {offsets = [2, 0, 0], sizes = [16, 16, 32], strides = [1, 1, 1]} : vector<18x16x32xf32> to vector<16x16x32xf32>
    %53 = vector.shape_cast %52 : vector<16x16x32xf32> to vector<256x32xf32>
    %54 = vector.extract_strided_slice %34 {offsets = [2, 0, 0], sizes = [16, 16, 32], strides = [1, 1, 1]} : vector<18x16x32xf32> to vector<16x16x32xf32>
    %55 = vector.shape_cast %54 : vector<16x16x32xf32> to vector<256x32xf32>
    %56 = vector.extract_strided_slice %39 {offsets = [2, 0, 0], sizes = [16, 16, 32], strides = [1, 1, 1]} : vector<18x16x32xf32> to vector<16x16x32xf32>
    %57 = vector.shape_cast %56 : vector<16x16x32xf32> to vector<256x32xf32>
    %58 = tpu.concatenate %41, %43, %45, %47, %49, %51, %53, %55, %57 in 1 : vector<256x32xf32>, vector<256x32xf32>, vector<256x32xf32>, vector<256x32xf32>, vector<256x32xf32>, vector<256x32xf32>, vector<256x32xf32>, vector<256x32xf32>, vector<256x32xf32> -> vector<256x288xf32>
    %c0_20 = arith.constant 0 : index
    %c0_21 = arith.constant 0 : index
    %59 = vector.load %arg5[%c0_20, %c0_21] : memref<288x32xf32, #tpu.memory_space<vmem>>, vector<288x32xf32>
    %cst_22 = arith.constant dense<0.000000e+00> : vector<256x32xf32>
    %60 = tpu.matmul %58, %59, %cst_22 {dimension_numbers = #tpu.dot_dimension_numbers<[1], [0], [0], [1], [0, 0, 1, 1], [], []>} : vector<256x288xf32>, vector<288x32xf32>, vector<256x32xf32> -> vector<256x32xf32>
    %c0_23 = arith.constant 0 : index
    %c0_24 = arith.constant 0 : index
    %61 = vector.load %arg6[%c0_23, %c0_24] : memref<1x32xf32, #tpu.memory_space<vmem>>, vector<1x32xf32>
    %62 = vector.broadcast %61 : vector<1x32xf32> to vector<256x32xf32>
    %63 = arith.addf %60, %62 : vector<256x32xf32>
    %cst_25 = arith.constant 0.000000e+00 : f32
    %64 = vector.broadcast %cst_25 : f32 to vector<256x32xf32>
    %65 = arith.cmpf oge, %63, %64 : vector<256x32xf32>
    %cst_26 = arith.constant 2.000000e-01 : f32
    %66 = vector.broadcast %cst_26 : f32 to vector<256x32xf32>
    %67 = arith.mulf %66, %63 : vector<256x32xf32>
    %68 = arith.select %65, %63, %67 : vector<256x32xi1>, vector<256x32xf32>
    %c0_27 = arith.constant 0 : index
    %c0_28 = arith.constant 0 : index
    %69 = vector.load %arg7[%c0_27, %c0_28] : memref<32x6xf32, #tpu.memory_space<vmem>>, vector<32x6xf32>
    %cst_29 = arith.constant dense<0.000000e+00> : vector<256x6xf32>
    %70 = tpu.matmul %68, %69, %cst_29 {dimension_numbers = #tpu.dot_dimension_numbers<[1], [0], [0], [1], [0, 0, 1, 1], [], []>} : vector<256x32xf32>, vector<32x6xf32>, vector<256x6xf32> -> vector<256x6xf32>
    %71 = tpu.transpose %70, [1, 0] : vector<256x6xf32> -> vector<6x256xf32>
    %c0_30 = arith.constant 0 : index
    %c0_31 = arith.constant 0 : index
    %72 = vector.load %arg8[%c0_30, %c0_31] : memref<6x1xf32, #tpu.memory_space<vmem>>, vector<6x1xf32>
    %73 = vector.broadcast %72 : vector<6x1xf32> to vector<6x256xf32>
    %74 = arith.addf %71, %73 : vector<6x256xf32>
    %c0_32 = arith.constant 0 : index
    %c0_33 = arith.constant 0 : index
    %c0_34 = arith.constant 0 : index
    %75 = vector.load %arg9[%c0_32, %c0_33, %c0_34] : memref<1x6x256xf32, #tpu.memory_space<vmem>>, vector<1x6x256xf32>
    %76 = vector.shape_cast %75 : vector<1x6x256xf32> to vector<6x256xf32>
    %77 = vector.shape_cast %74 : vector<6x256xf32> to vector<1x6x256xf32>
    tpu.vector_store %arg9[%c0_32, %c0_33, %c0_34], %77 {strides = array<i32>} : memref<1x6x256xf32, #tpu.memory_space<vmem>>, vector<1x6x256xf32>,
    return
  }
  func.func @transform_0(%arg0: i32, %arg1: i32) -> (i32, i32, i32, i32, i32) {
    %c0_i32 = arith.constant 0 : i32
    %c0_i32_0 = arith.constant 0 : i32
    %c0_i32_1 = arith.constant 0 : i32
    %c0_i32_2 = arith.constant 0 : i32
    return %arg0, %arg1, %c0_i32, %c0_i32_0, %c0_i32_1 : i32, i32, i32, i32, i32
  }
  func.func @transform_1(%arg0: i32, %arg1: i32) -> (i32, i32) {
    %c0_i32 = arith.constant 0 : i32
    %c0_i32_0 = arith.constant 0 : i32
    %c0_i32_1 = arith.constant 0 : i32
    return %c0_i32, %c0_i32_0 : i32, i32
  }
  func.func @transform_2(%arg0: i32, %arg1: i32) -> (i32, i32) {
    %c0_i32 = arith.constant 0 : i32
    %c0_i32_0 = arith.constant 0 : i32
    %c0_i32_1 = arith.constant 0 : i32
    return %c0_i32, %c0_i32_0 : i32, i32
  }
  func.func @transform_3(%arg0: i32, %arg1: i32) -> (i32, i32) {
    %c0_i32 = arith.constant 0 : i32
    %c0_i32_0 = arith.constant 0 : i32
    %c0_i32_1 = arith.constant 0 : i32
    return %c0_i32, %c0_i32_0 : i32, i32
  }
  func.func @transform_4(%arg0: i32, %arg1: i32) -> (i32, i32) {
    %c0_i32 = arith.constant 0 : i32
    %c0_i32_0 = arith.constant 0 : i32
    %c0_i32_1 = arith.constant 0 : i32
    return %c0_i32, %c0_i32_0 : i32, i32
  }
  func.func @transform_5(%arg0: i32, %arg1: i32) -> (i32, i32) {
    %c0_i32 = arith.constant 0 : i32
    %c0_i32_0 = arith.constant 0 : i32
    %c0_i32_1 = arith.constant 0 : i32
    return %c0_i32, %c0_i32_0 : i32, i32
  }
  func.func @transform_6(%arg0: i32, %arg1: i32) -> (i32, i32) {
    %c0_i32 = arith.constant 0 : i32
    %c0_i32_0 = arith.constant 0 : i32
    %c0_i32_1 = arith.constant 0 : i32
    return %c0_i32, %c0_i32_0 : i32, i32
  }
  func.func @transform_7(%arg0: i32, %arg1: i32) -> (i32, i32, i32) {
    %c0_i32 = arith.constant 0 : i32
    %c0_i32_0 = arith.constant 0 : i32
    return %arg0, %c0_i32, %arg1 : i32, i32, i32
  }
}

</mosaic_0001>

<llo_original>
// kernel: tpu_custom_call.1
$region0: #{tpu_custom_call.1}
  #allocation0 [shape = 'u32[]', space=smem, size = 0x4, offset = 0x4, fixed_abs, tag = 'smem constant byte address 0x4 - core index']
  #allocation1 [shape = 'u32[144,128]{1,0:T(1,128)}', space=vmem, size = 0x12000, scoped, tag = 'internal scratch']
  %s0 = inlined_call_operand.hbm [shape: f32[2,1,20,16,18], index: 0, kind: input, shape index: {}]
  %s1 = inlined_call_operand.hbm [shape: f32[54,32], index: 1, kind: input, shape index: {}]
  %s2 = inlined_call_operand.hbm [shape: f32[1,32], index: 2, kind: input, shape index: {}]
  %s3 = inlined_call_operand.hbm [shape: f32[288,32], index: 3, kind: input, shape index: {}]
  %s4 = inlined_call_operand.hbm [shape: f32[1,32], index: 4, kind: input, shape index: {}]
  %s5 = inlined_call_operand.hbm [shape: f32[32,6], index: 5, kind: input, shape index: {}]
  %s6 = inlined_call_operand.hbm [shape: f32[6,1], index: 6, kind: input, shape index: {}]
  %s7 = inlined_call_operand.hbm [shape: f32[2,6,256], index: 7, kind: output, shape index: {}]
  %s8 = sld [smem:[#allocation0]]
  $region89: #{tpu_custom_call.1} parent=0
    _
  %s10 = ssub.s32 1, %s8
  %s11 = scalar_select 0, %s10, %s8
  $region1: #{tpu_custom_call.1} parent=0
    #allocation2 [shape = 'u8[327680]{0}', space=vmem, size = 0x50000, scoped, tag = 'input window, operand 0']
    #allocation3 [shape = 's32[2]{0}', space=sflag, size = 0x8, scoped, tag = 'scoped memory for tpu_custom_call.1']
    #allocation4 [shape = 's32[2]{0}', space=sflag, size = 0x8, scoped, tag = 'scoped memory for tpu_custom_call.1']
    #allocation5 [shape = 'u8[28672]{0}', space=vmem, size = 0x7000, scoped, tag = 'input window, operand 1, single buffered']
    #allocation6 [shape = 's32[1]{0}', space=sflag, size = 0x4, scoped, tag = 'scoped memory for tpu_custom_call.1']
    #allocation7 [shape = 'u8[512]{0}', space=vmem, size = 0x400, scoped, tag = 'input window, operand 2, single buffered']
    #allocation8 [shape = 'u8[147456]{0}', space=vmem, size = 0x24000, scoped, tag = 'input window, operand 3, single buffered']
    #allocation9 [shape = 's32[1]{0}', space=sflag, size = 0x4, scoped, tag = 'scoped memory for tpu_custom_call.1']
    #allocation10 [shape = 'u8[512]{0}', space=vmem, size = 0x400, scoped, tag = 'input window, operand 4, single buffered']
    #allocation11 [shape = 'u8[16384]{0}', space=vmem, size = 0x4000, scoped, tag = 'input window, operand 5, single buffered']
    #allocation12 [shape = 's32[1]{0}', space=sflag, size = 0x4, scoped, tag = 'scoped memory for tpu_custom_call.1']
    #allocation13 [shape = 'u8[4096]{0}', space=vmem, size = 0x1000, scoped, tag = 'input window, operand 6, single buffered']
    #allocation14 [shape = 'u8[16384]{0}', space=vmem, size = 0x4000, scoped, tag = 'output window, operand 0']
    %12 = vsyncpa [#allocation3], 0
    %s13 = scalar_lea.sflag [#allocation3], 1
    %14 = vsyncpa %s13, 0
    %15 = vsyncpa [#allocation6], 0
    %16 = vsyncpa [#allocation9], 0
    %17 = vsyncpa [#allocation12], 0
    %18 = vsyncpa [#allocation4], 0
    %s19 = scalar_lea.sflag [#allocation4], 1
    %20 = vsyncpa %s19, 0
    loop: start=0, step=1, limit=4
    $region2: #{tpu_custom_call.1} parent=1 // loop_pre_header
      _
    $region3: #{tpu_custom_call.1} parent=1 // loop_header
      %s22 = sphi 0, %s26
      %p23 = scmp.ge.s32.totalorder %s22, 4
      %s29 = sphi 0, %s41
      %s30 = sphi 0, %s37
      %s31 = sphi 0, %s29
      %s32 = sphi 0, %s30
      %s33 = sphi 0, %s31
      %s34 = sphi 0, %s32
      %s46 = sphi 0, %s48
      %s49 = sphi 0, %s46
      %s50 = sphi 0, %s49
      %s66 = sphi 0, %s50
      %s70 = sphi 0, %s70
      %s72 = sphi 0, %s70
      %s73 = sphi 0, %s72
      %s87 = sphi 0, %s73
      %s91 = sphi 0, %s91
      %s93 = sphi 0, %s91
      %s94 = sphi 0, %s93
      %s108 = sphi 0, %s94
      %s112 = sphi 0, %s112
      %s114 = sphi 0, %s112
      %s115 = sphi 0, %s114
      %s129 = sphi 0, %s115
      %s133 = sphi 0, %s133
      %s135 = sphi 0, %s133
      %s136 = sphi 0, %s135
      %s150 = sphi 0, %s136
      %s154 = sphi 0, %s154
      %s156 = sphi 0, %s154
      %s157 = sphi 0, %s156
      %s171 = sphi 0, %s157
      %s175 = sphi 0, %s175
      %s177 = sphi 0, %s175
      %s178 = sphi 0, %s177
      %s192 = sphi 0, %s178
      %s200 = sphi 0, %s202
      %s203 = sphi 0, %s200
      %s204 = sphi 0, %s203
      %s220 = sphi 0, %s204
    $region4: #{tpu_custom_call.1} parent=1 // loop_header_branch
      %25 = sbr.rel (%p23) target = $region8
    $region5: #{tpu_custom_call.1} parent=1 // loop_body
      %s27 = ssub.s32 %s22, 1
      %s28 = ssub.s32 %s22, 2
      %s35 = sadd.s32 1, %s30
      %p36 = scmp.ge.s32.totalorder %s35, 1
      %s37 = scalar_select %p36, 0, %s35
      %s38 = sadd.s32 1, %s29
      %s39 = scalar_select %p36, %s38, %s29
      %p40 = scmp.ge.s32.totalorder %s39, 2
      %s41 = scalar_select %p40, 0, %s39
      %s42 = ssub.s32 %s29, %s41
      %s43 = ssub.s32 %s30, %s37
      %s44 = sor.u32 %s42, %s43
      %p45 = scmp.eq.s32.totalorder %s44, 0
      %s47 = sadd.s32 %s46, 1
      %s48 = scalar_select %p45, %s46, %s47
      %p51 = pneg %p45
      %p52 = scmp.eq.s32.totalorder %s22, 1
      %p53 = por %p51, %p52
      %p54 = scmp.ne.s32.totalorder %s46, %s49
      %p55 = scmp.eq.s32.totalorder %s22, 0
      %p56 = por %p54, %p55
      %p57 = scmp.ne.s32.totalorder %s46, %s49
      %p58 = scmp.eq.s32.totalorder %s27, 1
      %p59 = por %p57, %p58
      %p60 = scmp.ne.s32.totalorder %s49, %s50
      %p61 = scmp.eq.s32.totalorder %s27, 0
      %p62 = por %p60, %p61
      %p63 = scmp.ne.s32.totalorder %s49, %s50
      %p64 = scmp.eq.s32.totalorder %s28, 1
      %p65 = por %p63, %p64
      %p67 = scmp.ne.s32.totalorder %s50, %s66
      %p68 = scmp.eq.s32.totalorder %s28, 0
      %p69 = por %p67, %p68
      %s71 = sadd.s32 %s70, 1
      %p74 = scmp.eq.s32.totalorder %s22, 1
      %p75 = scmp.ne.s32.totalorder %s70, %s72
      %p76 = scmp.eq.s32.totalorder %s22, 0
      %p77 = por %p75, %p76
      %p78 = scmp.ne.s32.totalorder %s70, %s72
      %p79 = scmp.eq.s32.totalorder %s27, 1
      %p80 = por %p78, %p79
      %p81 = scmp.ne.s32.totalorder %s72, %s73
      %p82 = scmp.eq.s32.totalorder %s27, 0
      %p83 = por %p81, %p82
      %p84 = scmp.ne.s32.totalorder %s72, %s73
      %p85 = scmp.eq.s32.totalorder %s28, 1
      %p86 = por %p84, %p85
      %p88 = scmp.ne.s32.totalorder %s73, %s87
      %p89 = scmp.eq.s32.totalorder %s28, 0
      %p90 = por %p88, %p89
      %s92 = sadd.s32 %s91, 1
      %p95 = scmp.eq.s32.totalorder %s22, 1
      %p96 = scmp.ne.s32.totalorder %s91, %s93
      %p97 = scmp.eq.s32.totalorder %s22, 0
      %p98 = por %p96, %p97
      %p99 = scmp.ne.s32.totalorder %s91, %s93
      %p100 = scmp.eq.s32.totalorder %s27, 1
      %p101 = por %p99, %p100
      %p102 = scmp.ne.s32.totalorder %s93, %s94
      %p103 = scmp.eq.s32.totalorder %s27, 0
      %p104 = por %p102, %p103
      %p105 = scmp.ne.s32.totalorder %s93, %s94
      %p106 = scmp.eq.s32.totalorder %s28, 1
      %p107 = por %p105, %p106
      %p109 = scmp.ne.s32.totalorder %s94, %s108
      %p110 = scmp.eq.s32.totalorder %s28, 0
      %p111 = por %p109, %p110
      %s113 = sadd.s32 %s112, 1
      %p116 = scmp.eq.s32.totalorder %s22, 1
      %p117 = scmp.ne.s32.totalorder %s112, %s114
      %p118 = scmp.eq.s32.totalorder %s22, 0
      %p119 = por %p117, %p118
      %p120 = scmp.ne.s32.totalorder %s112, %s114
      %p121 = scmp.eq.s32.totalorder %s27, 1
      %p122 = por %p120, %p121
      %p123 = scmp.ne.s32.totalorder %s114, %s115
      %p124 = scmp.eq.s32.totalorder %s27, 0
      %p125 = por %p123, %p124
      %p126 = scmp.ne.s32.totalorder %s114, %s115
      %p127 = scmp.eq.s32.totalorder %s28, 1
      %p128 = por %p126, %p127
      %p130 = scmp.ne.s32.totalorder %s115, %s129
      %p131 = scmp.eq.s32.totalorder %s28, 0
      %p132 = por %p130, %p131
      %s134 = sadd.s32 %s133, 1
      %p137 = scmp.eq.s32.totalorder %s22, 1
      %p138 = scmp.ne.s32.totalorder %s133, %s135
      %p139 = scmp.eq.s32.totalorder %s22, 0
      %p140 = por %p138, %p139
      %p141 = scmp.ne.s32.totalorder %s133, %s135
      %p142 = scmp.eq.s32.totalorder %s27, 1
      %p143 = por %p141, %p142
      %p144 = scmp.ne.s32.totalorder %s135, %s136
      %p145 = scmp.eq.s32.totalorder %s27, 0
      %p146 = por %p144, %p145
      %p147 = scmp.ne.s32.totalorder %s135, %s136
      %p148 = scmp.eq.s32.totalorder %s28, 1
      %p149 = por %p147, %p148
      %p151 = scmp.ne.s32.totalorder %s136, %s150
      %p152 = scmp.eq.s32.totalorder %s28, 0
      %p153 = por %p151, %p152
      %s155 = sadd.s32 %s154, 1
      %p158 = scmp.eq.s32.totalorder %s22, 1
      %p159 = scmp.ne.s32.totalorder %s154, %s156
      %p160 = scmp.eq.s32.totalorder %s22, 0
      %p161 = por %p159, %p160
      %p162 = scmp.ne.s32.totalorder %s154, %s156
      %p163 = scmp.eq.s32.totalorder %s27, 1
      %p164 = por %p162, %p163
      %p165 = scmp.ne.s32.totalorder %s156, %s157
      %p166 = scmp.eq.s32.totalorder %s27, 0
      %p167 = por %p165, %p166
      %p168 = scmp.ne.s32.totalorder %s156, %s157
      %p169 = scmp.eq.s32.totalorder %s28, 1
      %p170 = por %p168, %p169
      %p172 = scmp.ne.s32.totalorder %s157, %s171
      %p173 = scmp.eq.s32.totalorder %s28, 0
      %p174 = por %p172, %p173
      %s176 = sadd.s32 %s175, 1
      %p179 = scmp.eq.s32.totalorder %s22, 1
      %p180 = scmp.ne.s32.totalorder %s175, %s177
      %p181 = scmp.eq.s32.totalorder %s22, 0
      %p182 = por %p180, %p181
      %p183 = scmp.ne.s32.totalorder %s175, %s177
      %p184 = scmp.eq.s32.totalorder %s27, 1
      %p185 = por %p183, %p184
      %p186 = scmp.ne.s32.totalorder %s177, %s178
      %p187 = scmp.eq.s32.totalorder %s27, 0
      %p188 = por %p186, %p187
      %p189 = scmp.ne.s32.totalorder %s177, %s178
      %p190 = scmp.eq.s32.totalorder %s28, 1
      %p191 = por %p189, %p190
      %p193 = scmp.ne.s32.totalorder %s178, %s192
      %p194 = scmp.eq.s32.totalorder %s28, 0
      %p195 = por %p193, %p194
      %s196 = ssub.s32 %s29, %s41
      %s197 = ssub.s32 %s30, %s37
      %s198 = sor.u32 %s196, %s197
      %p199 = scmp.eq.s32.totalorder %s198, 0
      %s201 = sadd.s32 %s200, 1
      %s202 = scalar_select %p199, %s200, %s201
      %p205 = pneg %p199
      %p206 = scmp.eq.s32.totalorder %s22, 1
      %p207 = por %p205, %p206
      %p208 = scmp.ne.s32.totalorder %s200, %s203
      %p209 = scmp.eq.s32.totalorder %s22, 0
      %p210 = por %p208, %p209
      %p211 = scmp.ne.s32.totalorder %s200, %s203
      %p212 = scmp.eq.s32.totalorder %s27, 1
      %p213 = por %p211, %p212
      %p214 = scmp.ne.s32.totalorder %s203, %s204
      %p215 = scmp.eq.s32.totalorder %s27, 0
      %p216 = por %p214, %p215
      %p217 = scmp.ne.s32.totalorder %s203, %s204
      %p218 = scmp.eq.s32.totalorder %s28, 1
      %p219 = por %p217, %p218
      %p221 = scmp.ne.s32.totalorder %s204, %s220
      %p222 = scmp.eq.s32.totalorder %s28, 0
      %p223 = por %p221, %p222
      %p224 = scmp.le.s32.totalorder 1, %s22
      %p225 = scmp.lt.s32.totalorder %s22, 3
      %p226 = pnand %p224, %p225
      %p227 = pneg %p226
      // Predicated region
      $region9: #{tpu_custom_call.1} parent=5 // pred_check
        _
      $region10: #{tpu_custom_call.1} parent=5 // pred_check_branch
        %229 = sbr.rel (%p226) target = $region12
      $region11: #{tpu_custom_call.1} parent=5 // pred_region
        %s230 = ssub.s32 %s22, 1
        // Predicated region
        $region13: #{tpu_custom_call.1} parent=11 // pred_check
          %p231 = pneg %p83
        $region14: #{tpu_custom_call.1} parent=11 // pred_check_branch
          %233 = sbr.rel (%p231) target = $region16
        $region15: #{tpu_custom_call.1} parent=11 // pred_region
          %s235 = ssub.s32 896, 896
          %236 = vsyncadd [#allocation6], %s235
          %s237 = sshll.u32 [#allocation5], 4
          %s238 = int_to_ptr.vmem [resolvable:$true] %s237
          %243 = dma.hbm_to_vmem [thread:$0]  %s1, 896, %s238, [#allocation6], 128, 128, 8
        $region16: #{tpu_custom_call.1} parent=11 // pred_fallthru
          _
        // Predicated region
        $region17: #{tpu_custom_call.1} parent=11 // pred_check
          %p244 = pneg %p104
        $region18: #{tpu_custom_call.1} parent=11 // pred_check_branch
          %246 = sbr.rel (%p244) target = $region20
        $region19: #{tpu_custom_call.1} parent=11 // pred_region
          %s248 = ssub.s32 16, 16
          %249 = vsyncadd [#allocation6], %s248
          %s251 = sshll.u32 [#allocation7], 4
          %s252 = int_to_ptr.vmem [resolvable:$true] %s251
          %254 = dma.hbm_to_vmem [thread:$0]  %s2, 16, %s252, [#allocation6]
        $region20: #{tpu_custom_call.1} parent=11 // pred_fallthru
          _
        // Predicated region
        $region21: #{tpu_custom_call.1} parent=11 // pred_check
          %p255 = pneg %p125
        $region22: #{tpu_custom_call.1} parent=11 // pred_check_branch
          %257 = sbr.rel (%p255) target = $region24
        $region23: #{tpu_custom_call.1} parent=11 // pred_region
          %s259 = ssub.s32 4608, 4608
          %260 = vsyncadd [#allocation9], %s259
          %s261 = sshll.u32 [#allocation8], 4
          %s262 = int_to_ptr.vmem [resolvable:$true] %s261
          %267 = dma.hbm_to_vmem [thread:$0]  %s3, 4608, %s262, [#allocation9], 128, 128, 8
        $region24: #{tpu_custom_call.1} parent=11 // pred_fallthru
          _
        // Predicated region
        $region25: #{tpu_custom_call.1} parent=11 // pred_check
          %p268 = pneg %p146
        $region26: #{tpu_custom_call.1} parent=11 // pred_check_branch
          %270 = sbr.rel (%p268) target = $region28
        $region27: #{tpu_custom_call.1} parent=11 // pred_region
          %s272 = ssub.s32 16, 16
          %273 = vsyncadd [#allocation9], %s272
          %s275 = sshll.u32 [#allocation10], 4
          %s276 = int_to_ptr.vmem [resolvable:$true] %s275
          %278 = dma.hbm_to_vmem [thread:$0]  %s4, 16, %s276, [#allocation9]
        $region28: #{tpu_custom_call.1} parent=11 // pred_fallthru
          _
        // Predicated region
        $region29: #{tpu_custom_call.1} parent=11 // pred_check
          %p279 = pneg %p167
        $region30: #{tpu_custom_call.1} parent=11 // pred_check_branch
          %281 = sbr.rel (%p279) target = $region32
        $region31: #{tpu_custom_call.1} parent=11 // pred_region
          %s283 = ssub.s32 512, 512
          %284 = vsyncadd [#allocation12], %s283
          %s285 = sshll.u32 [#allocation11], 4
          %s286 = int_to_ptr.vmem [resolvable:$true] %s285
          %291 = dma.hbm_to_vmem [thread:$0]  %s5, 512, %s286, [#allocation12], 128, 128, 8
        $region32: #{tpu_custom_call.1} parent=11 // pred_fallthru
          _
        // Predicated region
        $region33: #{tpu_custom_call.1} parent=11 // pred_check
          %p292 = pneg %p188
        $region34: #{tpu_custom_call.1} parent=11 // pred_check_branch
          %294 = sbr.rel (%p292) target = $region36
        $region35: #{tpu_custom_call.1} parent=11 // pred_region
          %s296 = ssub.s32 128, 128
          %297 = vsyncadd [#allocation12], %s296
          %s299 = sshll.u32 [#allocation13], 4
          %s300 = int_to_ptr.vmem [resolvable:$true] %s299
          %302 = dma.hbm_to_vmem [thread:$0]  %s6, 128, %s300, [#allocation12]
        $region36: #{tpu_custom_call.1} parent=11 // pred_fallthru
          _
      $region12: #{tpu_custom_call.1} parent=5 // pred_fallthru
        _
      %p303 = scmp.lt.s32.totalorder %s22, 2
      // Predicated region
      $region37: #{tpu_custom_call.1} parent=5 // pred_check
        %p304 = pneg %p303
      $region38: #{tpu_custom_call.1} parent=5 // pred_check_branch
        %306 = sbr.rel (%p304) target = $region40
      $region39: #{tpu_custom_call.1} parent=5 // pred_region
        // Predicated region
        $region41: #{tpu_custom_call.1} parent=39 // pred_check
          %p307 = pneg %p56
        $region42: #{tpu_custom_call.1} parent=39 // pred_check_branch
          %309 = sbr.rel (%p307) target = $region44
        $region43: #{tpu_custom_call.1} parent=39 // pred_region
          %s310 = sand.u32 %s46, 1
          %s311 = scalar_lea.sflag [#allocation3], %s310
          %s312 = sand.u32 %s46, 1
          %s313 = smul.addr %s312, 320
          %s314 = scalar_lea.vmem [#allocation2], %s313
          %s316 = ssub.s32 5120, 5120
          %317 = vsyncadd %s311, %s316
          %s318 = smul.addr %s30, 40
          %s319 = smul.addr %s29, 40
          %s320 = sadd.s32 %s318, %s319
          %s321 = smul.addr %s320, 128
          %s322 = scalar_lea.hbm %s0, %s321
          %s323 = sshll.u32 %s314, 4
          %s324 = int_to_ptr.vmem [resolvable:$true] %s323
          %329 = dma.hbm_to_vmem [thread:$0]  %s322, 5120, %s324, %s311, 128, 128, 8
        $region44: #{tpu_custom_call.1} parent=39 // pred_fallthru
          _
      $region40: #{tpu_custom_call.1} parent=5 // pred_fallthru
        _
      %p330 = scmp.le.s32.totalorder 1, %s22
      %p331 = scmp.lt.s32.totalorder %s22, 3
      %p332 = pnand %p330, %p331
      %p333 = pneg %p332
      // Predicated region
      $region45: #{tpu_custom_call.1} parent=5 // pred_check
        _
      $region46: #{tpu_custom_call.1} parent=5 // pred_check_branch
        %335 = sbr.rel (%p332) target = $region48
      $region47: #{tpu_custom_call.1} parent=5 // pred_region
        %s336 = ssub.s32 %s22, 1
        %s337 = sand.u32 %s49, 1
        %s338 = scalar_lea.sflag [#allocation3], %s337
        %s339 = sand.u32 %s49, 1
        %s340 = smul.addr %s339, 320
        %s341 = scalar_lea.vmem [#allocation2], %s340
        // Predicated region
        $region49: #{tpu_custom_call.1} parent=47 // pred_check
          %p342 = pneg %p62
        $region50: #{tpu_custom_call.1} parent=47 // pred_check_branch
          %344 = sbr.rel (%p342) target = $region52
        $region51: #{tpu_custom_call.1} parent=47 // pred_region
          %345 = dma.done %s338, 5120
        $region52: #{tpu_custom_call.1} parent=47 // pred_fallthru
          _
        // Predicated region
        $region53: #{tpu_custom_call.1} parent=47 // pred_check
          %p346 = pneg %p83
        $region54: #{tpu_custom_call.1} parent=47 // pred_check_branch
          %348 = sbr.rel (%p346) target = $region56
        $region55: #{tpu_custom_call.1} parent=47 // pred_region
          %349 = dma.done [#allocation6], 896
        $region56: #{tpu_custom_call.1} parent=47 // pred_fallthru
          _
        // Predicated region
        $region57: #{tpu_custom_call.1} parent=47 // pred_check
          %p350 = pneg %p104
        $region58: #{tpu_custom_call.1} parent=47 // pred_check_branch
          %352 = sbr.rel (%p350) target = $region60
        $region59: #{tpu_custom_call.1} parent=47 // pred_region
          %353 = dma.done [#allocation6], 16
        $region60: #{tpu_custom_call.1} parent=47 // pred_fallthru
          _
        // Predicated region
        $region61: #{tpu_custom_call.1} parent=47 // pred_check
          %p354 = pneg %p125
        $region62: #{tpu_custom_call.1} parent=47 // pred_check_branch
          %356 = sbr.rel (%p354) target = $region64
        $region63: #{tpu_custom_call.1} parent=47 // pred_region
          %357 = dma.done [#allocation9], 4608
        $region64: #{tpu_custom_call.1} parent=47 // pred_fallthru
          _
        // Predicated region
        $region65: #{tpu_custom_call.1} parent=47 // pred_check
          %p358 = pneg %p146
        $region66: #{tpu_custom_call.1} parent=47 // pred_check_branch
          %360 = sbr.rel (%p358) target = $region68
        $region67: #{tpu_custom_call.1} parent=47 // pred_region
          %361 = dma.done [#allocation9], 16
        $region68: #{tpu_custom_call.1} parent=47 // pred_fallthru
          _
        // Predicated region
        $region69: #{tpu_custom_call.1} parent=47 // pred_check
          %p362 = pneg %p167
        $region70: #{tpu_custom_call.1} parent=47 // pred_check_branch
          %364 = sbr.rel (%p362) target = $region72
        $region71: #{tpu_custom_call.1} parent=47 // pred_region
          %365 = dma.done [#allocation12], 512
        $region72: #{tpu_custom_call.1} parent=47 // pred_fallthru
          _
        // Predicated region
        $region73: #{tpu_custom_call.1} parent=47 // pred_check
          %p366 = pneg %p188
        $region74: #{tpu_custom_call.1} parent=47 // pred_check_branch
          %368 = sbr.rel (%p366) target = $region76
        $region75: #{tpu_custom_call.1} parent=47 // pred_region
          %369 = dma.done [#allocation12], 128
        $region76: #{tpu_custom_call.1} parent=47 // pred_fallthru
          _
        %s370 = sand.u32 %s49, 1
        %s371 = scalar_lea.sflag [#allocation3], %s370
        %s372 = sand.u32 %s49, 1
        %s373 = smul.addr %s372, 320
        %s374 = scalar_lea.vmem [#allocation2], %s373
        %p375 = pneg %p62
        %p376 = pneg %p59
        %p377 = pneg %p83
        %p378 = pneg %p80
        %p379 = pneg %p104
        %p380 = pneg %p101
        %p381 = pneg %p125
        %p382 = pneg %p122
        %p383 = pneg %p146
        %p384 = pneg %p143
        %p385 = pneg %p167
        %p386 = pneg %p164
        %p387 = pneg %p188
        %p388 = pneg %p185
        %p389 = pneg %p216
        %p390 = pneg %p213
        %s391 = sand.u32 %s203, 1
        %s392 = scalar_lea.sflag [#allocation4], %s391
        %s393 = sand.u32 %s203, 1
        %s394 = smul.addr %s393, 16
        %s395 = scalar_lea.vmem [#allocation14], %s394
        %s396 = smul.u32 2, %s32
        %v397 = vld [vmem:[%s341] sm:$0xff]
        %v398 = vld [vmem:[%s341 + $0x8] sm:$0xff]
        %v399 = vld [vmem:[%s341 + $0x10] sm:$0xff]
        %v400 = vld [vmem:[%s341 + $0x18] sm:$0xff]
        %v401 = vld [vmem:[%s341 + $0x20] sm:$0xff]
        %v402 = vld [vmem:[%s341 + $0x28] sm:$0xff]
        %v403 = vld [vmem:[%s341 + $0x30] sm:$0xff]
        %v404 = vld [vmem:[%s341 + $0x38] sm:$0xff]
        %v405 = vld [vmem:[%s341 + $0x40] sm:$0xff]
        %v406 = vld [vmem:[%s341 + $0x48] sm:$0xff]
        %v407 = vld [vmem:[%s341 + $0x50] sm:$0xff]
        %v408 = vld [vmem:[%s341 + $0x58] sm:$0xff]
        %v409 = vld [vmem:[%s341 + $0x60] sm:$0xff]
        %v410 = vld [vmem:[%s341 + $0x68] sm:$0xff]
        %v411 = vld [vmem:[%s341 + $0x70] sm:$0xff]
        %v412 = vld [vmem:[%s341 + $0x78] sm:$0xff]
        %v413 = vld [vmem:[%s341 + $0x80] sm:$0xff]
        %v414 = vld [vmem:[%s341 + $0x88] sm:$0xff]
        %v415 = vld [vmem:[%s341 + $0x90] sm:$0xff]
        %v416 = vld [vmem:[%s341 + $0x98] sm:$0xff]
        %v417 = vld [vmem:[%s341 + $0xa0] sm:$0xff]
        %v418 = vld [vmem:[%s341 + $0xa8] sm:$0xff]
        %v419 = vld [vmem:[%s341 + $0xb0] sm:$0xff]
        %v420 = vld [vmem:[%s341 + $0xb8] sm:$0xff]
        %v421 = vld [vmem:[%s341 + $0xc0] sm:$0xff]
        %v422 = vld [vmem:[%s341 + $0xc8] sm:$0xff]
        %v423 = vld [vmem:[%s341 + $0xd0] sm:$0xff]
        %v424 = vld [vmem:[%s341 + $0xd8] sm:$0xff]
        %v425 = vld [vmem:[%s341 + $0xe0] sm:$0xff]
        %v426 = vld [vmem:[%s341 + $0xe8] sm:$0xff]
        %v427 = vld [vmem:[%s341 + $0xf0] sm:$0xff]
        %v428 = vld [vmem:[%s341 + $0xf8] sm:$0xff]
        %v429 = vld [vmem:[%s341 + $0x100] sm:$0xff]
        %v430 = vld [vmem:[%s341 + $0x108] sm:$0xff]
        %v431 = vld [vmem:[%s341 + $0x110] sm:$0xff]
        %v432 = vld [vmem:[%s341 + $0x118] sm:$0xff]
        %s433 = scalar_lea.vmem %s341, 16 [#allocation2]
        %v434 = vld [vmem:[%s433] sm:$0xff]
        %v435 = vld [vmem:[%s433 + $0x8] sm:$0xff]
        %v436 = vld [vmem:[%s433 + $0x10] sm:$0xff]
        %v437 = vld [vmem:[%s433 + $0x18] sm:$0xff]
        %v438 = vld [vmem:[%s433 + $0x20] sm:$0xff]
        %v439 = vld [vmem:[%s433 + $0x28] sm:$0xff]
        %v440 = vld [vmem:[%s433 + $0x30] sm:$0xff]
        %v441 = vld [vmem:[%s433 + $0x38] sm:$0xff]
        %v442 = vld [vmem:[%s433 + $0x40] sm:$0xff]
        %v443 = vld [vmem:[%s433 + $0x48] sm:$0xff]
        %v444 = vld [vmem:[%s433 + $0x50] sm:$0xff]
        %v445 = vld [vmem:[%s433 + $0x58] sm:$0xff]
        %v446 = vld [vmem:[%s433 + $0x60] sm:$0xff]
        %v447 = vld [vmem:[%s433 + $0x68] sm:$0xff]
        %v448 = vld [vmem:[%s433 + $0x70] sm:$0xff]
        %v449 = vld [vmem:[%s433 + $0x78] sm:$0xff]
        %v450 = vld [vmem:[%s433 + $0x80] sm:$0xff]
        %v451 = vld [vmem:[%s433 + $0x88] sm:$0xff]
        %v452 = vld [vmem:[%s433 + $0x90] sm:$0xff]
        %v453 = vld [vmem:[%s433 + $0x98] sm:$0xff]
        %v454 = vld [vmem:[%s433 + $0xa0] sm:$0xff]
        %v455 = vld [vmem:[%s433 + $0xa8] sm:$0xff]
        %v456 = vld [vmem:[%s433 + $0xb0] sm:$0xff]
        %v457 = vld [vmem:[%s433 + $0xb8] sm:$0xff]
        %v458 = vld [vmem:[%s433 + $0xc0] sm:$0xff]
        %v459 = vld [vmem:[%s433 + $0xc8] sm:$0xff]
        %v460 = vld [vmem:[%s433 + $0xd0] sm:$0xff]
        %v461 = vld [vmem:[%s433 + $0xd8] sm:$0xff]
        %v462 = vld [vmem:[%s433 + $0xe0] sm:$0xff]
        %v463 = vld [vmem:[%s433 + $0xe8] sm:$0xff]
        %v464 = vld [vmem:[%s433 + $0xf0] sm:$0xff]
        %v465 = vld [vmem:[%s433 + $0xf8] sm:$0xff]
        %v466 = vld [vmem:[%s433 + $0x100] sm:$0xff]
        %v467 = vld [vmem:[%s433 + $0x108] sm:$0xff]
        %v468 = vld [vmem:[%s433 + $0x110] sm:$0xff]
        %v469 = vld [vmem:[%s433 + $0x118] sm:$0xff]
        %s470 = scalar_lea.vmem %s341, 32 [#allocation2]
        %v471 = vld [vmem:[%s470] sm:$0xff]
        %v472 = vld [vmem:[%s470 + $0x8] sm:$0xff]
        %v473 = vld [vmem:[%s470 + $0x10] sm:$0xff]
        %v474 = vld [vmem:[%s470 + $0x18] sm:$0xff]
        %v475 = vld [vmem:[%s470 + $0x20] sm:$0xff]
        %v476 = vld [vmem:[%s470 + $0x28] sm:$0xff]
        %v477 = vld [vmem:[%s470 + $0x30] sm:$0xff]
        %v478 = vld [vmem:[%s470 + $0x38] sm:$0xff]
        %v479 = vld [vmem:[%s470 + $0x40] sm:$0xff]
        %v480 = vld [vmem:[%s470 + $0x48] sm:$0xff]
        %v481 = vld [vmem:[%s470 + $0x50] sm:$0xff]
        %v482 = vld [vmem:[%s470 + $0x58] sm:$0xff]
        %v483 = vld [vmem:[%s470 + $0x60] sm:$0xff]
        %v484 = vld [vmem:[%s470 + $0x68] sm:$0xff]
        %v485 = vld [vmem:[%s470 + $0x70] sm:$0xff]
        %v486 = vld [vmem:[%s470 + $0x78] sm:$0xff]
        %v487 = vld [vmem:[%s470 + $0x80] sm:$0xff]
        %v488 = vld [vmem:[%s470 + $0x88] sm:$0xff]
        %v489 = vld [vmem:[%s470 + $0x90] sm:$0xff]
        %v490 = vld [vmem:[%s470 + $0x98] sm:$0xff]
        %v491 = vld [vmem:[%s470 + $0xa0] sm:$0xff]
        %v492 = vld [vmem:[%s470 + $0xa8] sm:$0xff]
        %v493 = vld [vmem:[%s470 + $0xb0] sm:$0xff]
        %v494 = vld [vmem:[%s470 + $0xb8] sm:$0xff]
        %v495 = vld [vmem:[%s470 + $0xc0] sm:$0xff]
        %v496 = vld [vmem:[%s470 + $0xc8] sm:$0xff]
        %v497 = vld [vmem:[%s470 + $0xd0] sm:$0xff]
        %v498 = vld [vmem:[%s470 + $0xd8] sm:$0xff]
        %v499 = vld [vmem:[%s470 + $0xe0] sm:$0xff]
        %v500 = vld [vmem:[%s470 + $0xe8] sm:$0xff]
        %v501 = vld [vmem:[%s470 + $0xf0] sm:$0xff]
        %v502 = vld [vmem:[%s470 + $0xf8] sm:$0xff]
        %v503 = vld [vmem:[%s470 + $0x100] sm:$0xff]
        %v504 = vld [vmem:[%s470 + $0x108] sm:$0xff]
        %v505 = vld [vmem:[%s470 + $0x110] sm:$0xff]
        %v506 = vld [vmem:[%s470 + $0x118] sm:$0xff]
        %543 = vrot.lane.b32.xlu0 %v434, 18
        %v544 = vpop.permute.xlu0 %543
        %545 = vrot.lane.b32.xlu0 %v435, 18
        %v546 = vpop.permute.xlu0 %545
        %547 = vrot.lane.b32.xlu0 %v436, 18
        %v548 = vpop.permute.xlu0 %547
        %549 = vrot.lane.b32.xlu0 %v437, 18
        %v550 = vpop.permute.xlu0 %549
        %551 = vrot.lane.b32.xlu0 %v438, 18
        %v552 = vpop.permute.xlu0 %551
        %553 = vrot.lane.b32.xlu0 %v439, 18
        %v554 = vpop.permute.xlu0 %553
        %555 = vrot.lane.b32.xlu0 %v440, 18
        %v556 = vpop.permute.xlu0 %555
        %557 = vrot.lane.b32.xlu0 %v441, 18
        %v558 = vpop.permute.xlu0 %557
        %559 = vrot.lane.b32.xlu0 %v442, 18
        %v560 = vpop.permute.xlu0 %559
        %561 = vrot.lane.b32.xlu0 %v443, 18
        %v562 = vpop.permute.xlu0 %561
        %563 = vrot.lane.b32.xlu0 %v444, 18
        %v564 = vpop.permute.xlu0 %563
        %565 = vrot.lane.b32.xlu0 %v445, 18
        %v566 = vpop.permute.xlu0 %565
        %567 = vrot.lane.b32.xlu0 %v446, 18
        %v568 = vpop.permute.xlu0 %567
        %569 = vrot.lane.b32.xlu0 %v447, 18
        %v570 = vpop.permute.xlu0 %569
        %571 = vrot.lane.b32.xlu0 %v448, 18
        %v572 = vpop.permute.xlu0 %571
        %573 = vrot.lane.b32.xlu0 %v449, 18
        %v574 = vpop.permute.xlu0 %573
        %575 = vrot.lane.b32.xlu0 %v450, 18
        %v576 = vpop.permute.xlu0 %575
        %577 = vrot.lane.b32.xlu0 %v451, 18
        %v578 = vpop.permute.xlu0 %577
        %579 = vrot.lane.b32.xlu0 %v452, 18
        %v580 = vpop.permute.xlu0 %579
        %581 = vrot.lane.b32.xlu0 %v453, 18
        %v582 = vpop.permute.xlu0 %581
        %583 = vrot.lane.b32.xlu0 %v454, 18
        %v584 = vpop.permute.xlu0 %583
        %585 = vrot.lane.b32.xlu0 %v455, 18
        %v586 = vpop.permute.xlu0 %585
        %587 = vrot.lane.b32.xlu0 %v456, 18
        %v588 = vpop.permute.xlu0 %587
        %589 = vrot.lane.b32.xlu0 %v457, 18
        %v590 = vpop.permute.xlu0 %589
        %591 = vrot.lane.b32.xlu0 %v458, 18
        %v592 = vpop.permute.xlu0 %591
        %593 = vrot.lane.b32.xlu0 %v459, 18
        %v594 = vpop.permute.xlu0 %593
        %595 = vrot.lane.b32.xlu0 %v460, 18
        %v596 = vpop.permute.xlu0 %595
        %597 = vrot.lane.b32.xlu0 %v461, 18
        %v598 = vpop.permute.xlu0 %597
        %599 = vrot.lane.b32.xlu0 %v462, 18
        %v600 = vpop.permute.xlu0 %599
        %601 = vrot.lane.b32.xlu0 %v463, 18
        %v602 = vpop.permute.xlu0 %601
        %603 = vrot.lane.b32.xlu0 %v464, 18
        %v604 = vpop.permute.xlu0 %603
        %605 = vrot.lane.b32.xlu0 %v465, 18
        %v606 = vpop.permute.xlu0 %605
        %607 = vrot.lane.b32.xlu0 %v466, 18
        %v608 = vpop.permute.xlu0 %607
        %609 = vrot.lane.b32.xlu0 %v467, 18
        %v610 = vpop.permute.xlu0 %609
        %611 = vrot.lane.b32.xlu0 %v468, 18
        %v612 = vpop.permute.xlu0 %611
        %613 = vrot.lane.b32.xlu0 %v469, 18
        %v614 = vpop.permute.xlu0 %613
        %687 = vrot.lane.b32.xlu0 %v471, 36
        %v688 = vpop.permute.xlu0 %687
        %689 = vrot.lane.b32.xlu0 %v472, 36
        %v690 = vpop.permute.xlu0 %689
        %691 = vrot.lane.b32.xlu0 %v473, 36
        %v692 = vpop.permute.xlu0 %691
        %693 = vrot.lane.b32.xlu0 %v474, 36
        %v694 = vpop.permute.xlu0 %693
        %695 = vrot.lane.b32.xlu0 %v475, 36
        %v696 = vpop.permute.xlu0 %695
        %697 = vrot.lane.b32.xlu0 %v476, 36
        %v698 = vpop.permute.xlu0 %697
        %699 = vrot.lane.b32.xlu0 %v477, 36
        %v700 = vpop.permute.xlu0 %699
        %701 = vrot.lane.b32.xlu0 %v478, 36
        %v702 = vpop.permute.xlu0 %701
        %703 = vrot.lane.b32.xlu0 %v479, 36
        %v704 = vpop.permute.xlu0 %703
        %705 = vrot.lane.b32.xlu0 %v480, 36
        %v706 = vpop.permute.xlu0 %705
        %707 = vrot.lane.b32.xlu0 %v481, 36
        %v708 = vpop.permute.xlu0 %707
        %709 = vrot.lane.b32.xlu0 %v482, 36
        %v710 = vpop.permute.xlu0 %709
        %711 = vrot.lane.b32.xlu0 %v483, 36
        %v712 = vpop.permute.xlu0 %711
        %713 = vrot.lane.b32.xlu0 %v484, 36
        %v714 = vpop.permute.xlu0 %713
        %715 = vrot.lane.b32.xlu0 %v485, 36
        %v716 = vpop.permute.xlu0 %715
        %717 = vrot.lane.b32.xlu0 %v486, 36
        %v718 = vpop.permute.xlu0 %717
        %719 = vrot.lane.b32.xlu0 %v487, 36
        %v720 = vpop.permute.xlu0 %719
        %721 = vrot.lane.b32.xlu0 %v488, 36
        %v722 = vpop.permute.xlu0 %721
        %723 = vrot.lane.b32.xlu0 %v489, 36
        %v724 = vpop.permute.xlu0 %723
        %725 = vrot.lane.b32.xlu0 %v490, 36
        %v726 = vpop.permute.xlu0 %725
        %727 = vrot.lane.b32.xlu0 %v491, 36
        %v728 = vpop.permute.xlu0 %727
        %729 = vrot.lane.b32.xlu0 %v492, 36
        %v730 = vpop.permute.xlu0 %729
        %731 = vrot.lane.b32.xlu0 %v493, 36
        %v732 = vpop.permute.xlu0 %731
        %733 = vrot.lane.b32.xlu0 %v494, 36
        %v734 = vpop.permute.xlu0 %733
        %735 = vrot.lane.b32.xlu0 %v495, 36
        %v736 = vpop.permute.xlu0 %735
        %737 = vrot.lane.b32.xlu0 %v496, 36
        %v738 = vpop.permute.xlu0 %737
        %739 = vrot.lane.b32.xlu0 %v497, 36
        %v740 = vpop.permute.xlu0 %739
        %741 = vrot.lane.b32.xlu0 %v498, 36
        %v742 = vpop.permute.xlu0 %741
        %743 = vrot.lane.b32.xlu0 %v499, 36
        %v744 = vpop.permute.xlu0 %743
        %745 = vrot.lane.b32.xlu0 %v500, 36
        %v746 = vpop.permute.xlu0 %745
        %747 = vrot.lane.b32.xlu0 %v501, 36
        %v748 = vpop.permute.xlu0 %747
        %749 = vrot.lane.b32.xlu0 %v502, 36
        %v750 = vpop.permute.xlu0 %749
        %751 = vrot.lane.b32.xlu0 %v503, 36
        %v752 = vpop.permute.xlu0 %751
        %753 = vrot.lane.b32.xlu0 %v504, 36
        %v754 = vpop.permute.xlu0 %753
        %755 = vrot.lane.b32.xlu0 %v505, 36
        %v756 = vpop.permute.xlu0 %755
        %757 = vrot.lane.b32.xlu0 %v506, 36
        %v758 = vpop.permute.xlu0 %757
        %vm795 = vcmask 146432
        %v796 = vsel %vm795, %v397, %v544
        %v797 = vsel %vm795, %v398, %v546
        %v798 = vsel %vm795, %v399, %v548
        %v799 = vsel %vm795, %v400, %v550
        %v800 = vsel %vm795, %v401, %v552
        %v801 = vsel %vm795, %v402, %v554
        %v802 = vsel %vm795, %v403, %v556
        %v803 = vsel %vm795, %v404, %v558
        %v804 = vsel %vm795, %v405, %v560
        %v805 = vsel %vm795, %v406, %v562
        %v806 = vsel %vm795, %v407, %v564
        %v807 = vsel %vm795, %v408, %v566
        %v808 = vsel %vm795, %v409, %v568
        %v809 = vsel %vm795, %v410, %v570
        %v810 = vsel %vm795, %v411, %v572
        %v811 = vsel %vm795, %v412, %v574
        %v812 = vsel %vm795, %v413, %v576
        %v813 = vsel %vm795, %v414, %v578
        %v814 = vsel %vm795, %v415, %v580
        %v815 = vsel %vm795, %v416, %v582
        %v816 = vsel %vm795, %v417, %v584
        %v817 = vsel %vm795, %v418, %v586
        %v818 = vsel %vm795, %v419, %v588
        %v819 = vsel %vm795, %v420, %v590
        %v820 = vsel %vm795, %v421, %v592
        %v821 = vsel %vm795, %v422, %v594
        %v822 = vsel %vm795, %v423, %v596
        %v823 = vsel %vm795, %v424, %v598
        %v824 = vsel %vm795, %v425, %v600
        %v825 = vsel %vm795, %v426, %v602
        %v826 = vsel %vm795, %v427, %v604
        %v827 = vsel %vm795, %v428, %v606
        %v828 = vsel %vm795, %v429, %v608
        %v829 = vsel %vm795, %v430, %v610
        %v830 = vsel %vm795, %v431, %v612
        %v831 = vsel %vm795, %v432, %v614
        %vm832 = vcmask 293888
        %v833 = vsel %vm832, %v796, %v688
        %v834 = vsel %vm832, %v797, %v690
        %v835 = vsel %vm832, %v798, %v692
        %v836 = vsel %vm832, %v799, %v694
        %v837 = vsel %vm832, %v800, %v696
        %v838 = vsel %vm832, %v801, %v698
        %v839 = vsel %vm832, %v802, %v700
        %v840 = vsel %vm832, %v803, %v702
        %v841 = vsel %vm832, %v804, %v704
        %v842 = vsel %vm832, %v805, %v706
        %v843 = vsel %vm832, %v806, %v708
        %v844 = vsel %vm832, %v807, %v710
        %v845 = vsel %vm832, %v808, %v712
        %v846 = vsel %vm832, %v809, %v714
        %v847 = vsel %vm832, %v810, %v716
        %v848 = vsel %vm832, %v811, %v718
        %v849 = vsel %vm832, %v812, %v720
        %v850 = vsel %vm832, %v813, %v722
        %v851 = vsel %vm832, %v814, %v724
        %v852 = vsel %vm832, %v815, %v726
        %v853 = vsel %vm832, %v816, %v728
        %v854 = vsel %vm832, %v817, %v730
        %v855 = vsel %vm832, %v818, %v732
        %v856 = vsel %vm832, %v819, %v734
        %v857 = vsel %vm832, %v820, %v736
        %v858 = vsel %vm832, %v821, %v738
        %v859 = vsel %vm832, %v822, %v740
        %v860 = vsel %vm832, %v823, %v742
        %v861 = vsel %vm832, %v824, %v744
        %v862 = vsel %vm832, %v825, %v746
        %v863 = vsel %vm832, %v826, %v748
        %v864 = vsel %vm832, %v827, %v750
        %v865 = vsel %vm832, %v828, %v752
        %v866 = vsel %vm832, %v829, %v754
        %v867 = vsel %vm832, %v830, %v756
        %v868 = vsel %vm832, %v831, %v758
        %v869 = vld [vmem:[#allocation5] sm:$0xff]
        %v870 = vld [vmem:[#allocation5 + $0x8] sm:$0xff]
        %v871 = vld [vmem:[#allocation5 + $0x10] sm:$0xff]
        %v872 = vld [vmem:[#allocation5 + $0x18] sm:$0xff]
        %v873 = vld [vmem:[#allocation5 + $0x20] sm:$0xff]
        %v874 = vld [vmem:[#allocation5 + $0x28] sm:$0xff]
        %v875 = vld [vmem:[#allocation5 + $0x30] sm:$0x3f]
        %v876 = vld [vmem:[#allocation7] sm:$0x1]
        %v878 = vlaneseq
        %v879 = vshrl.u32 %v878, 7
        %v880 = vsub.s32 0, %v879
        %v881 = vrot.slane %v876, %v880
        %vm883 = vcmask 441344
        %v885 = vsel %vm883, %v833, 0
        %v888 = vsel %vm883, %v834, 0
        %v891 = vsel %vm883, %v835, 0
        %v894 = vsel %vm883, %v836, 0
        %v897 = vsel %vm883, %v837, 0
        %v900 = vsel %vm883, %v838, 0
        %v903 = vsel %vm883, %v839, 0
        %v906 = vsel %vm883, %v840, 0
        %v909 = vsel %vm883, %v841, 0
        %v912 = vsel %vm883, %v842, 0
        %v915 = vsel %vm883, %v843, 0
        %v918 = vsel %vm883, %v844, 0
        %v921 = vsel %vm883, %v845, 0
        %v924 = vsel %vm883, %v846, 0
        %v927 = vsel %vm883, %v847, 0
        %v930 = vsel %vm883, %v848, 0
        %v933 = vsel %vm883, %v849, 0
        %v936 = vsel %vm883, %v850, 0
        %v939 = vsel %vm883, %v851, 0
        %v942 = vsel %vm883, %v852, 0
        %v945 = vsel %vm883, %v853, 0
        %v948 = vsel %vm883, %v854, 0
        %v951 = vsel %vm883, %v855, 0
        %v954 = vsel %vm883, %v856, 0
        %v957 = vsel %vm883, %v857, 0
        %v960 = vsel %vm883, %v858, 0
        %v963 = vsel %vm883, %v859, 0
        %v966 = vsel %vm883, %v860, 0
        %v969 = vsel %vm883, %v861, 0
        %v972 = vsel %vm883, %v862, 0
        %v975 = vsel %vm883, %v863, 0
        %v978 = vsel %vm883, %v864, 0
        %v981 = vsel %vm883, %v865, 0
        %v984 = vsel %vm883, %v866, 0
        %v987 = vsel %vm883, %v867, 0
        %v990 = vsel %vm883, %v868, 0
        %vm992 = vcmask 1045504
        %v994 = vsel %vm992, %v875, 0
        %996 = vmatprep.subr.mxu0 0.0
        %997 = vmatpush1.msra.mxu0 %v869
        %998 = vmatprep.subr.mxu0 0.0
        %999 = vmatpush1.msra.mxu0 %v870
        %1000 = vmatprep.subr.mxu0 0.0
        %1001 = vmatpush1.msra.mxu0 %v871
        %1002 = vmatprep.subr.mxu0 0.0
        %1003 = vmatpush1.msra.mxu0 %v872
        %1004 = vmatprep.subr.mxu0 0.0
        %1005 = vmatpush1.msra.mxu0 %v873
        %1006 = vmatprep.subr.mxu0 0.0
        %1007 = vmatpush1.msra.mxu0 %v874
        %1008 = vmatprep.subr.mxu0 0.0
        %1009 = vmatpush1.msra.mxu0 %v994
        %1010 = vmatprep.subr.mxu0 0.0
        %1011 = vmatpush1.msra.mxu0 0.0
        %1012 = vmatprep.subr.mxu0 0.0
        %1013 = vmatpush1.msra.mxu0 0.0
        %1014 = vmatprep.subr.mxu0 0.0
        %1015 = vmatpush1.msra.mxu0 0.0
        %1016 = vmatprep.subr.mxu0 0.0
        %1017 = vmatpush1.msra.mxu0 0.0
        %1018 = vmatprep.subr.mxu0 0.0
        %1019 = vmatpush1.msra.mxu0 0.0
        %1020 = vmatprep.subr.mxu0 0.0
        %1021 = vmatpush1.msra.mxu0 0.0
        %1022 = vmatprep.subr.mxu0 0.0
        %1023 = vmatpush1.msra.mxu0 0.0
        %1024 = vmatprep.subr.mxu0 0.0
        %1025 = vmatpush1.msra.mxu0 0.0
        %1026 = vmatprep.subr.mxu0 0.0
        %1027 = vmatpush1.msra.mxu0 0.0
        %1028 = vmatprep.subr.mxu0 0.0
        %1029 = vmatpush1.msra.mxu0 0.0
        %1030 = vmatprep.subr.mxu0 0.0
        %1031 = vmatpush1.msra.mxu0 0.0
        %1032 = vmatprep.subr.mxu0 0.0
        %1033 = vmatpush1.msra.mxu0 0.0
        %1034 = vmatprep.subr.mxu0 0.0
        %1035 = vmatpush1.msra.mxu0 0.0
        %1036 = vmatprep.subr.mxu0 0.0
        %1037 = vmatpush1.msra.mxu0 0.0
        %1038 = vmatprep.subr.mxu0 0.0
        %1039 = vmatpush1.msra.mxu0 0.0
        %1040 = vmatprep.subr.mxu0 0.0
        %1041 = vmatpush1.msra.mxu0 0.0
        %1042 = vmatprep.subr.mxu0 0.0
        %1043 = vmatpush1.msra.mxu0 0.0
        %1044 = vmatprep.subr.mxu0 0.0
        %1045 = vmatpush1.msra.mxu0 0.0
        %1046 = vmatprep.subr.mxu0 0.0
        %1047 = vmatpush1.msra.mxu0 0.0
        %1048 = vmatprep.subr.mxu0 0.0
        %1049 = vmatpush1.msra.mxu0 0.0
        %1050 = vmatprep.subr.mxu0 0.0
        %1051 = vmatpush1.msra.mxu0 0.0
        %1052 = vmatprep.subr.mxu0 0.0
        %1053 = vmatpush1.msra.mxu0 0.0
        %1054 = vmatprep.subr.mxu0 0.0
        %1055 = vmatpush1.msra.mxu0 0.0
        %1056 = vmatprep.subr.mxu0 0.0
        %1057 = vmatpush1.msra.mxu0 0.0
        %1058 = vmatprep.subr.mxu0 0.0
        %1059 = vmatpush1.msra.mxu0 0.0
        %1060 = vmatprep.mubr.f32.mxu0 0.0
        %1061 = vmatmul.mubr.f32.gmra.mrb[0].mxu0 %v885
        %v1062 = vpop.f32.mrb[0].mxu0
        %v1063 = vadd.f32 %v881, %v1062
        %v1064 = vpop.f32.mrb[0].mxu0
        %1065 = vmatprep.mubr.f32.mxu0 0.0
        %1066 = vmatmul.mubr.f32.gmra.mrb[0].mxu0 %v888
        %v1067 = vpop.f32.mrb[0].mxu0
        %v1068 = vadd.f32 %v881, %v1067
        %v1069 = vpop.f32.mrb[0].mxu0
        %1070 = vmatprep.mubr.f32.mxu0 0.0
        %1071 = vmatmul.mubr.f32.gmra.mrb[0].mxu0 %v891
        %v1072 = vpop.f32.mrb[0].mxu0
        %v1073 = vadd.f32 %v881, %v1072
        %v1074 = vpop.f32.mrb[0].mxu0
        %1075 = vmatprep.mubr.f32.mxu0 0.0
        %1076 = vmatmul.mubr.f32.gmra.mrb[0].mxu0 %v894
        %v1077 = vpop.f32.mrb[0].mxu0
        %v1078 = vadd.f32 %v881, %v1077
        %v1079 = vpop.f32.mrb[0].mxu0
        %1080 = vmatprep.mubr.f32.mxu0 0.0
        %1081 = vmatmul.mubr.f32.gmra.mrb[0].mxu0 %v897
        %v1082 = vpop.f32.mrb[0].mxu0
        %v1083 = vadd.f32 %v881, %v1082
        %v1084 = vpop.f32.mrb[0].mxu0
        %1085 = vmatprep.mubr.f32.mxu0 0.0
        %1086 = vmatmul.mubr.f32.gmra.mrb[0].mxu0 %v900
        %v1087 = vpop.f32.mrb[0].mxu0
        %v1088 = vadd.f32 %v881, %v1087
        %v1089 = vpop.f32.mrb[0].mxu0
        %1090 = vmatprep.mubr.f32.mxu0 0.0
        %1091 = vmatmul.mubr.f32.gmra.mrb[0].mxu0 %v903
        %v1092 = vpop.f32.mrb[0].mxu0
        %v1093 = vadd.f32 %v881, %v1092
        %v1094 = vpop.f32.mrb[0].mxu0
        %1095 = vmatprep.mubr.f32.mxu0 0.0
        %1096 = vmatmul.mubr.f32.gmra.mrb[0].mxu0 %v906
        %v1097 = vpop.f32.mrb[0].mxu0
        %v1098 = vadd.f32 %v881, %v1097
        %v1099 = vpop.f32.mrb[0].mxu0
        %1100 = vmatprep.mubr.f32.mxu0 0.0
        %1101 = vmatmul.mubr.f32.gmra.mrb[0].mxu0 %v909
        %v1102 = vpop.f32.mrb[0].mxu0
        %v1103 = vadd.f32 %v881, %v1102
        %v1104 = vpop.f32.mrb[0].mxu0
        %1105 = vmatprep.mubr.f32.mxu0 0.0
        %1106 = vmatmul.mubr.f32.gmra.mrb[0].mxu0 %v912
        %v1107 = vpop.f32.mrb[0].mxu0
        %v1108 = vadd.f32 %v881, %v1107
        %v1109 = vpop.f32.mrb[0].mxu0
        %1110 = vmatprep.mubr.f32.mxu0 0.0
        %1111 = vmatmul.mubr.f32.gmra.mrb[0].mxu0 %v915
        %v1112 = vpop.f32.mrb[0].mxu0
        %v1113 = vadd.f32 %v881, %v1112
        %v1114 = vpop.f32.mrb[0].mxu0
        %1115 = vmatprep.mubr.f32.mxu0 0.0
        %1116 = vmatmul.mubr.f32.gmra.mrb[0].mxu0 %v918
        %v1117 = vpop.f32.mrb[0].mxu0
        %v1118 = vadd.f32 %v881, %v1117
        %v1119 = vpop.f32.mrb[0].mxu0
        %1120 = vmatprep.mubr.f32.mxu0 0.0
        %1121 = vmatmul.mubr.f32.gmra.mrb[0].mxu0 %v921
        %v1122 = vpop.f32.mrb[0].mxu0
        %v1123 = vadd.f32 %v881, %v1122
        %v1124 = vpop.f32.mrb[0].mxu0
        %1125 = vmatprep.mubr.f32.mxu0 0.0
        %1126 = vmatmul.mubr.f32.gmra.mrb[0].mxu0 %v924
        %v1127 = vpop.f32.mrb[0].mxu0
        %v1128 = vadd.f32 %v881, %v1127
        %v1129 = vpop.f32.mrb[0].mxu0
        %1130 = vmatprep.mubr.f32.mxu0 0.0
        %1131 = vmatmul.mubr.f32.gmra.mrb[0].mxu0 %v927
        %v1132 = vpop.f32.mrb[0].mxu0
        %v1133 = vadd.f32 %v881, %v1132
        %v1134 = vpop.f32.mrb[0].mxu0
        %1135 = vmatprep.mubr.f32.mxu0 0.0
        %1136 = vmatmul.mubr.f32.gmra.mrb[0].mxu0 %v930
        %v1137 = vpop.f32.mrb[0].mxu0
        %v1138 = vadd.f32 %v881, %v1137
        %v1139 = vpop.f32.mrb[0].mxu0
        %1140 = vmatprep.mubr.f32.mxu0 0.0
        %1141 = vmatmul.mubr.f32.gmra.mrb[0].mxu0 %v933
        %v1142 = vpop.f32.mrb[0].mxu0
        %v1143 = vadd.f32 %v881, %v1142
        %v1144 = vpop.f32.mrb[0].mxu0
        %1145 = vmatprep.mubr.f32.mxu0 0.0
        %1146 = vmatmul.mubr.f32.gmra.mrb[0].mxu0 %v936
        %v1147 = vpop.f32.mrb[0].mxu0
        %v1148 = vadd.f32 %v881, %v1147
        %v1149 = vpop.f32.mrb[0].mxu0
        %1150 = vmatprep.mubr.f32.mxu0 0.0
        %1151 = vmatmul.mubr.f32.gmra.mrb[0].mxu0 %v939
        %v1152 = vpop.f32.mrb[0].mxu0
        %v1153 = vadd.f32 %v881, %v1152
        %v1154 = vpop.f32.mrb[0].mxu0
        %1155 = vmatprep.mubr.f32.mxu0 0.0
        %1156 = vmatmul.mubr.f32.gmra.mrb[0].mxu0 %v942
        %v1157 = vpop.f32.mrb[0].mxu0
        %v1158 = vadd.f32 %v881, %v1157
        %v1159 = vpop.f32.mrb[0].mxu0
        %1160 = vmatprep.mubr.f32.mxu0 0.0
        %1161 = vmatmul.mubr.f32.gmra.mrb[0].mxu0 %v945
        %v1162 = vpop.f32.mrb[0].mxu0
        %v1163 = vadd.f32 %v881, %v1162
        %v1164 = vpop.f32.mrb[0].mxu0
        %1165 = vmatprep.mubr.f32.mxu0 0.0
        %1166 = vmatmul.mubr.f32.gmra.mrb[0].mxu0 %v948
        %v1167 = vpop.f32.mrb[0].mxu0
        %v1168 = vadd.f32 %v881, %v1167
        %v1169 = vpop.f32.mrb[0].mxu0
        %1170 = vmatprep.mubr.f32.mxu0 0.0
        %1171 = vmatmul.mubr.f32.gmra.mrb[0].mxu0 %v951
        %v1172 = vpop.f32.mrb[0].mxu0
        %v1173 = vadd.f32 %v881, %v1172
        %v1174 = vpop.f32.mrb[0].mxu0
        %1175 = vmatprep.mubr.f32.mxu0 0.0
        %1176 = vmatmul.mubr.f32.gmra.mrb[0].mxu0 %v954
        %v1177 = vpop.f32.mrb[0].mxu0
        %v1178 = vadd.f32 %v881, %v1177
        %v1179 = vpop.f32.mrb[0].mxu0
        %1180 = vmatprep.mubr.f32.mxu0 0.0
        %1181 = vmatmul.mubr.f32.gmra.mrb[0].mxu0 %v957
        %v1182 = vpop.f32.mrb[0].mxu0
        %v1183 = vadd.f32 %v881, %v1182
        %v1184 = vpop.f32.mrb[0].mxu0
        %1185 = vmatprep.mubr.f32.mxu0 0.0
        %1186 = vmatmul.mubr.f32.gmra.mrb[0].mxu0 %v960
        %v1187 = vpop.f32.mrb[0].mxu0
        %v1188 = vadd.f32 %v881, %v1187
        %v1189 = vpop.f32.mrb[0].mxu0
        %1190 = vmatprep.mubr.f32.mxu0 0.0
        %1191 = vmatmul.mubr.f32.gmra.mrb[0].mxu0 %v963
        %v1192 = vpop.f32.mrb[0].mxu0
        %v1193 = vadd.f32 %v881, %v1192
        %v1194 = vpop.f32.mrb[0].mxu0
        %1195 = vmatprep.mubr.f32.mxu0 0.0
        %1196 = vmatmul.mubr.f32.gmra.mrb[0].mxu0 %v966
        %v1197 = vpop.f32.mrb[0].mxu0
        %v1198 = vadd.f32 %v881, %v1197
        %v1199 = vpop.f32.mrb[0].mxu0
        %1200 = vmatprep.mubr.f32.mxu0 0.0
        %1201 = vmatmul.mubr.f32.gmra.mrb[0].mxu0 %v969
        %v1202 = vpop.f32.mrb[0].mxu0
        %v1203 = vadd.f32 %v881, %v1202
        %v1204 = vpop.f32.mrb[0].mxu0
        %1205 = vmatprep.mubr.f32.mxu0 0.0
        %1206 = vmatmul.mubr.f32.gmra.mrb[0].mxu0 %v972
        %v1207 = vpop.f32.mrb[0].mxu0
        %v1208 = vadd.f32 %v881, %v1207
        %v1209 = vpop.f32.mrb[0].mxu0
        %1210 = vmatprep.mubr.f32.mxu0 0.0
        %1211 = vmatmul.mubr.f32.gmra.mrb[0].mxu0 %v975
        %v1212 = vpop.f32.mrb[0].mxu0
        %v1213 = vadd.f32 %v881, %v1212
        %v1214 = vpop.f32.mrb[0].mxu0
        %1215 = vmatprep.mubr.f32.mxu0 0.0
        %1216 = vmatmul.mubr.f32.gmra.mrb[0].mxu0 %v978
        %v1217 = vpop.f32.mrb[0].mxu0
        %v1218 = vadd.f32 %v881, %v1217
        %v1219 = vpop.f32.mrb[0].mxu0
        %1220 = vmatprep.mubr.f32.mxu0 0.0
        %1221 = vmatmul.mubr.f32.gmra.mrb[0].mxu0 %v981
        %v1222 = vpop.f32.mrb[0].mxu0
        %v1223 = vadd.f32 %v881, %v1222
        %v1224 = vpop.f32.mrb[0].mxu0
        %1225 = vmatprep.mubr.f32.mxu0 0.0
        %1226 = vmatmul.mubr.f32.gmra.mrb[0].mxu0 %v984
        %v1227 = vpop.f32.mrb[0].mxu0
        %v1228 = vadd.f32 %v881, %v1227
        %v1229 = vpop.f32.mrb[0].mxu0
        %1230 = vmatprep.mubr.f32.mxu0 0.0
        %1231 = vmatmul.mubr.f32.gmra.mrb[0].mxu0 %v987
        %v1232 = vpop.f32.mrb[0].mxu0
        %v1233 = vadd.f32 %v881, %v1232
        %v1234 = vpop.f32.mrb[0].mxu0
        %1235 = vmatprep.mubr.f32.mxu0 0.0
        %1236 = vmatmul.mubr.f32.gmra.mrb[0].mxu0 %v990
        %v1237 = vpop.f32.mrb[0].mxu0
        %v1238 = vadd.f32 %v881, %v1237
        %v1239 = vpop.f32.mrb[0].mxu0
        %1240 = vdwg.mxu0
        %vm1241 = vcmp.ge.f32.partialorder %v1063, 0.0
        %vm1242 = vcmp.ge.f32.partialorder %v1068, 0.0
        %vm1243 = vcmp.ge.f32.partialorder %v1073, 0.0
        %vm1244 = vcmp.ge.f32.partialorder %v1078, 0.0
        %vm1245 = vcmp.ge.f32.partialorder %v1083, 0.0
        %vm1246 = vcmp.ge.f32.partialorder %v1088, 0.0
        %vm1247 = vcmp.ge.f32.partialorder %v1093, 0.0
        %vm1248 = vcmp.ge.f32.partialorder %v1098, 0.0
        %vm1249 = vcmp.ge.f32.partialorder %v1103, 0.0
        %vm1250 = vcmp.ge.f32.partialorder %v1108, 0.0
        %vm1251 = vcmp.ge.f32.partialorder %v1113, 0.0
        %vm1252 = vcmp.ge.f32.partialorder %v1118, 0.0
        %vm1253 = vcmp.ge.f32.partialorder %v1123, 0.0
        %vm1254 = vcmp.ge.f32.partialorder %v1128, 0.0
        %vm1255 = vcmp.ge.f32.partialorder %v1133, 0.0
        %vm1256 = vcmp.ge.f32.partialorder %v1138, 0.0
        %vm1257 = vcmp.ge.f32.partialorder %v1143, 0.0
        %vm1258 = vcmp.ge.f32.partialorder %v1148, 0.0
        %vm1259 = vcmp.ge.f32.partialorder %v1153, 0.0
        %vm1260 = vcmp.ge.f32.partialorder %v1158, 0.0
        %vm1261 = vcmp.ge.f32.partialorder %v1163, 0.0
        %vm1262 = vcmp.ge.f32.partialorder %v1168, 0.0
        %vm1263 = vcmp.ge.f32.partialorder %v1173, 0.0
        %vm1264 = vcmp.ge.f32.partialorder %v1178, 0.0
        %vm1265 = vcmp.ge.f32.partialorder %v1183, 0.0
        %vm1266 = vcmp.ge.f32.partialorder %v1188, 0.0
        %vm1267 = vcmp.ge.f32.partialorder %v1193, 0.0
        %vm1268 = vcmp.ge.f32.partialorder %v1198, 0.0
        %vm1269 = vcmp.ge.f32.partialorder %v1203, 0.0
        %vm1270 = vcmp.ge.f32.partialorder %v1208, 0.0
        %vm1271 = vcmp.ge.f32.partialorder %v1213, 0.0
        %vm1272 = vcmp.ge.f32.partialorder %v1218, 0.0
        %vm1273 = vcmp.ge.f32.partialorder %v1223, 0.0
        %vm1274 = vcmp.ge.f32.partialorder %v1228, 0.0
        %vm1275 = vcmp.ge.f32.partialorder %v1233, 0.0
        %vm1276 = vcmp.ge.f32.partialorder %v1238, 0.0
        %v1277 = vmul.f32 %v1063, 0.2
        %v1278 = vmul.f32 %v1068, 0.2
        %v1279 = vmul.f32 %v1073, 0.2
        %v1280 = vmul.f32 %v1078, 0.2
        %v1281 = vmul.f32 %v1083, 0.2
        %v1282 = vmul.f32 %v1088, 0.2
        %v1283 = vmul.f32 %v1093, 0.2
        %v1284 = vmul.f32 %v1098, 0.2
        %v1285 = vmul.f32 %v1103, 0.2
        %v1286 = vmul.f32 %v1108, 0.2
        %v1287 = vmul.f32 %v1113, 0.2
        %v1288 = vmul.f32 %v1118, 0.2
        %v1289 = vmul.f32 %v1123, 0.2
        %v1290 = vmul.f32 %v1128, 0.2
        %v1291 = vmul.f32 %v1133, 0.2
        %v1292 = vmul.f32 %v1138, 0.2
        %v1293 = vmul.f32 %v1143, 0.2
        %v1294 = vmul.f32 %v1148, 0.2
        %v1295 = vmul.f32 %v1153, 0.2
        %v1296 = vmul.f32 %v1158, 0.2
        %v1297 = vmul.f32 %v1163, 0.2
        %v1298 = vmul.f32 %v1168, 0.2
        %v1299 = vmul.f32 %v1173, 0.2
        %v1300 = vmul.f32 %v1178, 0.2
        %v1301 = vmul.f32 %v1183, 0.2
        %v1302 = vmul.f32 %v1188, 0.2
        %v1303 = vmul.f32 %v1193, 0.2
        %v1304 = vmul.f32 %v1198, 0.2
        %v1305 = vmul.f32 %v1203, 0.2
        %v1306 = vmul.f32 %v1208, 0.2
        %v1307 = vmul.f32 %v1213, 0.2
        %v1308 = vmul.f32 %v1218, 0.2
        %v1309 = vmul.f32 %v1223, 0.2
        %v1310 = vmul.f32 %v1228, 0.2
        %v1311 = vmul.f32 %v1233, 0.2
        %v1312 = vmul.f32 %v1238, 0.2
        %v1313 = vsel %vm1241, %v1063, %v1277
        %v1314 = vsel %vm1242, %v1068, %v1278
        %v1315 = vsel %vm1243, %v1073, %v1279
        %v1316 = vsel %vm1244, %v1078, %v1280
        %v1317 = vsel %vm1245, %v1083, %v1281
        %v1318 = vsel %vm1246, %v1088, %v1282
        %v1319 = vsel %vm1247, %v1093, %v1283
        %v1320 = vsel %vm1248, %v1098, %v1284
        %v1321 = vsel %vm1249, %v1103, %v1285
        %v1322 = vsel %vm1250, %v1108, %v1286
        %v1323 = vsel %vm1251, %v1113, %v1287
        %v1324 = vsel %vm1252, %v1118, %v1288
        %v1325 = vsel %vm1253, %v1123, %v1289
        %v1326 = vsel %vm1254, %v1128, %v1290
        %v1327 = vsel %vm1255, %v1133, %v1291
        %v1328 = vsel %vm1256, %v1138, %v1292
        %v1329 = vsel %vm1257, %v1143, %v1293
        %v1330 = vsel %vm1258, %v1148, %v1294
        %v1331 = vsel %vm1259, %v1153, %v1295
        %v1332 = vsel %vm1260, %v1158, %v1296
        %v1333 = vsel %vm1261, %v1163, %v1297
        %v1334 = vsel %vm1262, %v1168, %v1298
        %v1335 = vsel %vm1263, %v1173, %v1299
        %v1336 = vsel %vm1264, %v1178, %v1300
        %v1337 = vsel %vm1265, %v1183, %v1301
        %v1338 = vsel %vm1266, %v1188, %v1302
        %v1339 = vsel %vm1267, %v1193, %v1303
        %v1340 = vsel %vm1268, %v1198, %v1304
        %v1341 = vsel %vm1269, %v1203, %v1305
        %v1342 = vsel %vm1270, %v1208, %v1306
        %v1343 = vsel %vm1271, %v1213, %v1307
        %v1344 = vsel %vm1272, %v1218, %v1308
        %v1345 = vsel %vm1273, %v1223, %v1309
        %v1346 = vsel %vm1274, %v1228, %v1310
        %v1347 = vsel %vm1275, %v1233, %v1311
        %v1348 = vsel %vm1276, %v1238, %v1312
        %p1349 = scmp.gt.s32.totalorder %s32, 0
        %s1350 = scalar_select %p1349, 1, 0
        %s1351 = scvt.s32.f32 %s1350
        %p1352 = scmp.lt.s32.totalorder %s32, 0
        %s1353 = scalar_select %p1352, 1, 0
        %s1354 = scvt.s32.f32 %s1353
        %v1355 = vstv %s1351
        %v1356 = vmul.f32 %v1313, %v1355
        %v1357 = vmul.f32 %v1314, %v1355
        %v1358 = vstv %s1354
        %v1359 = vmul.f32 %v1347, %v1358
        %v1360 = vmul.f32 %v1348, %v1358
        %vm1397 = vcmask 1040384
        %v1398 = vrot.slane %v1356, 7
        %v1399 = vrot.slane %v1357, 7
        %v1400 = vsel %vm1397, %v1398, %v1399
        %v1401 = vrot.slane %v1315, 7
        %v1402 = vrot.slane %v1316, 7
        %v1403 = vsel %vm1397, %v1401, %v1402
        %v1404 = vrot.slane %v1317, 7
        %v1405 = vrot.slane %v1318, 7
        %v1406 = vsel %vm1397, %v1404, %v1405
        %v1407 = vrot.slane %v1319, 7
        %v1408 = vrot.slane %v1320, 7
        %v1409 = vsel %vm1397, %v1407, %v1408
        %v1410 = vrot.slane %v1321, 7
        %v1411 = vrot.slane %v1322, 7
        %v1412 = vsel %vm1397, %v1410, %v1411
        %v1413 = vrot.slane %v1323, 7
        %v1414 = vrot.slane %v1324, 7
        %v1415 = vsel %vm1397, %v1413, %v1414
        %v1416 = vrot.slane %v1325, 7
        %v1417 = vrot.slane %v1326, 7
        %v1418 = vsel %vm1397, %v1416, %v1417
        %v1419 = vrot.slane %v1327, 7
        %v1420 = vrot.slane %v1328, 7
        %v1421 = vsel %vm1397, %v1419, %v1420
        %v1422 = vrot.slane %v1329, 7
        %v1423 = vrot.slane %v1330, 7
        %v1424 = vsel %vm1397, %v1422, %v1423
        %v1425 = vrot.slane %v1331, 7
        %v1426 = vrot.slane %v1332, 7
        %v1427 = vsel %vm1397, %v1425, %v1426
        %v1428 = vrot.slane %v1333, 7
        %v1429 = vrot.slane %v1334, 7
        %v1430 = vsel %vm1397, %v1428, %v1429
        %v1431 = vrot.slane %v1335, 7
        %v1432 = vrot.slane %v1336, 7
        %v1433 = vsel %vm1397, %v1431, %v1432
        %v1434 = vrot.slane %v1337, 7
        %v1435 = vrot.slane %v1338, 7
        %v1436 = vsel %vm1397, %v1434, %v1435
        %v1437 = vrot.slane %v1339, 7
        %v1438 = vrot.slane %v1340, 7
        %v1439 = vsel %vm1397, %v1437, %v1438
        %v1440 = vrot.slane %v1341, 7
        %v1441 = vrot.slane %v1342, 7
        %v1442 = vsel %vm1397, %v1440, %v1441
        %v1443 = vrot.slane %v1343, 7
        %v1444 = vrot.slane %v1344, 7
        %v1445 = vsel %vm1397, %v1443, %v1444
        %v1446 = vrot.slane %v1345, 7
        %v1447 = vrot.slane %v1346, 7
        %v1448 = vsel %vm1397, %v1446, %v1447
        %v1449 = vrot.slane %v1359, 7
        %v1450 = vrot.slane %v1360, 7
        %v1451 = vsel %vm1397, %v1449, %v1450
        %v1486 = vsel %vm1397, 0.0, %v1398
        %v1487 = vsel %vm1397, 0.0, %v1401
        %v1488 = vsel %vm1397, 0.0, %v1404
        %v1489 = vsel %vm1397, 0.0, %v1407
        %v1490 = vsel %vm1397, 0.0, %v1410
        %v1491 = vsel %vm1397, 0.0, %v1413
        %v1492 = vsel %vm1397, 0.0, %v1416
        %v1493 = vsel %vm1397, 0.0, %v1419
        %v1494 = vsel %vm1397, 0.0, %v1422
        %v1495 = vsel %vm1397, 0.0, %v1425
        %v1496 = vsel %vm1397, 0.0, %v1428
        %v1497 = vsel %vm1397, 0.0, %v1431
        %v1498 = vsel %vm1397, 0.0, %v1434
        %v1499 = vsel %vm1397, 0.0, %v1437
        %v1500 = vsel %vm1397, 0.0, %v1440
        %v1501 = vsel %vm1397, 0.0, %v1443
        %v1502 = vsel %vm1397, 0.0, %v1446
        %v1503 = vsel %vm1397, 0.0, %v1449
        %vm1504 = vcmask 1046528
        %v1505 = vrot.slane %v1356, 1
        %v1506 = vrot.slane %v1357, 1
        %v1507 = vsel %vm1504, %v1505, %v1506
        %v1508 = vrot.slane %v1315, 1
        %v1509 = vrot.slane %v1316, 1
        %v1510 = vsel %vm1504, %v1508, %v1509
        %v1511 = vrot.slane %v1317, 1
        %v1512 = vrot.slane %v1318, 1
        %v1513 = vsel %vm1504, %v1511, %v1512
        %v1514 = vrot.slane %v1319, 1
        %v1515 = vrot.slane %v1320, 1
        %v1516 = vsel %vm1504, %v1514, %v1515
        %v1517 = vrot.slane %v1321, 1
        %v1518 = vrot.slane %v1322, 1
        %v1519 = vsel %vm1504, %v1517, %v1518
        %v1520 = vrot.slane %v1323, 1
        %v1521 = vrot.slane %v1324, 1
        %v1522 = vsel %vm1504, %v1520, %v1521
        %v1523 = vrot.slane %v1325, 1
        %v1524 = vrot.slane %v1326, 1
        %v1525 = vsel %vm1504, %v1523, %v1524
        %v1526 = vrot.slane %v1327, 1
        %v1527 = vrot.slane %v1328, 1
        %v1528 = vsel %vm1504, %v1526, %v1527
        %v1529 = vrot.slane %v1329, 1
        %v1530 = vrot.slane %v1330, 1
        %v1531 = vsel %vm1504, %v1529, %v1530
        %v1532 = vrot.slane %v1331, 1
        %v1533 = vrot.slane %v1332, 1
        %v1534 = vsel %vm1504, %v1532, %v1533
        %v1535 = vrot.slane %v1333, 1
        %v1536 = vrot.slane %v1334, 1
        %v1537 = vsel %vm1504, %v1535, %v1536
        %v1538 = vrot.slane %v1335, 1
        %v1539 = vrot.slane %v1336, 1
        %v1540 = vsel %vm1504, %v1538, %v1539
        %v1541 = vrot.slane %v1337, 1
        %v1542 = vrot.slane %v1338, 1
        %v1543 = vsel %vm1504, %v1541, %v1542
        %v1544 = vrot.slane %v1339, 1
        %v1545 = vrot.slane %v1340, 1
        %v1546 = vsel %vm1504, %v1544, %v1545
        %v1547 = vrot.slane %v1341, 1
        %v1548 = vrot.slane %v1342, 1
        %v1549 = vsel %vm1504, %v1547, %v1548
        %v1550 = vrot.slane %v1343, 1
        %v1551 = vrot.slane %v1344, 1
        %v1552 = vsel %vm1504, %v1550, %v1551
        %v1553 = vrot.slane %v1345, 1
        %v1554 = vrot.slane %v1346, 1
        %v1555 = vsel %vm1504, %v1553, %v1554
        %v1556 = vrot.slane %v1359, 1
        %v1557 = vrot.slane %v1360, 1
        %v1558 = vsel %vm1504, %v1556, %v1557
        %v1577 = vsel %vm1504, %v1506, 0.0
        %v1578 = vsel %vm1504, %v1509, 0.0
        %v1579 = vsel %vm1504, %v1512, 0.0
        %v1580 = vsel %vm1504, %v1515, 0.0
        %v1581 = vsel %vm1504, %v1518, 0.0
        %v1582 = vsel %vm1504, %v1521, 0.0
        %v1583 = vsel %vm1504, %v1524, 0.0
        %v1584 = vsel %vm1504, %v1527, 0.0
        %v1585 = vsel %vm1504, %v1530, 0.0
        %v1586 = vsel %vm1504, %v1533, 0.0
        %v1587 = vsel %vm1504, %v1536, 0.0
        %v1588 = vsel %vm1504, %v1539, 0.0
        %v1589 = vsel %vm1504, %v1542, 0.0
        %v1590 = vsel %vm1504, %v1545, 0.0
        %v1591 = vsel %vm1504, %v1548, 0.0
        %v1592 = vsel %vm1504, %v1551, 0.0
        %v1593 = vsel %vm1504, %v1554, 0.0
        %v1594 = vsel %vm1504, %v1557, 0.0
        %1595 = vrot.lane.b32.xlu0 %v1356, 32
        %v1596 = vpop.permute.xlu0 %1595
        %1597 = vrot.lane.b32.xlu0 %v1357, 32
        %v1598 = vpop.permute.xlu0 %1597
        %1599 = vrot.lane.b32.xlu0 %v1315, 32
        %v1600 = vpop.permute.xlu0 %1599
        %1601 = vrot.lane.b32.xlu0 %v1316, 32
        %v1602 = vpop.permute.xlu0 %1601
        %1603 = vrot.lane.b32.xlu0 %v1317, 32
        %v1604 = vpop.permute.xlu0 %1603
        %1605 = vrot.lane.b32.xlu0 %v1318, 32
        %v1606 = vpop.permute.xlu0 %1605
        %1607 = vrot.lane.b32.xlu0 %v1319, 32
        %v1608 = vpop.permute.xlu0 %1607
        %1609 = vrot.lane.b32.xlu0 %v1320, 32
        %v1610 = vpop.permute.xlu0 %1609
        %1611 = vrot.lane.b32.xlu0 %v1321, 32
        %v1612 = vpop.permute.xlu0 %1611
        %1613 = vrot.lane.b32.xlu0 %v1322, 32
        %v1614 = vpop.permute.xlu0 %1613
        %1615 = vrot.lane.b32.xlu0 %v1323, 32
        %v1616 = vpop.permute.xlu0 %1615
        %1617 = vrot.lane.b32.xlu0 %v1324, 32
        %v1618 = vpop.permute.xlu0 %1617
        %1619 = vrot.lane.b32.xlu0 %v1325, 32
        %v1620 = vpop.permute.xlu0 %1619
        %1621 = vrot.lane.b32.xlu0 %v1326, 32
        %v1622 = vpop.permute.xlu0 %1621
        %1623 = vrot.lane.b32.xlu0 %v1327, 32
        %v1624 = vpop.permute.xlu0 %1623
        %1625 = vrot.lane.b32.xlu0 %v1328, 32
        %v1626 = vpop.permute.xlu0 %1625
        %1627 = vrot.lane.b32.xlu0 %v1329, 32
        %v1628 = vpop.permute.xlu0 %1627
        %1629 = vrot.lane.b32.xlu0 %v1330, 32
        %v1630 = vpop.permute.xlu0 %1629
        %1631 = vrot.lane.b32.xlu0 %v1331, 32
        %v1632 = vpop.permute.xlu0 %1631
        %1633 = vrot.lane.b32.xlu0 %v1332, 32
        %v1634 = vpop.permute.xlu0 %1633
        %1635 = vrot.lane.b32.xlu0 %v1333, 32
        %v1636 = vpop.permute.xlu0 %1635
        %1637 = vrot.lane.b32.xlu0 %v1334, 32
        %v1638 = vpop.permute.xlu0 %1637
        %1639 = vrot.lane.b32.xlu0 %v1335, 32
        %v1640 = vpop.permute.xlu0 %1639
        %1641 = vrot.lane.b32.xlu0 %v1336, 32
        %v1642 = vpop.permute.xlu0 %1641
        %1643 = vrot.lane.b32.xlu0 %v1337, 32
        %v1644 = vpop.permute.xlu0 %1643
        %1645 = vrot.lane.b32.xlu0 %v1338, 32
        %v1646 = vpop.permute.xlu0 %1645
        %1647 = vrot.lane.b32.xlu0 %v1339, 32
        %v1648 = vpop.permute.xlu0 %1647
        %1649 = vrot.lane.b32.xlu0 %v1340, 32
        %v1650 = vpop.permute.xlu0 %1649
        %1651 = vrot.lane.b32.xlu0 %v1341, 32
        %v1652 = vpop.permute.xlu0 %1651
        %1653 = vrot.lane.b32.xlu0 %v1342, 32
        %v1654 = vpop.permute.xlu0 %1653
        %1655 = vrot.lane.b32.xlu0 %v1343, 32
        %v1656 = vpop.permute.xlu0 %1655
        %1657 = vrot.lane.b32.xlu0 %v1344, 32
        %v1658 = vpop.permute.xlu0 %1657
        %1707 = vrot.lane.b32.xlu0 %v1507, 64
        %v1708 = vpop.permute.xlu0 %1707
        %1709 = vrot.lane.b32.xlu0 %v1577, 64
        %v1710 = vpop.permute.xlu0 %1709
        %1711 = vrot.lane.b32.xlu0 %v1510, 64
        %v1712 = vpop.permute.xlu0 %1711
        %1713 = vrot.lane.b32.xlu0 %v1578, 64
        %v1714 = vpop.permute.xlu0 %1713
        %1715 = vrot.lane.b32.xlu0 %v1513, 64
        %v1716 = vpop.permute.xlu0 %1715
        %1717 = vrot.lane.b32.xlu0 %v1579, 64
        %v1718 = vpop.permute.xlu0 %1717
        %1719 = vrot.lane.b32.xlu0 %v1516, 64
        %v1720 = vpop.permute.xlu0 %1719
        %1721 = vrot.lane.b32.xlu0 %v1580, 64
        %v1722 = vpop.permute.xlu0 %1721
        %1723 = vrot.lane.b32.xlu0 %v1519, 64
        %v1724 = vpop.permute.xlu0 %1723
        %1725 = vrot.lane.b32.xlu0 %v1581, 64
        %v1726 = vpop.permute.xlu0 %1725
        %1727 = vrot.lane.b32.xlu0 %v1522, 64
        %v1728 = vpop.permute.xlu0 %1727
        %1729 = vrot.lane.b32.xlu0 %v1582, 64
        %v1730 = vpop.permute.xlu0 %1729
        %1731 = vrot.lane.b32.xlu0 %v1525, 64
        %v1732 = vpop.permute.xlu0 %1731
        %1733 = vrot.lane.b32.xlu0 %v1583, 64
        %v1734 = vpop.permute.xlu0 %1733
        %1735 = vrot.lane.b32.xlu0 %v1528, 64
        %v1736 = vpop.permute.xlu0 %1735
        %1737 = vrot.lane.b32.xlu0 %v1584, 64
        %v1738 = vpop.permute.xlu0 %1737
        %1739 = vrot.lane.b32.xlu0 %v1531, 64
        %v1740 = vpop.permute.xlu0 %1739
        %1741 = vrot.lane.b32.xlu0 %v1585, 64
        %v1742 = vpop.permute.xlu0 %1741
        %1743 = vrot.lane.b32.xlu0 %v1534, 64
        %v1744 = vpop.permute.xlu0 %1743
        %1745 = vrot.lane.b32.xlu0 %v1586, 64
        %v1746 = vpop.permute.xlu0 %1745
        %1747 = vrot.lane.b32.xlu0 %v1537, 64
        %v1748 = vpop.permute.xlu0 %1747
        %1749 = vrot.lane.b32.xlu0 %v1587, 64
        %v1750 = vpop.permute.xlu0 %1749
        %1751 = vrot.lane.b32.xlu0 %v1540, 64
        %v1752 = vpop.permute.xlu0 %1751
        %1753 = vrot.lane.b32.xlu0 %v1588, 64
        %v1754 = vpop.permute.xlu0 %1753
        %1755 = vrot.lane.b32.xlu0 %v1543, 64
        %v1756 = vpop.permute.xlu0 %1755
        %1757 = vrot.lane.b32.xlu0 %v1589, 64
        %v1758 = vpop.permute.xlu0 %1757
        %1759 = vrot.lane.b32.xlu0 %v1546, 64
        %v1760 = vpop.permute.xlu0 %1759
        %1761 = vrot.lane.b32.xlu0 %v1590, 64
        %v1762 = vpop.permute.xlu0 %1761
        %1763 = vrot.lane.b32.xlu0 %v1549, 64
        %v1764 = vpop.permute.xlu0 %1763
        %1765 = vrot.lane.b32.xlu0 %v1591, 64
        %v1766 = vpop.permute.xlu0 %1765
        %1767 = vrot.lane.b32.xlu0 %v1552, 64
        %v1768 = vpop.permute.xlu0 %1767
        %1769 = vrot.lane.b32.xlu0 %v1592, 64
        %v1770 = vpop.permute.xlu0 %1769
        %1819 = vrot.lane.b32.xlu0 %v1487, 96
        %v1820 = vpop.permute.xlu0 %1819
        %1821 = vrot.lane.b32.xlu0 %v1403, 96
        %v1822 = vpop.permute.xlu0 %1821
        %1823 = vrot.lane.b32.xlu0 %v1488, 96
        %v1824 = vpop.permute.xlu0 %1823
        %1825 = vrot.lane.b32.xlu0 %v1406, 96
        %v1826 = vpop.permute.xlu0 %1825
        %1827 = vrot.lane.b32.xlu0 %v1489, 96
        %v1828 = vpop.permute.xlu0 %1827
        %1829 = vrot.lane.b32.xlu0 %v1409, 96
        %v1830 = vpop.permute.xlu0 %1829
        %1831 = vrot.lane.b32.xlu0 %v1490, 96
        %v1832 = vpop.permute.xlu0 %1831
        %1833 = vrot.lane.b32.xlu0 %v1412, 96
        %v1834 = vpop.permute.xlu0 %1833
        %1835 = vrot.lane.b32.xlu0 %v1491, 96
        %v1836 = vpop.permute.xlu0 %1835
        %1837 = vrot.lane.b32.xlu0 %v1415, 96
        %v1838 = vpop.permute.xlu0 %1837
        %1839 = vrot.lane.b32.xlu0 %v1492, 96
        %v1840 = vpop.permute.xlu0 %1839
        %1841 = vrot.lane.b32.xlu0 %v1418, 96
        %v1842 = vpop.permute.xlu0 %1841
        %1843 = vrot.lane.b32.xlu0 %v1493, 96
        %v1844 = vpop.permute.xlu0 %1843
        %1845 = vrot.lane.b32.xlu0 %v1421, 96
        %v1846 = vpop.permute.xlu0 %1845
        %1847 = vrot.lane.b32.xlu0 %v1494, 96
        %v1848 = vpop.permute.xlu0 %1847
        %1849 = vrot.lane.b32.xlu0 %v1424, 96
        %v1850 = vpop.permute.xlu0 %1849
        %1851 = vrot.lane.b32.xlu0 %v1495, 96
        %v1852 = vpop.permute.xlu0 %1851
        %1853 = vrot.lane.b32.xlu0 %v1427, 96
        %v1854 = vpop.permute.xlu0 %1853
        %1855 = vrot.lane.b32.xlu0 %v1496, 96
        %v1856 = vpop.permute.xlu0 %1855
        %1857 = vrot.lane.b32.xlu0 %v1430, 96
        %v1858 = vpop.permute.xlu0 %1857
        %1859 = vrot.lane.b32.xlu0 %v1497, 96
        %v1860 = vpop.permute.xlu0 %1859
        %1861 = vrot.lane.b32.xlu0 %v1433, 96
        %v1862 = vpop.permute.xlu0 %1861
        %1863 = vrot.lane.b32.xlu0 %v1498, 96
        %v1864 = vpop.permute.xlu0 %1863
        %1865 = vrot.lane.b32.xlu0 %v1436, 96
        %v1866 = vpop.permute.xlu0 %1865
        %1867 = vrot.lane.b32.xlu0 %v1499, 96
        %v1868 = vpop.permute.xlu0 %1867
        %1869 = vrot.lane.b32.xlu0 %v1439, 96
        %v1870 = vpop.permute.xlu0 %1869
        %1871 = vrot.lane.b32.xlu0 %v1500, 96
        %v1872 = vpop.permute.xlu0 %1871
        %1873 = vrot.lane.b32.xlu0 %v1442, 96
        %v1874 = vpop.permute.xlu0 %1873
        %1875 = vrot.lane.b32.xlu0 %v1501, 96
        %v1876 = vpop.permute.xlu0 %1875
        %1877 = vrot.lane.b32.xlu0 %v1445, 96
        %v1878 = vpop.permute.xlu0 %1877
        %1879 = vrot.lane.b32.xlu0 %v1502, 96
        %v1880 = vpop.permute.xlu0 %1879
        %1881 = vrot.lane.b32.xlu0 %v1448, 96
        %v1882 = vpop.permute.xlu0 %1881
        %1916 = vrot.lane.b32.xlu0 %v1510, 32
        %v1917 = vpop.permute.xlu0 %1916
        %1918 = vrot.lane.b32.xlu0 %v1578, 32
        %v1919 = vpop.permute.xlu0 %1918
        %1920 = vrot.lane.b32.xlu0 %v1513, 32
        %v1921 = vpop.permute.xlu0 %1920
        %1922 = vrot.lane.b32.xlu0 %v1579, 32
        %v1923 = vpop.permute.xlu0 %1922
        %1924 = vrot.lane.b32.xlu0 %v1516, 32
        %v1925 = vpop.permute.xlu0 %1924
        %1926 = vrot.lane.b32.xlu0 %v1580, 32
        %v1927 = vpop.permute.xlu0 %1926
        %1928 = vrot.lane.b32.xlu0 %v1519, 32
        %v1929 = vpop.permute.xlu0 %1928
        %1930 = vrot.lane.b32.xlu0 %v1581, 32
        %v1931 = vpop.permute.xlu0 %1930
        %1932 = vrot.lane.b32.xlu0 %v1522, 32
        %v1933 = vpop.permute.xlu0 %1932
        %1934 = vrot.lane.b32.xlu0 %v1582, 32
        %v1935 = vpop.permute.xlu0 %1934
        %1936 = vrot.lane.b32.xlu0 %v1525, 32
        %v1937 = vpop.permute.xlu0 %1936
        %1938 = vrot.lane.b32.xlu0 %v1583, 32
        %v1939 = vpop.permute.xlu0 %1938
        %1940 = vrot.lane.b32.xlu0 %v1528, 32
        %v1941 = vpop.permute.xlu0 %1940
        %1942 = vrot.lane.b32.xlu0 %v1584, 32
        %v1943 = vpop.permute.xlu0 %1942
        %1944 = vrot.lane.b32.xlu0 %v1531, 32
        %v1945 = vpop.permute.xlu0 %1944
        %1946 = vrot.lane.b32.xlu0 %v1585, 32
        %v1947 = vpop.permute.xlu0 %1946
        %1948 = vrot.lane.b32.xlu0 %v1534, 32
        %v1949 = vpop.permute.xlu0 %1948
        %1950 = vrot.lane.b32.xlu0 %v1586, 32
        %v1951 = vpop.permute.xlu0 %1950
        %1952 = vrot.lane.b32.xlu0 %v1537, 32
        %v1953 = vpop.permute.xlu0 %1952
        %1954 = vrot.lane.b32.xlu0 %v1587, 32
        %v1955 = vpop.permute.xlu0 %1954
        %1956 = vrot.lane.b32.xlu0 %v1540, 32
        %v1957 = vpop.permute.xlu0 %1956
        %1958 = vrot.lane.b32.xlu0 %v1588, 32
        %v1959 = vpop.permute.xlu0 %1958
        %1960 = vrot.lane.b32.xlu0 %v1543, 32
        %v1961 = vpop.permute.xlu0 %1960
        %1962 = vrot.lane.b32.xlu0 %v1589, 32
        %v1963 = vpop.permute.xlu0 %1962
        %1964 = vrot.lane.b32.xlu0 %v1546, 32
        %v1965 = vpop.permute.xlu0 %1964
        %1966 = vrot.lane.b32.xlu0 %v1590, 32
        %v1967 = vpop.permute.xlu0 %1966
        %1968 = vrot.lane.b32.xlu0 %v1549, 32
        %v1969 = vpop.permute.xlu0 %1968
        %1970 = vrot.lane.b32.xlu0 %v1591, 32
        %v1971 = vpop.permute.xlu0 %1970
        %1972 = vrot.lane.b32.xlu0 %v1552, 32
        %v1973 = vpop.permute.xlu0 %1972
        %1974 = vrot.lane.b32.xlu0 %v1592, 32
        %v1975 = vpop.permute.xlu0 %1974
        %1976 = vrot.lane.b32.xlu0 %v1555, 32
        %v1977 = vpop.permute.xlu0 %1976
        %1978 = vrot.lane.b32.xlu0 %v1593, 32
        %v1979 = vpop.permute.xlu0 %1978
        %2013 = vrot.lane.b32.xlu0 %v1488, 64
        %v2014 = vpop.permute.xlu0 %2013
        %2015 = vrot.lane.b32.xlu0 %v1406, 64
        %v2016 = vpop.permute.xlu0 %2015
        %2017 = vrot.lane.b32.xlu0 %v1489, 64
        %v2018 = vpop.permute.xlu0 %2017
        %2019 = vrot.lane.b32.xlu0 %v1409, 64
        %v2020 = vpop.permute.xlu0 %2019
        %2021 = vrot.lane.b32.xlu0 %v1490, 64
        %v2022 = vpop.permute.xlu0 %2021
        %2023 = vrot.lane.b32.xlu0 %v1412, 64
        %v2024 = vpop.permute.xlu0 %2023
        %2025 = vrot.lane.b32.xlu0 %v1491, 64
        %v2026 = vpop.permute.xlu0 %2025
        %2027 = vrot.lane.b32.xlu0 %v1415, 64
        %v2028 = vpop.permute.xlu0 %2027
        %2029 = vrot.lane.b32.xlu0 %v1492, 64
        %v2030 = vpop.permute.xlu0 %2029
        %2031 = vrot.lane.b32.xlu0 %v1418, 64
        %v2032 = vpop.permute.xlu0 %2031
        %2033 = vrot.lane.b32.xlu0 %v1493, 64
        %v2034 = vpop.permute.xlu0 %2033
        %2035 = vrot.lane.b32.xlu0 %v1421, 64
        %v2036 = vpop.permute.xlu0 %2035
        %2037 = vrot.lane.b32.xlu0 %v1494, 64
        %v2038 = vpop.permute.xlu0 %2037
        %2039 = vrot.lane.b32.xlu0 %v1424, 64
        %v2040 = vpop.permute.xlu0 %2039
        %2041 = vrot.lane.b32.xlu0 %v1495, 64
        %v2042 = vpop.permute.xlu0 %2041
        %2043 = vrot.lane.b32.xlu0 %v1427, 64
        %v2044 = vpop.permute.xlu0 %2043
        %2045 = vrot.lane.b32.xlu0 %v1496, 64
        %v2046 = vpop.permute.xlu0 %2045
        %2047 = vrot.lane.b32.xlu0 %v1430, 64
        %v2048 = vpop.permute.xlu0 %2047
        %2049 = vrot.lane.b32.xlu0 %v1497, 64
        %v2050 = vpop.permute.xlu0 %2049
        %2051 = vrot.lane.b32.xlu0 %v1433, 64
        %v2052 = vpop.permute.xlu0 %2051
        %2053 = vrot.lane.b32.xlu0 %v1498, 64
        %v2054 = vpop.permute.xlu0 %2053
        %2055 = vrot.lane.b32.xlu0 %v1436, 64
        %v2056 = vpop.permute.xlu0 %2055
        %2057 = vrot.lane.b32.xlu0 %v1499, 64
        %v2058 = vpop.permute.xlu0 %2057
        %2059 = vrot.lane.b32.xlu0 %v1439, 64
        %v2060 = vpop.permute.xlu0 %2059
        %2061 = vrot.lane.b32.xlu0 %v1500, 64
        %v2062 = vpop.permute.xlu0 %2061
        %2063 = vrot.lane.b32.xlu0 %v1442, 64
        %v2064 = vpop.permute.xlu0 %2063
        %2065 = vrot.lane.b32.xlu0 %v1501, 64
        %v2066 = vpop.permute.xlu0 %2065
        %2067 = vrot.lane.b32.xlu0 %v1445, 64
        %v2068 = vpop.permute.xlu0 %2067
        %2069 = vrot.lane.b32.xlu0 %v1502, 64
        %v2070 = vpop.permute.xlu0 %2069
        %2071 = vrot.lane.b32.xlu0 %v1448, 64
        %v2072 = vpop.permute.xlu0 %2071
        %2073 = vrot.lane.b32.xlu0 %v1503, 64
        %v2074 = vpop.permute.xlu0 %2073
        %2075 = vrot.lane.b32.xlu0 %v1451, 64
        %v2076 = vpop.permute.xlu0 %2075
        %2109 = vrot.lane.b32.xlu0 %v1317, 96
        %v2110 = vpop.permute.xlu0 %2109
        %2111 = vrot.lane.b32.xlu0 %v1318, 96
        %v2112 = vpop.permute.xlu0 %2111
        %2113 = vrot.lane.b32.xlu0 %v1319, 96
        %v2114 = vpop.permute.xlu0 %2113
        %2115 = vrot.lane.b32.xlu0 %v1320, 96
        %v2116 = vpop.permute.xlu0 %2115
        %2117 = vrot.lane.b32.xlu0 %v1321, 96
        %v2118 = vpop.permute.xlu0 %2117
        %2119 = vrot.lane.b32.xlu0 %v1322, 96
        %v2120 = vpop.permute.xlu0 %2119
        %2121 = vrot.lane.b32.xlu0 %v1323, 96
        %v2122 = vpop.permute.xlu0 %2121
        %2123 = vrot.lane.b32.xlu0 %v1324, 96
        %v2124 = vpop.permute.xlu0 %2123
        %2125 = vrot.lane.b32.xlu0 %v1325, 96
        %v2126 = vpop.permute.xlu0 %2125
        %2127 = vrot.lane.b32.xlu0 %v1326, 96
        %v2128 = vpop.permute.xlu0 %2127
        %2129 = vrot.lane.b32.xlu0 %v1327, 96
        %v2130 = vpop.permute.xlu0 %2129
        %2131 = vrot.lane.b32.xlu0 %v1328, 96
        %v2132 = vpop.permute.xlu0 %2131
        %2133 = vrot.lane.b32.xlu0 %v1329, 96
        %v2134 = vpop.permute.xlu0 %2133
        %2135 = vrot.lane.b32.xlu0 %v1330, 96
        %v2136 = vpop.permute.xlu0 %2135
        %2137 = vrot.lane.b32.xlu0 %v1331, 96
        %v2138 = vpop.permute.xlu0 %2137
        %2139 = vrot.lane.b32.xlu0 %v1332, 96
        %v2140 = vpop.permute.xlu0 %2139
        %2141 = vrot.lane.b32.xlu0 %v1333, 96
        %v2142 = vpop.permute.xlu0 %2141
        %2143 = vrot.lane.b32.xlu0 %v1334, 96
        %v2144 = vpop.permute.xlu0 %2143
        %2145 = vrot.lane.b32.xlu0 %v1335, 96
        %v2146 = vpop.permute.xlu0 %2145
        %2147 = vrot.lane.b32.xlu0 %v1336, 96
        %v2148 = vpop.permute.xlu0 %2147
        %2149 = vrot.lane.b32.xlu0 %v1337, 96
        %v2150 = vpop.permute.xlu0 %2149
        %2151 = vrot.lane.b32.xlu0 %v1338, 96
        %v2152 = vpop.permute.xlu0 %2151
        %2153 = vrot.lane.b32.xlu0 %v1339, 96
        %v2154 = vpop.permute.xlu0 %2153
        %2155 = vrot.lane.b32.xlu0 %v1340, 96
        %v2156 = vpop.permute.xlu0 %2155
        %2157 = vrot.lane.b32.xlu0 %v1341, 96
        %v2158 = vpop.permute.xlu0 %2157
        %2159 = vrot.lane.b32.xlu0 %v1342, 96
        %v2160 = vpop.permute.xlu0 %2159
        %2161 = vrot.lane.b32.xlu0 %v1343, 96
        %v2162 = vpop.permute.xlu0 %2161
        %2163 = vrot.lane.b32.xlu0 %v1344, 96
        %v2164 = vpop.permute.xlu0 %2163
        %2165 = vrot.lane.b32.xlu0 %v1345, 96
        %v2166 = vpop.permute.xlu0 %2165
        %2167 = vrot.lane.b32.xlu0 %v1346, 96
        %v2168 = vpop.permute.xlu0 %2167
        %2169 = vrot.lane.b32.xlu0 %v1359, 96
        %v2170 = vpop.permute.xlu0 %2169
        %2171 = vrot.lane.b32.xlu0 %v1360, 96
        %v2172 = vpop.permute.xlu0 %2171
        %vm2205 = vcmask 261120
        %v2206 = vsel %vm2205, %v1486, %v1596
        %v2207 = vsel %vm2205, %v1400, %v1598
        %v2208 = vsel %vm2205, %v1487, %v1600
        %v2209 = vsel %vm2205, %v1403, %v1602
        %v2210 = vsel %vm2205, %v1488, %v1604
        %v2211 = vsel %vm2205, %v1406, %v1606
        %v2212 = vsel %vm2205, %v1489, %v1608
        %v2213 = vsel %vm2205, %v1409, %v1610
        %v2214 = vsel %vm2205, %v1490, %v1612
        %v2215 = vsel %vm2205, %v1412, %v1614
        %v2216 = vsel %vm2205, %v1491, %v1616
        %v2217 = vsel %vm2205, %v1415, %v1618
        %v2218 = vsel %vm2205, %v1492, %v1620
        %v2219 = vsel %vm2205, %v1418, %v1622
        %v2220 = vsel %vm2205, %v1493, %v1624
        %v2221 = vsel %vm2205, %v1421, %v1626
        %v2222 = vsel %vm2205, %v1494, %v1628
        %v2223 = vsel %vm2205, %v1424, %v1630
        %v2224 = vsel %vm2205, %v1495, %v1632
        %v2225 = vsel %vm2205, %v1427, %v1634
        %v2226 = vsel %vm2205, %v1496, %v1636
        %v2227 = vsel %vm2205, %v1430, %v1638
        %v2228 = vsel %vm2205, %v1497, %v1640
        %v2229 = vsel %vm2205, %v1433, %v1642
        %v2230 = vsel %vm2205, %v1498, %v1644
        %v2231 = vsel %vm2205, %v1436, %v1646
        %v2232 = vsel %vm2205, %v1499, %v1648
        %v2233 = vsel %vm2205, %v1439, %v1650
        %v2234 = vsel %vm2205, %v1500, %v1652
        %v2235 = vsel %vm2205, %v1442, %v1654
        %v2236 = vsel %vm2205, %v1501, %v1656
        %v2237 = vsel %vm2205, %v1445, %v1658
        %vm2238 = vcmask 523264
        %v2239 = vsel %vm2238, %v2206, %v1708
        %v2240 = vsel %vm2238, %v2207, %v1710
        %v2241 = vsel %vm2238, %v2208, %v1712
        %v2242 = vsel %vm2238, %v2209, %v1714
        %v2243 = vsel %vm2238, %v2210, %v1716
        %v2244 = vsel %vm2238, %v2211, %v1718
        %v2245 = vsel %vm2238, %v2212, %v1720
        %v2246 = vsel %vm2238, %v2213, %v1722
        %v2247 = vsel %vm2238, %v2214, %v1724
        %v2248 = vsel %vm2238, %v2215, %v1726
        %v2249 = vsel %vm2238, %v2216, %v1728
        %v2250 = vsel %vm2238, %v2217, %v1730
        %v2251 = vsel %vm2238, %v2218, %v1732
        %v2252 = vsel %vm2238, %v2219, %v1734
        %v2253 = vsel %vm2238, %v2220, %v1736
        %v2254 = vsel %vm2238, %v2221, %v1738
        %v2255 = vsel %vm2238, %v2222, %v1740
        %v2256 = vsel %vm2238, %v2223, %v1742
        %v2257 = vsel %vm2238, %v2224, %v1744
        %v2258 = vsel %vm2238, %v2225, %v1746
        %v2259 = vsel %vm2238, %v2226, %v1748
        %v2260 = vsel %vm2238, %v2227, %v1750
        %v2261 = vsel %vm2238, %v2228, %v1752
        %v2262 = vsel %vm2238, %v2229, %v1754
        %v2263 = vsel %vm2238, %v2230, %v1756
        %v2264 = vsel %vm2238, %v2231, %v1758
        %v2265 = vsel %vm2238, %v2232, %v1760
        %v2266 = vsel %vm2238, %v2233, %v1762
        %v2267 = vsel %vm2238, %v2234, %v1764
        %v2268 = vsel %vm2238, %v2235, %v1766
        %v2269 = vsel %vm2238, %v2236, %v1768
        %v2270 = vsel %vm2238, %v2237, %v1770
        %vm2271 = vcmask 785408
        %v2272 = vsel %vm2271, %v2239, %v1820
        %v2273 = vsel %vm2271, %v2240, %v1822
        %v2274 = vsel %vm2271, %v2241, %v1824
        %v2275 = vsel %vm2271, %v2242, %v1826
        %v2276 = vsel %vm2271, %v2243, %v1828
        %v2277 = vsel %vm2271, %v2244, %v1830
        %v2278 = vsel %vm2271, %v2245, %v1832
        %v2279 = vsel %vm2271, %v2246, %v1834
        %v2280 = vsel %vm2271, %v2247, %v1836
        %v2281 = vsel %vm2271, %v2248, %v1838
        %v2282 = vsel %vm2271, %v2249, %v1840
        %v2283 = vsel %vm2271, %v2250, %v1842
        %v2284 = vsel %vm2271, %v2251, %v1844
        %v2285 = vsel %vm2271, %v2252, %v1846
        %v2286 = vsel %vm2271, %v2253, %v1848
        %v2287 = vsel %vm2271, %v2254, %v1850
        %v2288 = vsel %vm2271, %v2255, %v1852
        %v2289 = vsel %vm2271, %v2256, %v1854
        %v2290 = vsel %vm2271, %v2257, %v1856
        %v2291 = vsel %vm2271, %v2258, %v1858
        %v2292 = vsel %vm2271, %v2259, %v1860
        %v2293 = vsel %vm2271, %v2260, %v1862
        %v2294 = vsel %vm2271, %v2261, %v1864
        %v2295 = vsel %vm2271, %v2262, %v1866
        %v2296 = vsel %vm2271, %v2263, %v1868
        %v2297 = vsel %vm2271, %v2264, %v1870
        %v2298 = vsel %vm2271, %v2265, %v1872
        %v2299 = vsel %vm2271, %v2266, %v1874
        %v2300 = vsel %vm2271, %v2267, %v1876
        %v2301 = vsel %vm2271, %v2268, %v1878
        %v2302 = vsel %vm2271, %v2269, %v1880
        %v2303 = vsel %vm2271, %v2270, %v1882
        %v2304 = vsel %vm2205, %v1315, %v1917
        %v2305 = vsel %vm2205, %v1316, %v1919
        %v2306 = vsel %vm2205, %v1317, %v1921
        %v2307 = vsel %vm2205, %v1318, %v1923
        %v2308 = vsel %vm2205, %v1319, %v1925
        %v2309 = vsel %vm2205, %v1320, %v1927
        %v2310 = vsel %vm2205, %v1321, %v1929
        %v2311 = vsel %vm2205, %v1322, %v1931
        %v2312 = vsel %vm2205, %v1323, %v1933
        %v2313 = vsel %vm2205, %v1324, %v1935
        %v2314 = vsel %vm2205, %v1325, %v1937
        %v2315 = vsel %vm2205, %v1326, %v1939
        %v2316 = vsel %vm2205, %v1327, %v1941
        %v2317 = vsel %vm2205, %v1328, %v1943
        %v2318 = vsel %vm2205, %v1329, %v1945
        %v2319 = vsel %vm2205, %v1330, %v1947
        %v2320 = vsel %vm2205, %v1331, %v1949
        %v2321 = vsel %vm2205, %v1332, %v1951
        %v2322 = vsel %vm2205, %v1333, %v1953
        %v2323 = vsel %vm2205, %v1334, %v1955
        %v2324 = vsel %vm2205, %v1335, %v1957
        %v2325 = vsel %vm2205, %v1336, %v1959
        %v2326 = vsel %vm2205, %v1337, %v1961
        %v2327 = vsel %vm2205, %v1338, %v1963
        %v2328 = vsel %vm2205, %v1339, %v1965
        %v2329 = vsel %vm2205, %v1340, %v1967
        %v2330 = vsel %vm2205, %v1341, %v1969
        %v2331 = vsel %vm2205, %v1342, %v1971
        %v2332 = vsel %vm2205, %v1343, %v1973
        %v2333 = vsel %vm2205, %v1344, %v1975
        %v2334 = vsel %vm2205, %v1345, %v1977
        %v2335 = vsel %vm2205, %v1346, %v1979
        %v2336 = vsel %vm2238, %v2304, %v2014
        %v2337 = vsel %vm2238, %v2305, %v2016
        %v2338 = vsel %vm2238, %v2306, %v2018
        %v2339 = vsel %vm2238, %v2307, %v2020
        %v2340 = vsel %vm2238, %v2308, %v2022
        %v2341 = vsel %vm2238, %v2309, %v2024
        %v2342 = vsel %vm2238, %v2310, %v2026
        %v2343 = vsel %vm2238, %v2311, %v2028
        %v2344 = vsel %vm2238, %v2312, %v2030
        %v2345 = vsel %vm2238, %v2313, %v2032
        %v2346 = vsel %vm2238, %v2314, %v2034
        %v2347 = vsel %vm2238, %v2315, %v2036
        %v2348 = vsel %vm2238, %v2316, %v2038
        %v2349 = vsel %vm2238, %v2317, %v2040
        %v2350 = vsel %vm2238, %v2318, %v2042
        %v2351 = vsel %vm2238, %v2319, %v2044
        %v2352 = vsel %vm2238, %v2320, %v2046
        %v2353 = vsel %vm2238, %v2321, %v2048
        %v2354 = vsel %vm2238, %v2322, %v2050
        %v2355 = vsel %vm2238, %v2323, %v2052
        %v2356 = vsel %vm2238, %v2324, %v2054
        %v2357 = vsel %vm2238, %v2325, %v2056
        %v2358 = vsel %vm2238, %v2326, %v2058
        %v2359 = vsel %vm2238, %v2327, %v2060
        %v2360 = vsel %vm2238, %v2328, %v2062
        %v2361 = vsel %vm2238, %v2329, %v2064
        %v2362 = vsel %vm2238, %v2330, %v2066
        %v2363 = vsel %vm2238, %v2331, %v2068
        %v2364 = vsel %vm2238, %v2332, %v2070
        %v2365 = vsel %vm2238, %v2333, %v2072
        %v2366 = vsel %vm2238, %v2334, %v2074
        %v2367 = vsel %vm2238, %v2335, %v2076
        %v2368 = vsel %vm2271, %v2336, %v2110
        %v2369 = vsel %vm2271, %v2337, %v2112
        %v2370 = vsel %vm2271, %v2338, %v2114
        %v2371 = vsel %vm2271, %v2339, %v2116
        %v2372 = vsel %vm2271, %v2340, %v2118
        %v2373 = vsel %vm2271, %v2341, %v2120
        %v2374 = vsel %vm2271, %v2342, %v2122
        %v2375 = vsel %vm2271, %v2343, %v2124
        %v2376 = vsel %vm2271, %v2344, %v2126
        %v2377 = vsel %vm2271, %v2345, %v2128
        %v2378 = vsel %vm2271, %v2346, %v2130
        %v2379 = vsel %vm2271, %v2347, %v2132
        %v2380 = vsel %vm2271, %v2348, %v2134
        %v2381 = vsel %vm2271, %v2349, %v2136
        %v2382 = vsel %vm2271, %v2350, %v2138
        %v2383 = vsel %vm2271, %v2351, %v2140
        %v2384 = vsel %vm2271, %v2352, %v2142
        %v2385 = vsel %vm2271, %v2353, %v2144
        %v2386 = vsel %vm2271, %v2354, %v2146
        %v2387 = vsel %vm2271, %v2355, %v2148
        %v2388 = vsel %vm2271, %v2356, %v2150
        %v2389 = vsel %vm2271, %v2357, %v2152
        %v2390 = vsel %vm2271, %v2358, %v2154
        %v2391 = vsel %vm2271, %v2359, %v2156
        %v2392 = vsel %vm2271, %v2360, %v2158
        %v2393 = vsel %vm2271, %v2361, %v2160
        %v2394 = vsel %vm2271, %v2362, %v2162
        %v2395 = vsel %vm2271, %v2363, %v2164
        %v2396 = vsel %vm2271, %v2364, %v2166
        %v2397 = vsel %vm2271, %v2365, %v2168
        %v2398 = vsel %vm2271, %v2366, %v2170
        %v2399 = vsel %vm2271, %v2367, %v2172
        %v2400 = vld [vmem:[#allocation8] sm:$0xff]
        %v2401 = vld [vmem:[#allocation8 + $0x8] sm:$0xff]
        %v2402 = vld [vmem:[#allocation8 + $0x10] sm:$0xff]
        %v2403 = vld [vmem:[#allocation8 + $0x18] sm:$0xff]
        %v2404 = vld [vmem:[#allocation8 + $0x20] sm:$0xff]
        %v2405 = vld [vmem:[#allocation8 + $0x28] sm:$0xff]
        %v2406 = vld [vmem:[#allocation8 + $0x30] sm:$0xff]
        %v2407 = vld [vmem:[#allocation8 + $0x38] sm:$0xff]
        %v2408 = vld [vmem:[#allocation8 + $0x40] sm:$0xff]
        %v2409 = vld [vmem:[#allocation8 + $0x48] sm:$0xff]
        %v2410 = vld [vmem:[#allocation8 + $0x50] sm:$0xff]
        %v2411 = vld [vmem:[#allocation8 + $0x58] sm:$0xff]
        %v2412 = vld [vmem:[#allocation8 + $0x60] sm:$0xff]
        %v2413 = vld [vmem:[#allocation8 + $0x68] sm:$0xff]
        %v2414 = vld [vmem:[#allocation8 + $0x70] sm:$0xff]
        %v2415 = vld [vmem:[#allocation8 + $0x78] sm:$0xff]
        %v2416 = vld [vmem:[#allocation8 + $0x80] sm:$0xff]
        %v2417 = vld [vmem:[#allocation8 + $0x88] sm:$0xff]
        %v2418 = vld [vmem:[#allocation8 + $0x90] sm:$0xff]
        %v2419 = vld [vmem:[#allocation8 + $0x98] sm:$0xff]
        %v2420 = vld [vmem:[#allocation8 + $0xa0] sm:$0xff]
        %v2421 = vld [vmem:[#allocation8 + $0xa8] sm:$0xff]
        %v2422 = vld [vmem:[#allocation8 + $0xb0] sm:$0xff]
        %v2423 = vld [vmem:[#allocation8 + $0xb8] sm:$0xff]
        %v2424 = vld [vmem:[#allocation8 + $0xc0] sm:$0xff]
        %v2425 = vld [vmem:[#allocation8 + $0xc8] sm:$0xff]
        %v2426 = vld [vmem:[#allocation8 + $0xd0] sm:$0xff]
        %v2427 = vld [vmem:[#allocation8 + $0xd8] sm:$0xff]
        %v2428 = vld [vmem:[#allocation8 + $0xe0] sm:$0xff]
        %v2429 = vld [vmem:[#allocation8 + $0xe8] sm:$0xff]
        %v2430 = vld [vmem:[#allocation8 + $0xf0] sm:$0xff]
        %v2431 = vld [vmem:[#allocation8 + $0xf8] sm:$0xff]
        %v2432 = vld [vmem:[#allocation8 + $0x100] sm:$0xff]
        %v2433 = vld [vmem:[#allocation8 + $0x108] sm:$0xff]
        %v2434 = vld [vmem:[#allocation8 + $0x110] sm:$0xff]
        %v2435 = vld [vmem:[#allocation8 + $0x118] sm:$0xff]
        %v2436 = vld [vmem:[#allocation10] sm:$0x1]
        %v2438 = vlaneseq
        %v2439 = vshrl.u32 %v2438, 7
        %v2440 = vsub.s32 0, %v2439
        %v2441 = vrot.slane %v2436, %v2440
        %v2443 = vsel %vm2205, %v1513, 0
        %v2445 = vsel %vm2205, %v1579, 0
        %v2447 = vsel %vm2205, %v1516, 0
        %v2449 = vsel %vm2205, %v1580, 0
        %v2451 = vsel %vm2205, %v1519, 0
        %v2453 = vsel %vm2205, %v1581, 0
        %v2455 = vsel %vm2205, %v1522, 0
        %v2457 = vsel %vm2205, %v1582, 0
        %v2459 = vsel %vm2205, %v1525, 0
        %v2461 = vsel %vm2205, %v1583, 0
        %v2463 = vsel %vm2205, %v1528, 0
        %v2465 = vsel %vm2205, %v1584, 0
        %v2467 = vsel %vm2205, %v1531, 0
        %v2469 = vsel %vm2205, %v1585, 0
        %v2471 = vsel %vm2205, %v1534, 0
        %v2473 = vsel %vm2205, %v1586, 0
        %v2475 = vsel %vm2205, %v1537, 0
        %v2477 = vsel %vm2205, %v1587, 0
        %v2479 = vsel %vm2205, %v1540, 0
        %v2481 = vsel %vm2205, %v1588, 0
        %v2483 = vsel %vm2205, %v1543, 0
        %v2485 = vsel %vm2205, %v1589, 0
        %v2487 = vsel %vm2205, %v1546, 0
        %v2489 = vsel %vm2205, %v1590, 0
        %v2491 = vsel %vm2205, %v1549, 0
        %v2493 = vsel %vm2205, %v1591, 0
        %v2495 = vsel %vm2205, %v1552, 0
        %v2497 = vsel %vm2205, %v1592, 0
        %v2499 = vsel %vm2205, %v1555, 0
        %v2501 = vsel %vm2205, %v1593, 0
        %v2503 = vsel %vm2205, %v1558, 0
        %v2506 = vsel %vm2205, %v1594, 0
        %2508 = vmatprep.subr.mxu0 0.0
        %2509 = vmatpush1.msra.mxu0 %v2400
        %2510 = vmatprep.subr.mxu0 0.0
        %2511 = vmatpush1.msra.mxu0 %v2401
        %2512 = vmatprep.subr.mxu0 0.0
        %2513 = vmatpush1.msra.mxu0 %v2402
        %2514 = vmatprep.subr.mxu0 0.0
        %2515 = vmatpush1.msra.mxu0 %v2403
        %2516 = vmatprep.subr.mxu0 0.0
        %2517 = vmatpush1.msra.mxu0 %v2404
        %2518 = vmatprep.subr.mxu0 0.0
        %2519 = vmatpush1.msra.mxu0 %v2405
        %2520 = vmatprep.subr.mxu0 0.0
        %2521 = vmatpush1.msra.mxu0 %v2406
        %2522 = vmatprep.subr.mxu0 0.0
        %2523 = vmatpush1.msra.mxu0 %v2407
        %2524 = vmatprep.subr.mxu0 0.0
        %2525 = vmatpush1.msra.mxu0 %v2408
        %2526 = vmatprep.subr.mxu0 0.0
        %2527 = vmatpush1.msra.mxu0 %v2409
        %2528 = vmatprep.subr.mxu0 0.0
        %2529 = vmatpush1.msra.mxu0 %v2410
        %2530 = vmatprep.subr.mxu0 0.0
        %2531 = vmatpush1.msra.mxu0 %v2411
        %2532 = vmatprep.subr.mxu0 0.0
        %2533 = vmatpush1.msra.mxu0 %v2412
        %2534 = vmatprep.subr.mxu0 0.0
        %2535 = vmatpush1.msra.mxu0 %v2413
        %2536 = vmatprep.subr.mxu0 0.0
        %2537 = vmatpush1.msra.mxu0 %v2414
        %2538 = vmatprep.subr.mxu0 0.0
        %2539 = vmatpush1.msra.mxu0 %v2415
        %2540 = vmatprep.subr.mxu0 0.0
        %2541 = vmatpush1.msra.mxu0 %v2416
        %2542 = vmatprep.subr.mxu0 0.0
        %2543 = vmatpush1.msra.mxu0 %v2417
        %2544 = vmatprep.subr.mxu0 0.0
        %2545 = vmatpush1.msra.mxu0 %v2418
        %2546 = vmatprep.subr.mxu0 0.0
        %2547 = vmatpush1.msra.mxu0 %v2419
        %2548 = vmatprep.subr.mxu0 0.0
        %2549 = vmatpush1.msra.mxu0 %v2420
        %2550 = vmatprep.subr.mxu0 0.0
        %2551 = vmatpush1.msra.mxu0 %v2421
        %2552 = vmatprep.subr.mxu0 0.0
        %2553 = vmatpush1.msra.mxu0 %v2422
        %2554 = vmatprep.subr.mxu0 0.0
        %2555 = vmatpush1.msra.mxu0 %v2423
        %2556 = vmatprep.subr.mxu0 0.0
        %2557 = vmatpush1.msra.mxu0 %v2424
        %2558 = vmatprep.subr.mxu0 0.0
        %2559 = vmatpush1.msra.mxu0 %v2425
        %2560 = vmatprep.subr.mxu0 0.0
        %2561 = vmatpush1.msra.mxu0 %v2426
        %2562 = vmatprep.subr.mxu0 0.0
        %2563 = vmatpush1.msra.mxu0 %v2427
        %2564 = vmatprep.subr.mxu0 0.0
        %2565 = vmatpush1.msra.mxu0 %v2428
        %2566 = vmatprep.subr.mxu0 0.0
        %2567 = vmatpush1.msra.mxu0 %v2429
        %2568 = vmatprep.subr.mxu0 0.0
        %2569 = vmatpush1.msra.mxu0 %v2430
        %2570 = vmatprep.subr.mxu0 0.0
        %2571 = vmatpush1.msra.mxu0 %v2431
        %2572 = vmatprep.mubr.f32.mxu0 %v2368
        %2573 = vmatmul.mubr.f32.gmra.mrb[0].mxu0 %v2272
        %v2574 = vpop.f32.mrb[0].mxu0
        %v2575 = vadd.f32 %v2441, %v2574
        %v2576 = vpop.f32.mrb[0].mxu0
        %2577 = vmatprep.mubr.f32.mxu0 %v2369
        %2578 = vmatmul.mubr.f32.gmra.mrb[0].mxu0 %v2273
        %v2579 = vpop.f32.mrb[0].mxu0
        %v2580 = vadd.f32 %v2441, %v2579
        %v2581 = vpop.f32.mrb[0].mxu0
        %2582 = vmatprep.mubr.f32.mxu0 %v2370
        %2583 = vmatmul.mubr.f32.gmra.mrb[0].mxu0 %v2274
        %v2584 = vpop.f32.mrb[0].mxu0
        %v2585 = vadd.f32 %v2441, %v2584
        %v2586 = vpop.f32.mrb[0].mxu0
        %2587 = vmatprep.mubr.f32.mxu0 %v2371
        %2588 = vmatmul.mubr.f32.gmra.mrb[0].mxu0 %v2275
        %v2589 = vpop.f32.mrb[0].mxu0
        %v2590 = vadd.f32 %v2441, %v2589
        %v2591 = vpop.f32.mrb[0].mxu0
        %2592 = vmatprep.mubr.f32.mxu0 %v2372
        %2593 = vmatmul.mubr.f32.gmra.mrb[0].mxu0 %v2276
        %v2594 = vpop.f32.mrb[0].mxu0
        %v2595 = vadd.f32 %v2441, %v2594
        %v2596 = vpop.f32.mrb[0].mxu0
        %2597 = vmatprep.mubr.f32.mxu0 %v2373
        %2598 = vmatmul.mubr.f32.gmra.mrb[0].mxu0 %v2277
        %v2599 = vpop.f32.mrb[0].mxu0
        %v2600 = vadd.f32 %v2441, %v2599
        %v2601 = vpop.f32.mrb[0].mxu0
        %2602 = vmatprep.mubr.f32.mxu0 %v2374
        %2603 = vmatmul.mubr.f32.gmra.mrb[0].mxu0 %v2278
        %v2604 = vpop.f32.mrb[0].mxu0
        %v2605 = vadd.f32 %v2441, %v2604
        %v2606 = vpop.f32.mrb[0].mxu0
        %2607 = vmatprep.mubr.f32.mxu0 %v2375
        %2608 = vmatmul.mubr.f32.gmra.mrb[0].mxu0 %v2279
        %v2609 = vpop.f32.mrb[0].mxu0
        %v2610 = vadd.f32 %v2441, %v2609
        %v2611 = vpop.f32.mrb[0].mxu0
        %2612 = vmatprep.mubr.f32.mxu0 %v2376
        %2613 = vmatmul.mubr.f32.gmra.mrb[0].mxu0 %v2280
        %v2614 = vpop.f32.mrb[0].mxu0
        %v2615 = vadd.f32 %v2441, %v2614
        %v2616 = vpop.f32.mrb[0].mxu0
        %2617 = vmatprep.mubr.f32.mxu0 %v2377
        %2618 = vmatmul.mubr.f32.gmra.mrb[0].mxu0 %v2281
        %v2619 = vpop.f32.mrb[0].mxu0
        %v2620 = vadd.f32 %v2441, %v2619
        %v2621 = vpop.f32.mrb[0].mxu0
        %2622 = vmatprep.mubr.f32.mxu0 %v2378
        %2623 = vmatmul.mubr.f32.gmra.mrb[0].mxu0 %v2282
        %v2624 = vpop.f32.mrb[0].mxu0
        %v2625 = vadd.f32 %v2441, %v2624
        %v2626 = vpop.f32.mrb[0].mxu0
        %2627 = vmatprep.mubr.f32.mxu0 %v2379
        %2628 = vmatmul.mubr.f32.gmra.mrb[0].mxu0 %v2283
        %v2629 = vpop.f32.mrb[0].mxu0
        %v2630 = vadd.f32 %v2441, %v2629
        %v2631 = vpop.f32.mrb[0].mxu0
        %2632 = vmatprep.mubr.f32.mxu0 %v2380
        %2633 = vmatmul.mubr.f32.gmra.mrb[0].mxu0 %v2284
        %v2634 = vpop.f32.mrb[0].mxu0
        %v2635 = vadd.f32 %v2441, %v2634
        %v2636 = vpop.f32.mrb[0].mxu0
        %2637 = vmatprep.mubr.f32.mxu0 %v2381
        %2638 = vmatmul.mubr.f32.gmra.mrb[0].mxu0 %v2285
        %v2639 = vpop.f32.mrb[0].mxu0
        %v2640 = vadd.f32 %v2441, %v2639
        %v2641 = vpop.f32.mrb[0].mxu0
        %2642 = vmatprep.mubr.f32.mxu0 %v2382
        %2643 = vmatmul.mubr.f32.gmra.mrb[0].mxu0 %v2286
        %v2644 = vpop.f32.mrb[0].mxu0
        %v2645 = vadd.f32 %v2441, %v2644
        %v2646 = vpop.f32.mrb[0].mxu0
        %2647 = vmatprep.mubr.f32.mxu0 %v2383
        %2648 = vmatmul.mubr.f32.gmra.mrb[0].mxu0 %v2287
        %v2649 = vpop.f32.mrb[0].mxu0
        %v2650 = vadd.f32 %v2441, %v2649
        %v2651 = vpop.f32.mrb[0].mxu0
        %2652 = vmatprep.mubr.f32.mxu0 %v2384
        %2653 = vmatmul.mubr.f32.gmra.mrb[0].mxu0 %v2288
        %v2654 = vpop.f32.mrb[0].mxu0
        %v2655 = vadd.f32 %v2441, %v2654
        %v2656 = vpop.f32.mrb[0].mxu0
        %2657 = vmatprep.mubr.f32.mxu0 %v2385
        %2658 = vmatmul.mubr.f32.gmra.mrb[0].mxu0 %v2289
        %v2659 = vpop.f32.mrb[0].mxu0
        %v2660 = vadd.f32 %v2441, %v2659
        %v2661 = vpop.f32.mrb[0].mxu0
        %2662 = vmatprep.mubr.f32.mxu0 %v2386
        %2663 = vmatmul.mubr.f32.gmra.mrb[0].mxu0 %v2290
        %v2664 = vpop.f32.mrb[0].mxu0
        %v2665 = vadd.f32 %v2441, %v2664
        %v2666 = vpop.f32.mrb[0].mxu0
        %2667 = vmatprep.mubr.f32.mxu0 %v2387
        %2668 = vmatmul.mubr.f32.gmra.mrb[0].mxu0 %v2291
        %v2669 = vpop.f32.mrb[0].mxu0
        %v2670 = vadd.f32 %v2441, %v2669
        %v2671 = vpop.f32.mrb[0].mxu0
        %2672 = vmatprep.mubr.f32.mxu0 %v2388
        %2673 = vmatmul.mubr.f32.gmra.mrb[0].mxu0 %v2292
        %v2674 = vpop.f32.mrb[0].mxu0
        %v2675 = vadd.f32 %v2441, %v2674
        %v2676 = vpop.f32.mrb[0].mxu0
        %2677 = vmatprep.mubr.f32.mxu0 %v2389
        %2678 = vmatmul.mubr.f32.gmra.mrb[0].mxu0 %v2293
        %v2679 = vpop.f32.mrb[0].mxu0
        %v2680 = vadd.f32 %v2441, %v2679
        %v2681 = vpop.f32.mrb[0].mxu0
        %2682 = vmatprep.mubr.f32.mxu0 %v2390
        %2683 = vmatmul.mubr.f32.gmra.mrb[0].mxu0 %v2294
        %v2684 = vpop.f32.mrb[0].mxu0
        %v2685 = vadd.f32 %v2441, %v2684
        %v2686 = vpop.f32.mrb[0].mxu0
        %2687 = vmatprep.mubr.f32.mxu0 %v2391
        %2688 = vmatmul.mubr.f32.gmra.mrb[0].mxu0 %v2295
        %v2689 = vpop.f32.mrb[0].mxu0
        %v2690 = vadd.f32 %v2441, %v2689
        %v2691 = vpop.f32.mrb[0].mxu0
        %2692 = vmatprep.mubr.f32.mxu0 %v2392
        %2693 = vmatmul.mubr.f32.gmra.mrb[0].mxu0 %v2296
        %v2694 = vpop.f32.mrb[0].mxu0
        %v2695 = vadd.f32 %v2441, %v2694
        %v2696 = vpop.f32.mrb[0].mxu0
        %2697 = vmatprep.mubr.f32.mxu0 %v2393
        %2698 = vmatmul.mubr.f32.gmra.mrb[0].mxu0 %v2297
        %v2699 = vpop.f32.mrb[0].mxu0
        %v2700 = vadd.f32 %v2441, %v2699
        %v2701 = vpop.f32.mrb[0].mxu0
        %2702 = vmatprep.mubr.f32.mxu0 %v2394
        %2703 = vmatmul.mubr.f32.gmra.mrb[0].mxu0 %v2298
        %v2704 = vpop.f32.mrb[0].mxu0
        %v2705 = vadd.f32 %v2441, %v2704
        %v2706 = vpop.f32.mrb[0].mxu0
        %2707 = vmatprep.mubr.f32.mxu0 %v2395
        %2708 = vmatmul.mubr.f32.gmra.mrb[0].mxu0 %v2299
        %v2709 = vpop.f32.mrb[0].mxu0
        %v2710 = vadd.f32 %v2441, %v2709
        %v2711 = vpop.f32.mrb[0].mxu0
        %2712 = vmatprep.mubr.f32.mxu0 %v2396
        %2713 = vmatmul.mubr.f32.gmra.mrb[0].mxu0 %v2300
        %v2714 = vpop.f32.mrb[0].mxu0
        %v2715 = vadd.f32 %v2441, %v2714
        %v2716 = vpop.f32.mrb[0].mxu0
        %2717 = vmatprep.mubr.f32.mxu0 %v2397
        %2718 = vmatmul.mubr.f32.gmra.mrb[0].mxu0 %v2301
        %v2719 = vpop.f32.mrb[0].mxu0
        %v2720 = vadd.f32 %v2441, %v2719
        %v2721 = vpop.f32.mrb[0].mxu0
        %2722 = vmatprep.mubr.f32.mxu0 %v2398
        %2723 = vmatmul.mubr.f32.gmra.mrb[0].mxu0 %v2302
        %v2724 = vpop.f32.mrb[0].mxu0
        %v2725 = vadd.f32 %v2441, %v2724
        %v2726 = vpop.f32.mrb[0].mxu0
        %2727 = vmatprep.mubr.f32.mxu0 %v2399
        %2728 = vmatmul.mubr.f32.gmra.mrb[0].mxu0 %v2303
        %v2729 = vpop.f32.mrb[0].mxu0
        %v2730 = vadd.f32 %v2441, %v2729
        %v2731 = vpop.f32.mrb[0].mxu0
        %2732 = vdwg.mxu0
        %2733 = vmatprep.subr.mxu0 0.0
        %2734 = vmatpush1.msra.mxu0 %v2432
        %2735 = vmatprep.subr.mxu0 0.0
        %2736 = vmatpush1.msra.mxu0 %v2433
        %2737 = vmatprep.subr.mxu0 0.0
        %2738 = vmatpush1.msra.mxu0 %v2434
        %2739 = vmatprep.subr.mxu0 0.0
        %2740 = vmatpush1.msra.mxu0 %v2435
        %2741 = vmatprep.subr.mxu0 0.0
        %2742 = vmatpush1.msra.mxu0 0.0
        %2743 = vmatprep.subr.mxu0 0.0
        %2744 = vmatpush1.msra.mxu0 0.0
        %2745 = vmatprep.subr.mxu0 0.0
        %2746 = vmatpush1.msra.mxu0 0.0
        %2747 = vmatprep.subr.mxu0 0.0
        %2748 = vmatpush1.msra.mxu0 0.0
        %2749 = vmatprep.subr.mxu0 0.0
        %2750 = vmatpush1.msra.mxu0 0.0
        %2751 = vmatprep.subr.mxu0 0.0
        %2752 = vmatpush1.msra.mxu0 0.0
        %2753 = vmatprep.subr.mxu0 0.0
        %2754 = vmatpush1.msra.mxu0 0.0
        %2755 = vmatprep.subr.mxu0 0.0
        %2756 = vmatpush1.msra.mxu0 0.0
        %2757 = vmatprep.subr.mxu0 0.0
        %2758 = vmatpush1.msra.mxu0 0.0
        %2759 = vmatprep.subr.mxu0 0.0
        %2760 = vmatpush1.msra.mxu0 0.0
        %2761 = vmatprep.subr.mxu0 0.0
        %2762 = vmatpush1.msra.mxu0 0.0
        %2763 = vmatprep.subr.mxu0 0.0
        %2764 = vmatpush1.msra.mxu0 0.0
        %2765 = vmatprep.subr.mxu0 0.0
        %2766 = vmatpush1.msra.mxu0 0.0
        %2767 = vmatprep.subr.mxu0 0.0
        %2768 = vmatpush1.msra.mxu0 0.0
        %2769 = vmatprep.subr.mxu0 0.0
        %2770 = vmatpush1.msra.mxu0 0.0
        %2771 = vmatprep.subr.mxu0 0.0
        %2772 = vmatpush1.msra.mxu0 0.0
        %2773 = vmatprep.subr.mxu0 0.0
        %2774 = vmatpush1.msra.mxu0 0.0
        %2775 = vmatprep.subr.mxu0 0.0
        %2776 = vmatpush1.msra.mxu0 0.0
        %2777 = vmatprep.subr.mxu0 0.0
        %2778 = vmatpush1.msra.mxu0 0.0
        %2779 = vmatprep.subr.mxu0 0.0
        %2780 = vmatpush1.msra.mxu0 0.0
        %2781 = vmatprep.subr.mxu0 0.0
        %2782 = vmatpush1.msra.mxu0 0.0
        %2783 = vmatprep.subr.mxu0 0.0
        %2784 = vmatpush1.msra.mxu0 0.0
        %2785 = vmatprep.subr.mxu0 0.0
        %2786 = vmatpush1.msra.mxu0 0.0
        %2787 = vmatprep.subr.mxu0 0.0
        %2788 = vmatpush1.msra.mxu0 0.0
        %2789 = vmatprep.subr.mxu0 0.0
        %2790 = vmatpush1.msra.mxu0 0.0
        %2791 = vmatprep.subr.mxu0 0.0
        %2792 = vmatpush1.msra.mxu0 0.0
        %2793 = vmatprep.subr.mxu0 0.0
        %2794 = vmatpush1.msra.mxu0 0.0
        %2795 = vmatprep.subr.mxu0 0.0
        %2796 = vmatpush1.msra.mxu0 0.0
        %2797 = vmatprep.mubr.f32.mxu0 0.0
        %2798 = vmatmul.mubr.f32.gmra.mrb[0].mxu0 %v2443
        %v2799 = vpop.f32.mrb[0].mxu0
        %v2800 = vadd.f32 %v2575, %v2799
        %v2801 = vpop.f32.mrb[0].mxu0
        %2802 = vmatprep.mubr.f32.mxu0 0.0
        %2803 = vmatmul.mubr.f32.gmra.mrb[0].mxu0 %v2445
        %v2804 = vpop.f32.mrb[0].mxu0
        %v2805 = vadd.f32 %v2580, %v2804
        %v2806 = vpop.f32.mrb[0].mxu0
        %2807 = vmatprep.mubr.f32.mxu0 0.0
        %2808 = vmatmul.mubr.f32.gmra.mrb[0].mxu0 %v2447
        %v2809 = vpop.f32.mrb[0].mxu0
        %v2810 = vadd.f32 %v2585, %v2809
        %v2811 = vpop.f32.mrb[0].mxu0
        %2812 = vmatprep.mubr.f32.mxu0 0.0
        %2813 = vmatmul.mubr.f32.gmra.mrb[0].mxu0 %v2449
        %v2814 = vpop.f32.mrb[0].mxu0
        %v2815 = vadd.f32 %v2590, %v2814
        %v2816 = vpop.f32.mrb[0].mxu0
        %2817 = vmatprep.mubr.f32.mxu0 0.0
        %2818 = vmatmul.mubr.f32.gmra.mrb[0].mxu0 %v2451
        %v2819 = vpop.f32.mrb[0].mxu0
        %v2820 = vadd.f32 %v2595, %v2819
        %v2821 = vpop.f32.mrb[0].mxu0
        %2822 = vmatprep.mubr.f32.mxu0 0.0
        %2823 = vmatmul.mubr.f32.gmra.mrb[0].mxu0 %v2453
        %v2824 = vpop.f32.mrb[0].mxu0
        %v2825 = vadd.f32 %v2600, %v2824
        %v2826 = vpop.f32.mrb[0].mxu0
        %2827 = vmatprep.mubr.f32.mxu0 0.0
        %2828 = vmatmul.mubr.f32.gmra.mrb[0].mxu0 %v2455
        %v2829 = vpop.f32.mrb[0].mxu0
        %v2830 = vadd.f32 %v2605, %v2829
        %v2831 = vpop.f32.mrb[0].mxu0
        %2832 = vmatprep.mubr.f32.mxu0 0.0
        %2833 = vmatmul.mubr.f32.gmra.mrb[0].mxu0 %v2457
        %v2834 = vpop.f32.mrb[0].mxu0
        %v2835 = vadd.f32 %v2610, %v2834
        %v2836 = vpop.f32.mrb[0].mxu0
        %2837 = vmatprep.mubr.f32.mxu0 0.0
        %2838 = vmatmul.mubr.f32.gmra.mrb[0].mxu0 %v2459
        %v2839 = vpop.f32.mrb[0].mxu0
        %v2840 = vadd.f32 %v2615, %v2839
        %v2841 = vpop.f32.mrb[0].mxu0
        %2842 = vmatprep.mubr.f32.mxu0 0.0
        %2843 = vmatmul.mubr.f32.gmra.mrb[0].mxu0 %v2461
        %v2844 = vpop.f32.mrb[0].mxu0
        %v2845 = vadd.f32 %v2620, %v2844
        %v2846 = vpop.f32.mrb[0].mxu0
        %2847 = vmatprep.mubr.f32.mxu0 0.0
        %2848 = vmatmul.mubr.f32.gmra.mrb[0].mxu0 %v2463
        %v2849 = vpop.f32.mrb[0].mxu0
        %v2850 = vadd.f32 %v2625, %v2849
        %v2851 = vpop.f32.mrb[0].mxu0
        %2852 = vmatprep.mubr.f32.mxu0 0.0
        %2853 = vmatmul.mubr.f32.gmra.mrb[0].mxu0 %v2465
        %v2854 = vpop.f32.mrb[0].mxu0
        %v2855 = vadd.f32 %v2630, %v2854
        %v2856 = vpop.f32.mrb[0].mxu0
        %2857 = vmatprep.mubr.f32.mxu0 0.0
        %2858 = vmatmul.mubr.f32.gmra.mrb[0].mxu0 %v2467
        %v2859 = vpop.f32.mrb[0].mxu0
        %v2860 = vadd.f32 %v2635, %v2859
        %v2861 = vpop.f32.mrb[0].mxu0
        %2862 = vmatprep.mubr.f32.mxu0 0.0
        %2863 = vmatmul.mubr.f32.gmra.mrb[0].mxu0 %v2469
        %v2864 = vpop.f32.mrb[0].mxu0
        %v2865 = vadd.f32 %v2640, %v2864
        %v2866 = vpop.f32.mrb[0].mxu0
        %2867 = vmatprep.mubr.f32.mxu0 0.0
        %2868 = vmatmul.mubr.f32.gmra.mrb[0].mxu0 %v2471
        %v2869 = vpop.f32.mrb[0].mxu0
        %v2870 = vadd.f32 %v2645, %v2869
        %v2871 = vpop.f32.mrb[0].mxu0
        %2872 = vmatprep.mubr.f32.mxu0 0.0
        %2873 = vmatmul.mubr.f32.gmra.mrb[0].mxu0 %v2473
        %v2874 = vpop.f32.mrb[0].mxu0
        %v2875 = vadd.f32 %v2650, %v2874
        %v2876 = vpop.f32.mrb[0].mxu0
        %2877 = vmatprep.mubr.f32.mxu0 0.0
        %2878 = vmatmul.mubr.f32.gmra.mrb[0].mxu0 %v2475
        %v2879 = vpop.f32.mrb[0].mxu0
        %v2880 = vadd.f32 %v2655, %v2879
        %v2881 = vpop.f32.mrb[0].mxu0
        %2882 = vmatprep.mubr.f32.mxu0 0.0
        %2883 = vmatmul.mubr.f32.gmra.mrb[0].mxu0 %v2477
        %v2884 = vpop.f32.mrb[0].mxu0
        %v2885 = vadd.f32 %v2660, %v2884
        %v2886 = vpop.f32.mrb[0].mxu0
        %2887 = vmatprep.mubr.f32.mxu0 0.0
        %2888 = vmatmul.mubr.f32.gmra.mrb[0].mxu0 %v2479
        %v2889 = vpop.f32.mrb[0].mxu0
        %v2890 = vadd.f32 %v2665, %v2889
        %v2891 = vpop.f32.mrb[0].mxu0
        %2892 = vmatprep.mubr.f32.mxu0 0.0
        %2893 = vmatmul.mubr.f32.gmra.mrb[0].mxu0 %v2481
        %v2894 = vpop.f32.mrb[0].mxu0
        %v2895 = vadd.f32 %v2670, %v2894
        %v2896 = vpop.f32.mrb[0].mxu0
        %2897 = vmatprep.mubr.f32.mxu0 0.0
        %2898 = vmatmul.mubr.f32.gmra.mrb[0].mxu0 %v2483
        %v2899 = vpop.f32.mrb[0].mxu0
        %v2900 = vadd.f32 %v2675, %v2899
        %v2901 = vpop.f32.mrb[0].mxu0
        %2902 = vmatprep.mubr.f32.mxu0 0.0
        %2903 = vmatmul.mubr.f32.gmra.mrb[0].mxu0 %v2485
        %v2904 = vpop.f32.mrb[0].mxu0
        %v2905 = vadd.f32 %v2680, %v2904
        %v2906 = vpop.f32.mrb[0].mxu0
        %2907 = vmatprep.mubr.f32.mxu0 0.0
        %2908 = vmatmul.mubr.f32.gmra.mrb[0].mxu0 %v2487
        %v2909 = vpop.f32.mrb[0].mxu0
        %v2910 = vadd.f32 %v2685, %v2909
        %v2911 = vpop.f32.mrb[0].mxu0
        %2912 = vmatprep.mubr.f32.mxu0 0.0
        %2913 = vmatmul.mubr.f32.gmra.mrb[0].mxu0 %v2489
        %v2914 = vpop.f32.mrb[0].mxu0
        %v2915 = vadd.f32 %v2690, %v2914
        %v2916 = vpop.f32.mrb[0].mxu0
        %2917 = vmatprep.mubr.f32.mxu0 0.0
        %2918 = vmatmul.mubr.f32.gmra.mrb[0].mxu0 %v2491
        %v2919 = vpop.f32.mrb[0].mxu0
        %v2920 = vadd.f32 %v2695, %v2919
        %v2921 = vpop.f32.mrb[0].mxu0
        %2922 = vmatprep.mubr.f32.mxu0 0.0
        %2923 = vmatmul.mubr.f32.gmra.mrb[0].mxu0 %v2493
        %v2924 = vpop.f32.mrb[0].mxu0
        %v2925 = vadd.f32 %v2700, %v2924
        %v2926 = vpop.f32.mrb[0].mxu0
        %2927 = vmatprep.mubr.f32.mxu0 0.0
        %2928 = vmatmul.mubr.f32.gmra.mrb[0].mxu0 %v2495
        %v2929 = vpop.f32.mrb[0].mxu0
        %v2930 = vadd.f32 %v2705, %v2929
        %v2931 = vpop.f32.mrb[0].mxu0
        %2932 = vmatprep.mubr.f32.mxu0 0.0
        %2933 = vmatmul.mubr.f32.gmra.mrb[0].mxu0 %v2497
        %v2934 = vpop.f32.mrb[0].mxu0
        %v2935 = vadd.f32 %v2710, %v2934
        %v2936 = vpop.f32.mrb[0].mxu0
        %2937 = vmatprep.mubr.f32.mxu0 0.0
        %2938 = vmatmul.mubr.f32.gmra.mrb[0].mxu0 %v2499
        %v2939 = vpop.f32.mrb[0].mxu0
        %v2940 = vadd.f32 %v2715, %v2939
        %v2941 = vpop.f32.mrb[0].mxu0
        %2942 = vmatprep.mubr.f32.mxu0 0.0
        %2943 = vmatmul.mubr.f32.gmra.mrb[0].mxu0 %v2501
        %v2944 = vpop.f32.mrb[0].mxu0
        %v2945 = vadd.f32 %v2720, %v2944
        %v2946 = vpop.f32.mrb[0].mxu0
        %2947 = vmatprep.mubr.f32.mxu0 0.0
        %2948 = vmatmul.mubr.f32.gmra.mrb[0].mxu0 %v2503
        %v2949 = vpop.f32.mrb[0].mxu0
        %v2950 = vadd.f32 %v2725, %v2949
        %v2951 = vpop.f32.mrb[0].mxu0
        %2952 = vmatprep.mubr.f32.mxu0 0.0
        %2953 = vmatmul.mubr.f32.gmra.mrb[0].mxu0 %v2506
        %v2954 = vpop.f32.mrb[0].mxu0
        %v2955 = vadd.f32 %v2730, %v2954
        %v2956 = vpop.f32.mrb[0].mxu0
        %2957 = vdwg.mxu0
        %vm2958 = vcmp.ge.f32.partialorder %v2800, 0.0
        %vm2959 = vcmp.ge.f32.partialorder %v2805, 0.0
        %vm2960 = vcmp.ge.f32.partialorder %v2810, 0.0
        %vm2961 = vcmp.ge.f32.partialorder %v2815, 0.0
        %vm2962 = vcmp.ge.f32.partialorder %v2820, 0.0
        %vm2963 = vcmp.ge.f32.partialorder %v2825, 0.0
        %vm2964 = vcmp.ge.f32.partialorder %v2830, 0.0
        %vm2965 = vcmp.ge.f32.partialorder %v2835, 0.0
        %vm2966 = vcmp.ge.f32.partialorder %v2840, 0.0
        %vm2967 = vcmp.ge.f32.partialorder %v2845, 0.0
        %vm2968 = vcmp.ge.f32.partialorder %v2850, 0.0
        %vm2969 = vcmp.ge.f32.partialorder %v2855, 0.0
        %vm2970 = vcmp.ge.f32.partialorder %v2860, 0.0
        %vm2971 = vcmp.ge.f32.partialorder %v2865, 0.0
        %vm2972 = vcmp.ge.f32.partialorder %v2870, 0.0
        %vm2973 = vcmp.ge.f32.partialorder %v2875, 0.0
        %vm2974 = vcmp.ge.f32.partialorder %v2880, 0.0
        %vm2975 = vcmp.ge.f32.partialorder %v2885, 0.0
        %vm2976 = vcmp.ge.f32.partialorder %v2890, 0.0
        %vm2977 = vcmp.ge.f32.partialorder %v2895, 0.0
        %vm2978 = vcmp.ge.f32.partialorder %v2900, 0.0
        %vm2979 = vcmp.ge.f32.partialorder %v2905, 0.0
        %vm2980 = vcmp.ge.f32.partialorder %v2910, 0.0
        %vm2981 = vcmp.ge.f32.partialorder %v2915, 0.0
        %vm2982 = vcmp.ge.f32.partialorder %v2920, 0.0
        %vm2983 = vcmp.ge.f32.partialorder %v2925, 0.0
        %vm2984 = vcmp.ge.f32.partialorder %v2930, 0.0
        %vm2985 = vcmp.ge.f32.partialorder %v2935, 0.0
        %vm2986 = vcmp.ge.f32.partialorder %v2940, 0.0
        %vm2987 = vcmp.ge.f32.partialorder %v2945, 0.0
        %vm2988 = vcmp.ge.f32.partialorder %v2950, 0.0
        %vm2989 = vcmp.ge.f32.partialorder %v2955, 0.0
        %v2990 = vmul.f32 %v2800, 0.2
        %v2991 = vmul.f32 %v2805, 0.2
        %v2992 = vmul.f32 %v2810, 0.2
        %v2993 = vmul.f32 %v2815, 0.2
        %v2994 = vmul.f32 %v2820, 0.2
        %v2995 = vmul.f32 %v2825, 0.2
        %v2996 = vmul.f32 %v2830, 0.2
        %v2997 = vmul.f32 %v2835, 0.2
        %v2998 = vmul.f32 %v2840, 0.2
        %v2999 = vmul.f32 %v2845, 0.2
        %v3000 = vmul.f32 %v2850, 0.2
        %v3001 = vmul.f32 %v2855, 0.2
        %v3002 = vmul.f32 %v2860, 0.2
        %v3003 = vmul.f32 %v2865, 0.2
        %v3004 = vmul.f32 %v2870, 0.2
        %v3005 = vmul.f32 %v2875, 0.2
        %v3006 = vmul.f32 %v2880, 0.2
        %v3007 = vmul.f32 %v2885, 0.2
        %v3008 = vmul.f32 %v2890, 0.2
        %v3009 = vmul.f32 %v2895, 0.2
        %v3010 = vmul.f32 %v2900, 0.2
        %v3011 = vmul.f32 %v2905, 0.2
        %v3012 = vmul.f32 %v2910, 0.2
        %v3013 = vmul.f32 %v2915, 0.2
        %v3014 = vmul.f32 %v2920, 0.2
        %v3015 = vmul.f32 %v2925, 0.2
        %v3016 = vmul.f32 %v2930, 0.2
        %v3017 = vmul.f32 %v2935, 0.2
        %v3018 = vmul.f32 %v2940, 0.2
        %v3019 = vmul.f32 %v2945, 0.2
        %v3020 = vmul.f32 %v2950, 0.2
        %v3021 = vmul.f32 %v2955, 0.2
        %v3022 = vsel %vm2958, %v2800, %v2990
        %v3023 = vsel %vm2959, %v2805, %v2991
        %v3024 = vsel %vm2960, %v2810, %v2992
        %v3025 = vsel %vm2961, %v2815, %v2993
        %v3026 = vsel %vm2962, %v2820, %v2994
        %v3027 = vsel %vm2963, %v2825, %v2995
        %v3028 = vsel %vm2964, %v2830, %v2996
        %v3029 = vsel %vm2965, %v2835, %v2997
        %v3030 = vsel %vm2966, %v2840, %v2998
        %v3031 = vsel %vm2967, %v2845, %v2999
        %v3032 = vsel %vm2968, %v2850, %v3000
        %v3033 = vsel %vm2969, %v2855, %v3001
        %v3034 = vsel %vm2970, %v2860, %v3002
        %v3035 = vsel %vm2971, %v2865, %v3003
        %v3036 = vsel %vm2972, %v2870, %v3004
        %v3037 = vsel %vm2973, %v2875, %v3005
        %v3038 = vsel %vm2974, %v2880, %v3006
        %v3039 = vsel %vm2975, %v2885, %v3007
        %v3040 = vsel %vm2976, %v2890, %v3008
        %v3041 = vsel %vm2977, %v2895, %v3009
        %v3042 = vsel %vm2978, %v2900, %v3010
        %v3043 = vsel %vm2979, %v2905, %v3011
        %v3044 = vsel %vm2980, %v2910, %v3012
        %v3045 = vsel %vm2981, %v2915, %v3013
        %v3046 = vsel %vm2982, %v2920, %v3014
        %v3047 = vsel %vm2983, %v2925, %v3015
        %v3048 = vsel %vm2984, %v2930, %v3016
        %v3049 = vsel %vm2985, %v2935, %v3017
        %v3050 = vsel %vm2986, %v2940, %v3018
        %v3051 = vsel %vm2987, %v2945, %v3019
        %v3052 = vsel %vm2988, %v2950, %v3020
        %v3053 = vsel %vm2989, %v2955, %v3021
        %v3054 = vld [vmem:[#allocation11] sm:$0xff]
        %v3055 = vld [vmem:[#allocation11 + $0x8] sm:$0xff]
        %v3056 = vld [vmem:[#allocation11 + $0x10] sm:$0xff]
        %v3057 = vld [vmem:[#allocation11 + $0x18] sm:$0xff]
        %v3059 = vsel %vm2205, %v3022, 0
        %v3062 = vsel %vm2205, %v3023, 0
        %v3065 = vsel %vm2205, %v3024, 0
        %v3068 = vsel %vm2205, %v3025, 0
        %v3071 = vsel %vm2205, %v3026, 0
        %v3074 = vsel %vm2205, %v3027, 0
        %v3077 = vsel %vm2205, %v3028, 0
        %v3080 = vsel %vm2205, %v3029, 0
        %v3083 = vsel %vm2205, %v3030, 0
        %v3086 = vsel %vm2205, %v3031, 0
        %v3089 = vsel %vm2205, %v3032, 0
        %v3092 = vsel %vm2205, %v3033, 0
        %v3095 = vsel %vm2205, %v3034, 0
        %v3098 = vsel %vm2205, %v3035, 0
        %v3101 = vsel %vm2205, %v3036, 0
        %v3104 = vsel %vm2205, %v3037, 0
        %v3107 = vsel %vm2205, %v3038, 0
        %v3110 = vsel %vm2205, %v3039, 0
        %v3113 = vsel %vm2205, %v3040, 0
        %v3116 = vsel %vm2205, %v3041, 0
        %v3119 = vsel %vm2205, %v3042, 0
        %v3122 = vsel %vm2205, %v3043, 0
        %v3125 = vsel %vm2205, %v3044, 0
        %v3128 = vsel %vm2205, %v3045, 0
        %v3131 = vsel %vm2205, %v3046, 0
        %v3134 = vsel %vm2205, %v3047, 0
        %v3137 = vsel %vm2205, %v3048, 0
        %v3140 = vsel %vm2205, %v3049, 0
        %v3143 = vsel %vm2205, %v3050, 0
        %v3146 = vsel %vm2205, %v3051, 0
        %v3149 = vsel %vm2205, %v3052, 0
        %v3152 = vsel %vm2205, %v3053, 0
        %3154 = vmatprep.subr.mxu0 0.0
        %3155 = vmatpush1.msra.mxu0 %v3054
        %3156 = vmatprep.subr.mxu0 0.0
        %3157 = vmatpush1.msra.mxu0 %v3055
        %3158 = vmatprep.subr.mxu0 0.0
        %3159 = vmatpush1.msra.mxu0 %v3056
        %3160 = vmatprep.subr.mxu0 0.0
        %3161 = vmatpush1.msra.mxu0 %v3057
        %3162 = vmatprep.subr.mxu0 0.0
        %3163 = vmatpush1.msra.mxu0 0.0
        %3164 = vmatprep.subr.mxu0 0.0
        %3165 = vmatpush1.msra.mxu0 0.0
        %3166 = vmatprep.subr.mxu0 0.0
        %3167 = vmatpush1.msra.mxu0 0.0
        %3168 = vmatprep.subr.mxu0 0.0
        %3169 = vmatpush1.msra.mxu0 0.0
        %3170 = vmatprep.subr.mxu0 0.0
        %3171 = vmatpush1.msra.mxu0 0.0
        %3172 = vmatprep.subr.mxu0 0.0
        %3173 = vmatpush1.msra.mxu0 0.0
        %3174 = vmatprep.subr.mxu0 0.0
        %3175 = vmatpush1.msra.mxu0 0.0
        %3176 = vmatprep.subr.mxu0 0.0
        %3177 = vmatpush1.msra.mxu0 0.0
        %3178 = vmatprep.subr.mxu0 0.0
        %3179 = vmatpush1.msra.mxu0 0.0
        %3180 = vmatprep.subr.mxu0 0.0
        %3181 = vmatpush1.msra.mxu0 0.0
        %3182 = vmatprep.subr.mxu0 0.0
        %3183 = vmatpush1.msra.mxu0 0.0
        %3184 = vmatprep.subr.mxu0 0.0
        %3185 = vmatpush1.msra.mxu0 0.0
        %3186 = vmatprep.subr.mxu0 0.0
        %3187 = vmatpush1.msra.mxu0 0.0
        %3188 = vmatprep.subr.mxu0 0.0
        %3189 = vmatpush1.msra.mxu0 0.0
        %3190 = vmatprep.subr.mxu0 0.0
        %3191 = vmatpush1.msra.mxu0 0.0
        %3192 = vmatprep.subr.mxu0 0.0
        %3193 = vmatpush1.msra.mxu0 0.0
        %3194 = vmatprep.subr.mxu0 0.0
        %3195 = vmatpush1.msra.mxu0 0.0
        %3196 = vmatprep.subr.mxu0 0.0
        %3197 = vmatpush1.msra.mxu0 0.0
        %3198 = vmatprep.subr.mxu0 0.0
        %3199 = vmatpush1.msra.mxu0 0.0
        %3200 = vmatprep.subr.mxu0 0.0
        %3201 = vmatpush1.msra.mxu0 0.0
        %3202 = vmatprep.subr.mxu0 0.0
        %3203 = vmatpush1.msra.mxu0 0.0
        %3204 = vmatprep.subr.mxu0 0.0
        %3205 = vmatpush1.msra.mxu0 0.0
        %3206 = vmatprep.subr.mxu0 0.0
        %3207 = vmatpush1.msra.mxu0 0.0
        %3208 = vmatprep.subr.mxu0 0.0
        %3209 = vmatpush1.msra.mxu0 0.0
        %3210 = vmatprep.subr.mxu0 0.0
        %3211 = vmatpush1.msra.mxu0 0.0
        %3212 = vmatprep.subr.mxu0 0.0
        %3213 = vmatpush1.msra.mxu0 0.0
        %3214 = vmatprep.subr.mxu0 0.0
        %3215 = vmatpush1.msra.mxu0 0.0
        %3216 = vmatprep.subr.mxu0 0.0
        %3217 = vmatpush1.msra.mxu0 0.0
        %3218 = vmatprep.mubr.f32.mxu0 0.0
        %3219 = vmatmul.mubr.f32.gmra.mrb[0].mxu0 %v3059
        %v3220 = vpop.f32.mrb[0].mxu0
        %v3221 = vadd.f32 0.0, %v3220
        %v3222 = vpop.f32.mrb[0].mxu0
        %3223 = vmatprep.mubr.f32.mxu0 0.0
        %3224 = vmatmul.mubr.f32.gmra.mrb[0].mxu0 %v3062
        %v3225 = vpop.f32.mrb[0].mxu0
        %v3226 = vadd.f32 0.0, %v3225
        %v3227 = vpop.f32.mrb[0].mxu0
        %3228 = vmatprep.mubr.f32.mxu0 0.0
        %3229 = vmatmul.mubr.f32.gmra.mrb[0].mxu0 %v3065
        %v3230 = vpop.f32.mrb[0].mxu0
        %v3231 = vadd.f32 0.0, %v3230
        %v3232 = vpop.f32.mrb[0].mxu0
        %3233 = vmatprep.mubr.f32.mxu0 0.0
        %3234 = vmatmul.mubr.f32.gmra.mrb[0].mxu0 %v3068
        %v3235 = vpop.f32.mrb[0].mxu0
        %v3236 = vadd.f32 0.0, %v3235
        %v3237 = vpop.f32.mrb[0].mxu0
        %3238 = vmatprep.mubr.f32.mxu0 0.0
        %3239 = vmatmul.mubr.f32.gmra.mrb[0].mxu0 %v3071
        %v3240 = vpop.f32.mrb[0].mxu0
        %v3241 = vadd.f32 0.0, %v3240
        %v3242 = vpop.f32.mrb[0].mxu0
        %3243 = vmatprep.mubr.f32.mxu0 0.0
        %3244 = vmatmul.mubr.f32.gmra.mrb[0].mxu0 %v3074
        %v3245 = vpop.f32.mrb[0].mxu0
        %v3246 = vadd.f32 0.0, %v3245
        %v3247 = vpop.f32.mrb[0].mxu0
        %3248 = vmatprep.mubr.f32.mxu0 0.0
        %3249 = vmatmul.mubr.f32.gmra.mrb[0].mxu0 %v3077
        %v3250 = vpop.f32.mrb[0].mxu0
        %v3251 = vadd.f32 0.0, %v3250
        %v3252 = vpop.f32.mrb[0].mxu0
        %3253 = vmatprep.mubr.f32.mxu0 0.0
        %3254 = vmatmul.mubr.f32.gmra.mrb[0].mxu0 %v3080
        %v3255 = vpop.f32.mrb[0].mxu0
        %v3256 = vadd.f32 0.0, %v3255
        %v3257 = vpop.f32.mrb[0].mxu0
        %3258 = vmatprep.mubr.f32.mxu0 0.0
        %3259 = vmatmul.mubr.f32.gmra.mrb[0].mxu0 %v3083
        %v3260 = vpop.f32.mrb[0].mxu0
        %v3261 = vadd.f32 0.0, %v3260
        %v3262 = vpop.f32.mrb[0].mxu0
        %3263 = vmatprep.mubr.f32.mxu0 0.0
        %3264 = vmatmul.mubr.f32.gmra.mrb[0].mxu0 %v3086
        %v3265 = vpop.f32.mrb[0].mxu0
        %v3266 = vadd.f32 0.0, %v3265
        %v3267 = vpop.f32.mrb[0].mxu0
        %3268 = vmatprep.mubr.f32.mxu0 0.0
        %3269 = vmatmul.mubr.f32.gmra.mrb[0].mxu0 %v3089
        %v3270 = vpop.f32.mrb[0].mxu0
        %v3271 = vadd.f32 0.0, %v3270
        %v3272 = vpop.f32.mrb[0].mxu0
        %3273 = vmatprep.mubr.f32.mxu0 0.0
        %3274 = vmatmul.mubr.f32.gmra.mrb[0].mxu0 %v3092
        %v3275 = vpop.f32.mrb[0].mxu0
        %v3276 = vadd.f32 0.0, %v3275
        %v3277 = vpop.f32.mrb[0].mxu0
        %3278 = vmatprep.mubr.f32.mxu0 0.0
        %3279 = vmatmul.mubr.f32.gmra.mrb[0].mxu0 %v3095
        %v3280 = vpop.f32.mrb[0].mxu0
        %v3281 = vadd.f32 0.0, %v3280
        %v3282 = vpop.f32.mrb[0].mxu0
        %3283 = vmatprep.mubr.f32.mxu0 0.0
        %3284 = vmatmul.mubr.f32.gmra.mrb[0].mxu0 %v3098
        %v3285 = vpop.f32.mrb[0].mxu0
        %v3286 = vadd.f32 0.0, %v3285
        %v3287 = vpop.f32.mrb[0].mxu0
        %3288 = vmatprep.mubr.f32.mxu0 0.0
        %3289 = vmatmul.mubr.f32.gmra.mrb[0].mxu0 %v3101
        %v3290 = vpop.f32.mrb[0].mxu0
        %v3291 = vadd.f32 0.0, %v3290
        %v3292 = vpop.f32.mrb[0].mxu0
        %3293 = vmatprep.mubr.f32.mxu0 0.0
        %3294 = vmatmul.mubr.f32.gmra.mrb[0].mxu0 %v3104
        %v3295 = vpop.f32.mrb[0].mxu0
        %v3296 = vadd.f32 0.0, %v3295
        %v3297 = vpop.f32.mrb[0].mxu0
        %3298 = vmatprep.mubr.f32.mxu0 0.0
        %3299 = vmatmul.mubr.f32.gmra.mrb[0].mxu0 %v3107
        %v3300 = vpop.f32.mrb[0].mxu0
        %v3301 = vadd.f32 0.0, %v3300
        %v3302 = vpop.f32.mrb[0].mxu0
        %3303 = vmatprep.mubr.f32.mxu0 0.0
        %3304 = vmatmul.mubr.f32.gmra.mrb[0].mxu0 %v3110
        %v3305 = vpop.f32.mrb[0].mxu0
        %v3306 = vadd.f32 0.0, %v3305
        %v3307 = vpop.f32.mrb[0].mxu0
        %3308 = vmatprep.mubr.f32.mxu0 0.0
        %3309 = vmatmul.mubr.f32.gmra.mrb[0].mxu0 %v3113
        %v3310 = vpop.f32.mrb[0].mxu0
        %v3311 = vadd.f32 0.0, %v3310
        %v3312 = vpop.f32.mrb[0].mxu0
        %3313 = vmatprep.mubr.f32.mxu0 0.0
        %3314 = vmatmul.mubr.f32.gmra.mrb[0].mxu0 %v3116
        %v3315 = vpop.f32.mrb[0].mxu0
        %v3316 = vadd.f32 0.0, %v3315
        %v3317 = vpop.f32.mrb[0].mxu0
        %3318 = vmatprep.mubr.f32.mxu0 0.0
        %3319 = vmatmul.mubr.f32.gmra.mrb[0].mxu0 %v3119
        %v3320 = vpop.f32.mrb[0].mxu0
        %v3321 = vadd.f32 0.0, %v3320
        %v3322 = vpop.f32.mrb[0].mxu0
        %3323 = vmatprep.mubr.f32.mxu0 0.0
        %3324 = vmatmul.mubr.f32.gmra.mrb[0].mxu0 %v3122
        %v3325 = vpop.f32.mrb[0].mxu0
        %v3326 = vadd.f32 0.0, %v3325
        %v3327 = vpop.f32.mrb[0].mxu0
        %3328 = vmatprep.mubr.f32.mxu0 0.0
        %3329 = vmatmul.mubr.f32.gmra.mrb[0].mxu0 %v3125
        %v3330 = vpop.f32.mrb[0].mxu0
        %v3331 = vadd.f32 0.0, %v3330
        %v3332 = vpop.f32.mrb[0].mxu0
        %3333 = vmatprep.mubr.f32.mxu0 0.0
        %3334 = vmatmul.mubr.f32.gmra.mrb[0].mxu0 %v3128
        %v3335 = vpop.f32.mrb[0].mxu0
        %v3336 = vadd.f32 0.0, %v3335
        %v3337 = vpop.f32.mrb[0].mxu0
        %3338 = vmatprep.mubr.f32.mxu0 0.0
        %3339 = vmatmul.mubr.f32.gmra.mrb[0].mxu0 %v3131
        %v3340 = vpop.f32.mrb[0].mxu0
        %v3341 = vadd.f32 0.0, %v3340
        %v3342 = vpop.f32.mrb[0].mxu0
        %3343 = vmatprep.mubr.f32.mxu0 0.0
        %3344 = vmatmul.mubr.f32.gmra.mrb[0].mxu0 %v3134
        %v3345 = vpop.f32.mrb[0].mxu0
        %v3346 = vadd.f32 0.0, %v3345
        %v3347 = vpop.f32.mrb[0].mxu0
        %3348 = vmatprep.mubr.f32.mxu0 0.0
        %3349 = vmatmul.mubr.f32.gmra.mrb[0].mxu0 %v3137
        %v3350 = vpop.f32.mrb[0].mxu0
        %v3351 = vadd.f32 0.0, %v3350
        %v3352 = vpop.f32.mrb[0].mxu0
        %3353 = vmatprep.mubr.f32.mxu0 0.0
        %3354 = vmatmul.mubr.f32.gmra.mrb[0].mxu0 %v3140
        %v3355 = vpop.f32.mrb[0].mxu0
        %v3356 = vadd.f32 0.0, %v3355
        %v3357 = vpop.f32.mrb[0].mxu0
        %3358 = vmatprep.mubr.f32.mxu0 0.0
        %3359 = vmatmul.mubr.f32.gmra.mrb[0].mxu0 %v3143
        %v3360 = vpop.f32.mrb[0].mxu0
        %v3361 = vadd.f32 0.0, %v3360
        %v3362 = vpop.f32.mrb[0].mxu0
        %3363 = vmatprep.mubr.f32.mxu0 0.0
        %3364 = vmatmul.mubr.f32.gmra.mrb[0].mxu0 %v3146
        %v3365 = vpop.f32.mrb[0].mxu0
        %v3366 = vadd.f32 0.0, %v3365
        %v3367 = vpop.f32.mrb[0].mxu0
        %3368 = vmatprep.mubr.f32.mxu0 0.0
        %3369 = vmatmul.mubr.f32.gmra.mrb[0].mxu0 %v3149
        %v3370 = vpop.f32.mrb[0].mxu0
        %v3371 = vadd.f32 0.0, %v3370
        %v3372 = vpop.f32.mrb[0].mxu0
        %3373 = vmatprep.mubr.f32.mxu0 0.0
        %3374 = vmatmul.mubr.f32.gmra.mrb[0].mxu0 %v3152
        %v3375 = vpop.f32.mrb[0].mxu0
        %v3376 = vadd.f32 0.0, %v3375
        %v3377 = vpop.f32.mrb[0].mxu0
        %3378 = vdwg.mxu0
        %3379 = vxpose.xlu0.b32.start [1/16] %v3221, 128
        %3380 = vxpose.xlu0.b32.cont [2/16] %v3226, 128
        %3381 = vxpose.xlu0.b32.cont [3/16] %v3231, 128
        %3382 = vxpose.xlu0.b32.cont [4/16] %v3236, 128
        %3383 = vxpose.xlu0.b32.cont [5/16] %v3241, 128
        %3384 = vxpose.xlu0.b32.cont [6/16] %v3246, 128
        %3385 = vxpose.xlu0.b32.cont [7/16] %v3251, 128
        %3386 = vxpose.xlu0.b32.cont [8/16] %v3256, 128
        %3387 = vxpose.xlu0.b32.cont [9/16] %v3261, 128
        %3388 = vxpose.xlu0.b32.cont [10/16] %v3266, 128
        %3389 = vxpose.xlu0.b32.cont [11/16] %v3271, 128
        %3390 = vxpose.xlu0.b32.cont [12/16] %v3276, 128
        %3391 = vxpose.xlu0.b32.cont [13/16] %v3281, 128
        %3392 = vxpose.xlu0.b32.cont [14/16] %v3286, 128
        %3393 = vxpose.xlu0.b32.cont [15/16] %v3291, 128
        %3394 = vxpose.xlu0.b32.end [16/16] %v3296, 128
        %v3395 = vpop.trf.xlu0
        %v3396 = vpop.trf.xlu0
        %v3397 = vpop.trf.xlu0
        %v3398 = vpop.trf.xlu0
        %v3399 = vpop.trf.xlu0
        %v3400 = vpop.trf.xlu0
        %v3401 = vpop.trf.xlu0
        %v3402 = vpop.trf.xlu0
        %v3403 = vpop.trf.xlu0
        %v3404 = vpop.trf.xlu0
        %v3405 = vpop.trf.xlu0
        %v3406 = vpop.trf.xlu0
        %v3407 = vpop.trf.xlu0
        %v3408 = vpop.trf.xlu0
        %v3409 = vpop.trf.xlu0
        %v3410 = vpop.trf.xlu0
        %3411 = vxpose.xlu0.b32.start [1/16] %v3301, 128
        %3412 = vxpose.xlu0.b32.cont [2/16] %v3306, 128
        %3413 = vxpose.xlu0.b32.cont [3/16] %v3311, 128
        %3414 = vxpose.xlu0.b32.cont [4/16] %v3316, 128
        %3415 = vxpose.xlu0.b32.cont [5/16] %v3321, 128
        %3416 = vxpose.xlu0.b32.cont [6/16] %v3326, 128
        %3417 = vxpose.xlu0.b32.cont [7/16] %v3331, 128
        %3418 = vxpose.xlu0.b32.cont [8/16] %v3336, 128
        %3419 = vxpose.xlu0.b32.cont [9/16] %v3341, 128
        %3420 = vxpose.xlu0.b32.cont [10/16] %v3346, 128
        %3421 = vxpose.xlu0.b32.cont [11/16] %v3351, 128
        %3422 = vxpose.xlu0.b32.cont [12/16] %v3356, 128
        %3423 = vxpose.xlu0.b32.cont [13/16] %v3361, 128
        %3424 = vxpose.xlu0.b32.cont [14/16] %v3366, 128
        %3425 = vxpose.xlu0.b32.cont [15/16] %v3371, 128
        %3426 = vxpose.xlu0.b32.end [16/16] %v3376, 128
        %v3427 = vpop.trf.xlu0
        %v3428 = vpop.trf.xlu0
        %v3429 = vpop.trf.xlu0
        %v3430 = vpop.trf.xlu0
        %v3431 = vpop.trf.xlu0
        %v3432 = vpop.trf.xlu0
        %v3433 = vpop.trf.xlu0
        %v3434 = vpop.trf.xlu0
        %v3435 = vpop.trf.xlu0
        %v3436 = vpop.trf.xlu0
        %v3437 = vpop.trf.xlu0
        %v3438 = vpop.trf.xlu0
        %v3439 = vpop.trf.xlu0
        %v3440 = vpop.trf.xlu0
        %v3441 = vpop.trf.xlu0
        %v3442 = vpop.trf.xlu0
        %v3443 = vld [vmem:[#allocation13] sm:$0x3f]
        %3445 = vset.pattern.permute.xlu0 0
        %3446 = vperm.xlu0 %3445, %v3443
        %v3447 = vpop.permute.xlu0 %3446
        %v3449 = vadd.f32 %v3395, %v3447
        %v3450 = vadd.f32 %v3427, %v3447
        %3451 = vst [vmem:[%s395] sm:$0x3f] %v3449
        %3452 = vst [vmem:[%s395 + $0x8] sm:$0x3f] %v3450
        %s3453 = sand.u32 %s203, 1
        %s3454 = scalar_lea.sflag [#allocation4], %s3453
        %s3455 = sand.u32 %s203, 1
        %s3456 = smul.addr %s3455, 16
        %s3457 = scalar_lea.vmem [#allocation14], %s3456
        // Predicated region
        $region77: #{tpu_custom_call.1} parent=47 // pred_check
          %p3458 = pneg %p213
        $region78: #{tpu_custom_call.1} parent=47 // pred_check_branch
          %3460 = sbr.rel (%p3458) target = $region80
        $region79: #{tpu_custom_call.1} parent=47 // pred_region
          %s3461 = smul.u32 2, %s32
          %s3463 = ssub.s32 256, 256
          %3464 = vsyncadd %s3454, %s3463
          %s3465 = smul.addr %s31, 2
          %s3466 = sadd.s32 %s3461, %s3465
          %s3467 = smul.addr %s3466, 128
          %s3468 = scalar_lea.hbm %s7, %s3467
          %s3470 = sshll.u32 %s3457, 4
          %s3471 = int_to_ptr.vmem [resolvable:$true] %s3470
          %3473 = dma.vmem_to_hbm [thread:$0]  %s3471, 256, %s3468, %s3454
        $region80: #{tpu_custom_call.1} parent=47 // pred_fallthru
          _
      $region48: #{tpu_custom_call.1} parent=5 // pred_fallthru
        _
      %p3474 = scmp.le.s32.totalorder 2, %s22
      // Predicated region
      $region81: #{tpu_custom_call.1} parent=5 // pred_check
        %p3475 = pneg %p3474
      $region82: #{tpu_custom_call.1} parent=5 // pred_check_branch
        %3477 = sbr.rel (%p3475) target = $region84
      $region83: #{tpu_custom_call.1} parent=5 // pred_region
        %s3478 = ssub.s32 %s22, 2
        // Predicated region
        $region85: #{tpu_custom_call.1} parent=83 // pred_check
          %p3479 = pneg %p219
        $region86: #{tpu_custom_call.1} parent=83 // pred_check_branch
          %3481 = sbr.rel (%p3479) target = $region88
        $region87: #{tpu_custom_call.1} parent=83 // pred_region
          %s3482 = sand.u32 %s204, 1
          %s3483 = scalar_lea.sflag [#allocation4], %s3482
          %s3484 = sand.u32 %s204, 1
          %s3485 = smul.addr %s3484, 16
          %s3486 = scalar_lea.vmem [#allocation14], %s3485
          %3487 = dma.done %s3483, 256
        $region88: #{tpu_custom_call.1} parent=83 // pred_fallthru
          _
      $region84: #{tpu_custom_call.1} parent=5 // pred_fallthru
        _
    $region6: #{tpu_custom_call.1} parent=1 // loop_footer
      %s26 = sadd.s32 1, %s22
    $region7: #{tpu_custom_call.1} parent=1 // loop_footer_branch
      %21 = sbr.rel target = $region3
    $region8: #{tpu_custom_call.1} parent=1 // loop_exit
      _
    %3488 = vsyncpa [#allocation3], 1
    %s3489 = scalar_lea.sflag [#allocation3], 1
    %3490 = vsyncpa %s3489, 1
    %3491 = vsyncpa [#allocation6], 1
    %3492 = vsyncpa [#allocation9], 1
    %3493 = vsyncpa [#allocation12], 1
    %3494 = vsyncpa [#allocation4], 1
    %s3495 = scalar_lea.sflag [#allocation4], 1
    %3496 = vsyncpa %s3495, 1

</llo_original>
